<compile_context>
chip_gen: v7x
topology: tpu7x:2x2x1
jax: 0.10.0
libtpu: 0.0.40
codegen_flags: <defaults>
</compile_context>

<pallas_src>
import functools

import jax
import jax.numpy as jnp
from jax.experimental import pallas as pl
from jax.experimental.pallas import tpu as pltpu


# ---------------------------------------------------------------------------
# Tiling / VMEM budgeting helpers
# ---------------------------------------------------------------------------
_M_TILE_CAP = 2048          # lane-dense tile cap (multiple of 128)
_VMEM_BUDGET = 48 * (1 << 20)   # per-call working-set target; fits v7x's 64 MiB VMEM


def _layer_vmem_bytes(mt, cin, cout, out_itemsize):
    patches = 9 * cin * mt * 2              # bf16 patches block (double-buffered)
    out = 4 * cout * mt * out_itemsize      # output block (double-buffered)
    weights = 4 * cout * 9 * cin * 2        # resident stacked weights
    return 2 * patches + 2 * out + weights + (64 << 10)


def _pick_m_tile(M, cin, cout, out_itemsize):
    """Largest power-of-two-multiple-of-128 divisor of M that fits the VMEM budget."""
    if M <= _M_TILE_CAP:
        return M
    t = _M_TILE_CAP
    while t >= 128:
        if M % t == 0 and _layer_vmem_bytes(t, cin, cout, out_itemsize) <= _VMEM_BUDGET:
            return t
        t //= 2
    return M   # fallback: single block (tiny or oddly-shaped M)


def _mosaic_params(semantics, est_bytes):
    # Explicit scoped-VMEM limit: above the 16/32 MiB defaults, below v7x's 64 MiB.
    limit = int(min(60 * (1 << 20), max(16 * (1 << 20), est_bytes + (8 << 20))))
    return pltpu.CompilerParams(dimension_semantics=semantics, vmem_limit_bytes=limit)


# ---------------------------------------------------------------------------
# Pallas kernels
# ---------------------------------------------------------------------------
def _linear_bn_lrelu_kernel(z_ref, w_ref, b_ref, g_ref, be_ref, o_ref, *, eps, slope):
    # z: (N, K) bf16, w: (K, F) bf16, b/g/be: (1, F) f32  ->  o: (N, F) bf16
    y = jnp.dot(z_ref[...], w_ref[...], preferred_element_type=jnp.float32) + b_ref[...]
    n = y.shape[0]
    mean = jnp.sum(y, axis=0, keepdims=True) * (1.0 / n)          # reduce over batch
    yc = y - mean
    var = jnp.sum(yc * yc, axis=0, keepdims=True) * (1.0 / n)     # biased var (train mode)
    out = yc * jax.lax.rsqrt(var + eps) * g_ref[...] + be_ref[...]
    o_ref[...] = jnp.where(out > 0, out, slope * out).astype(o_ref.dtype)


def _convt_bn_lrelu_kernel(p_ref, w_ref, b_ref, g_ref, be_ref, o_ref,
                           s1_ref, s2_ref, sc_ref, sh_ref,
                           *, eps, slope, cout, inv_count):
    # p: (9*Cin, Mt) bf16, w: (4*Cout, 9*Cin) bf16, b: (4*Cout,1), g/be: (Cout,1) f32
    # o: (4*Cout, Mt) bf16.  Two-pass grid: pass 0 = stats, pass 1 = normalize + store.
    pass_id = pl.program_id(0)
    m_id = pl.program_id(1)
    num_m = pl.num_programs(1)

    # Single stacked subpixel GEMM (4 phases in the rows), one live f32 accumulator.
    acc = jnp.dot(w_ref[...], p_ref[...],
                  preferred_element_type=jnp.float32) + b_ref[...]

    @pl.when(pass_id == 0)
    def _():
        @pl.when(m_id == 0)
        def _():
            s1_ref[...] = jnp.zeros_like(s1_ref)
            s2_ref[...] = jnp.zeros_like(s2_ref)

        r1 = jnp.sum(acc, axis=1, keepdims=True)           # (4*Cout, 1)
        r2 = jnp.sum(acc * acc, axis=1, keepdims=True)
        # Fold the 4 phase blocks (sublane slices at multiples of 8) into per-channel sums.
        s1_ref[...] += (r1[0:cout] + r1[cout:2 * cout]
                        + r1[2 * cout:3 * cout] + r1[3 * cout:4 * cout])
        s2_ref[...] += (r2[0:cout] + r2[cout:2 * cout]
                        + r2[2 * cout:3 * cout] + r2[3 * cout:4 * cout])

        @pl.when(m_id == num_m - 1)
        def _():
            mean = s1_ref[...] * inv_count
            var = jnp.maximum(s2_ref[...] * inv_count - mean * mean, 0.0)  # biased var
            scale = jax.lax.rsqrt(var + eps) * g_ref[...]
            shift = be_ref[...] - mean * scale
            sc_ref[...] = jnp.concatenate([scale] * 4, axis=0)    # (4*Cout, 1)
            sh_ref[...] = jnp.concatenate([shift] * 4, axis=0)

    @pl.when(pass_id == 1)
    def _():
        y = acc * sc_ref[...] + sh_ref[...]
        o_ref[...] = jnp.where(y > 0, y, slope * y).astype(o_ref.dtype)   # LeakyReLU(0.2)


def _convt_tanh_kernel(p_ref, w_ref, b_ref, o_ref):
    # p: (9*Cin, Mt) bf16, w: (4*Cout, 9*Cin) bf16, b: (4*Cout,1) f32 -> o: (4*Cout, Mt) f32
    y = jnp.dot(w_ref[...], p_ref[...], preferred_element_type=jnp.float32) + b_ref[...]
    o_ref[...] = jnp.tanh(y)


# ---------------------------------------------------------------------------
# XLA-side layout glue (union-tap im2col, stacked weights, phase de-interleave)
# ---------------------------------------------------------------------------
def _union_patches(x_cm):
    """Channel-major activation (Cin, N, H, W) -> union 3x3 im2col (9*Cin, N*H*W) bf16.

    Tap t = dh*3 + dw corresponds to padded input position (py+dh, px+dw) i.e.
    iy = py + dh - 1, ix = px + dw - 1 (pad-1).  Matches _assemble_stacked_weights.
    """
    Cin, N, H, W = x_cm.shape
    M = N * H * W
    xp = jnp.pad(x_cm, ((0, 0), (0, 0), (1, 1), (1, 1)))
    taps = [xp[:, :, dh:dh + H, dw:dw + W].reshape(Cin, M)
            for dh in range(3) for dw in range(3)]
    return jnp.concatenate(taps, axis=0).astype(jnp.bfloat16)


# Mapping (phase offset r, union-tap offset d) -> ConvTranspose2d kernel index k.
# Output oy = 2*py + ry gets contributions from iy = py + dh - 1 with kh = _KMAP[(ry, dh)].
_KMAP = {(0, 0): 3, (0, 1): 1, (1, 1): 2, (1, 2): 0}


def _assemble_stacked_weights(w):
    """torch ConvTranspose2d weight (Cin, Cout, 4, 4) -> stacked GEMM weight (4*Cout, 9*Cin).

    Row p*Cout + co with p = ry*2 + rx; column t*Cin + ci with t = dh*3 + dw.
    Only the 4 taps used by each phase are non-zero.
    """
    Cin, Cout = w.shape[0], w.shape[1]
    zeros = jnp.zeros((Cout, Cin), w.dtype)
    phase_rows = []
    for ry in range(2):
        for rx in range(2):
            cols = []
            for dh in range(3):
                for dw in range(3):
                    if (ry, dh) in _KMAP and (rx, dw) in _KMAP:
                        cols.append(w[:, :, _KMAP[(ry, dh)], _KMAP[(rx, dw)]].T)  # (Cout,Cin)
                    else:
                        cols.append(zeros)
            phase_rows.append(jnp.concatenate(cols, axis=1))       # (Cout, 9*Cin)
    return jnp.concatenate(phase_rows, axis=0).astype(jnp.bfloat16)


def _deinterleave(y, cout, N, H, W):
    """(4*Cout, N*H*W) phase-major rows -> channel-major (Cout, N, 2H, 2W)."""
    y = y.reshape(2, 2, cout, N, H, W).transpose(2, 3, 4, 0, 5, 1)  # (C, N, H, ry, W, rx)
    return y.reshape(cout, N, 2 * H, 2 * W)


# ---------------------------------------------------------------------------
# Pallas call wrappers
# ---------------------------------------------------------------------------
def pallas_linear_bn_lrelu(z_bf16, w_bf16, b, gamma, beta, eps=1e-5, slope=0.2):
    N, K = z_bf16.shape
    F = w_bf16.shape[1]
    kern = functools.partial(_linear_bn_lrelu_kernel, eps=eps, slope=slope)
    est = 2 * (N * K * 2 + K * F * 2 + N * F * 2) + 3 * F * 4
    return pl.pallas_call(
        kern,
        out_shape=jax.ShapeDtypeStruct((N, F), jnp.bfloat16),
        grid=(1,),
        in_specs=[
            pl.BlockSpec((N, K), lambda i: (0, 0)),
            pl.BlockSpec((K, F), lambda i: (0, 0)),
            pl.BlockSpec((1, F), lambda i: (0, 0)),
            pl.BlockSpec((1, F), lambda i: (0, 0)),
            pl.BlockSpec((1, F), lambda i: (0, 0)),
        ],
        out_specs=pl.BlockSpec((N, F), lambda i: (0, 0)),
        compiler_params=_mosaic_params(("arbitrary",), est),
    )(z_bf16, w_bf16, b, gamma, beta)


def convt_bn_lrelu(x_cm, w_stack, b4, gamma, beta, eps=1e-5, slope=0.2):
    """Fused ConvTranspose2d(4,2,1) + bias + BatchNorm2d(train) + LeakyReLU(0.2).

    Two-pass M-tiled grid (pass 0: stats, pass 1: normalize); bf16 output.
    """
    cin, N, H, W = x_cm.shape
    four_cout, k9 = w_stack.shape
    cout = four_cout // 4
    M = N * H * W
    patches = _union_patches(x_cm)                       # (9*Cin, M) bf16
    mt = _pick_m_tile(M, cin, cout, 2)
    num_m = M // mt
    kern = functools.partial(_convt_bn_lrelu_kernel, eps=eps, slope=slope,
                             cout=cout, inv_count=1.0 / (4.0 * M))
    y = pl.pallas_call(
        kern,
        out_shape=jax.ShapeDtypeStruct((four_cout, M), jnp.bfloat16),
        grid=(2, num_m),
        in_specs=[
            pl.BlockSpec((k9, mt), lambda p, m: (0, m)),
            pl.BlockSpec((four_cout, k9), lambda p, m: (0, 0)),
            pl.BlockSpec((four_cout, 1), lambda p, m: (0, 0)),
            pl.BlockSpec((cout, 1), lambda p, m: (0, 0)),
            pl.BlockSpec((cout, 1), lambda p, m: (0, 0)),
        ],
        out_specs=pl.BlockSpec((four_cout, mt), lambda p, m: (0, m)),
        scratch_shapes=[
            pltpu.VMEM((cout, 1), jnp.float32),          # running sum
            pltpu.VMEM((cout, 1), jnp.float32),          # running sum of squares
            pltpu.VMEM((four_cout, 1), jnp.float32),     # per-row scale (phase-tiled)
            pltpu.VMEM((four_cout, 1), jnp.float32),     # per-row shift (phase-tiled)
        ],
        compiler_params=_mosaic_params(("arbitrary", "arbitrary"),
                                       _layer_vmem_bytes(mt, cin, cout, 2)),
    )(patches, w_stack, b4, gamma, beta)
    return _deinterleave(y, cout, N, H, W)


def convt_tanh(x_cm, w_stack, b4):
    """Fused ConvTranspose2d(4,2,1) + bias + Tanh; single-pass M-tiled grid."""
    cin, N, H, W = x_cm.shape
    four_cout, k9 = w_stack.shape
    cout = four_cout // 4
    M = N * H * W
    patches = _union_patches(x_cm)                       # (9*Cin, M) bf16
    mt = _pick_m_tile(M, cin, cout, 4)
    num_m = M // mt
    y = pl.pallas_call(
        _convt_tanh_kernel,
        out_shape=jax.ShapeDtypeStruct((four_cout, M), jnp.float32),
        grid=(num_m,),
        in_specs=[
            pl.BlockSpec((k9, mt), lambda m: (0, m)),
            pl.BlockSpec((four_cout, k9), lambda m: (0, 0)),
            pl.BlockSpec((four_cout, 1), lambda m: (0, 0)),
        ],
        out_specs=pl.BlockSpec((four_cout, mt), lambda m: (0, m)),
        compiler_params=_mosaic_params(("parallel",),
                                       _layer_vmem_bytes(mt, cin, cout, 4)),
    )(patches, w_stack, b4)
    return _deinterleave(y, cout, N, H, W)


# ---------------------------------------------------------------------------
# Parameters
# ---------------------------------------------------------------------------
def init_params(key, latent_dim, channels, image_size, features_g):
    init_size = image_size // 16
    f8 = features_g * 8
    lin_out = f8 * init_size * init_size
    keys = jax.random.split(key, 12)
    p = {}
    p["lin_w"] = 0.05 * jax.random.normal(keys[0], (latent_dim, lin_out), jnp.float32)
    p["lin_b"] = 0.01 * jax.random.normal(keys[1], (lin_out,), jnp.float32)
    p["bn0_g"] = 1.0 + 0.02 * jax.random.normal(keys[2], (lin_out,), jnp.float32)
    p["bn0_b"] = 0.02 * jax.random.normal(keys[3], (lin_out,), jnp.float32)
    chans = [f8, features_g * 4, features_g * 2, features_g, channels]
    for li in range(4):
        cin, cout = chans[li], chans[li + 1]
        kw_, kb_ = jax.random.split(keys[4 + li])
        p[f"ct{li}_w"] = 0.05 * jax.random.normal(kw_, (cin, cout, 4, 4), jnp.float32)
        p[f"ct{li}_b"] = 0.01 * jax.random.normal(kb_, (cout,), jnp.float32)
    for li in range(3):
        cout = chans[li + 1]
        kg, kb2 = jax.random.split(keys[8 + li])
        p[f"bn{li + 1}_g"] = 1.0 + 0.02 * jax.random.normal(kg, (cout,), jnp.float32)
        p[f"bn{li + 1}_b"] = 0.02 * jax.random.normal(kb2, (cout,), jnp.float32)
    return p


def prepare_params(p, channels, features_g):
    """Convert raw params to kernel-ready layout (bf16 stacked GEMM weights, f32 BN)."""
    f8 = features_g * 8
    chans = [f8, features_g * 4, features_g * 2, features_g, channels]
    F = p["lin_b"].shape[0]
    kp = {
        "lin_w": p["lin_w"].astype(jnp.bfloat16),
        "lin_b": p["lin_b"].reshape(1, F),
        "bn0_g": p["bn0_g"].reshape(1, F),
        "bn0_b": p["bn0_b"].reshape(1, F),
    }
    for li in range(4):
        cout = chans[li + 1]
        kp[f"ct{li}_w"] = _assemble_stacked_weights(p[f"ct{li}_w"])          # (4*Cout, 9*Cin)
        kp[f"ct{li}_b"] = jnp.tile(p[f"ct{li}_b"].reshape(1, cout),
                                   (4, 1)).reshape(4 * cout, 1)              # phase-tiled bias
    for li in range(1, 4):
        cout = chans[li]
        kp[f"bn{li}_g"] = p[f"bn{li}_g"].reshape(cout, 1)
        kp[f"bn{li}_b"] = p[f"bn{li}_b"].reshape(cout, 1)
    return kp


# ---------------------------------------------------------------------------
# Generator forward
# ---------------------------------------------------------------------------
def generator_forward(kp, z, channels, image_size, features_g):
    N = z.shape[0]
    init_size = image_size // 16
    f8 = features_g * 8

    # latent_to_features: Linear -> BatchNorm1d -> LeakyReLU(0.2), fused, bf16 out.
    feats = pallas_linear_bn_lrelu(
        z.astype(jnp.bfloat16), kp["lin_w"], kp["lin_b"], kp["bn0_g"], kp["bn0_b"]
    )                                                             # (N, f8*init*init) bf16

    # Unflatten and go channel-major: (f8, N, init, init) bf16.
    x_cm = feats.reshape(N, f8, init_size, init_size).transpose(1, 0, 2, 3)

    # 3x [ConvTranspose -> BN -> LeakyReLU], each one fused, M-tiled pallas_call.
    for li in range(3):
        x_cm = convt_bn_lrelu(
            x_cm, kp[f"ct{li}_w"], kp[f"ct{li}_b"],
            kp[f"bn{li + 1}_g"], kp[f"bn{li + 1}_b"]
        )

    # Final ConvTranspose -> Tanh (fused, lane-dense M-parallel grid), f32 image.
    img_cm = convt_tanh(x_cm, kp["ct3_w"], kp["ct3_b"])           # (channels, N, H, W)
    return img_cm.transpose(1, 0, 2, 3)                           # NCHW


if __name__ == "__main__":
    # Small, consistent shapes: batch=2, latent=32, channels=3, image=32, features_g=8
    batch = 2
    latent_dim = 32
    channels = 3
    image_size = 32
    features_g = 8

    key = jax.random.PRNGKey(0)
    pkey, zkey = jax.random.split(key)
    raw_params = init_params(pkey, latent_dim, channels, image_size, features_g)
    params = prepare_params(raw_params, channels, features_g)
    z = jax.random.normal(zkey, (batch, latent_dim), jnp.float32)

    fwd = jax.jit(
        functools.partial(
            generator_forward,
            channels=channels,
            image_size=image_size,
            features_g=features_g,
        )
    )
    img = fwd(params, z)
    img = jax.block_until_ready(img)

    assert img.shape == (batch, channels, image_size, image_size), img.shape
    assert img.dtype == jnp.float32
    assert bool(jnp.all(jnp.isfinite(img)))
    assert bool(jnp.all(jnp.abs(img) <= 1.0))  # tanh range
    print("KERNEL_OK")
</pallas_src>

<mosaic_0001>
module attributes {stable_mosaic.version = 11 : i64} {
  func.func @_linear_bn_lrelu_kernel(%arg0: i32, %arg1: memref<2x32xbf16, #tpu.memory_space<vmem>>, %arg2: memref<32x256xbf16, #tpu.memory_space<vmem>>, %arg3: memref<1x256xf32, #tpu.memory_space<vmem>>, %arg4: memref<1x256xf32, #tpu.memory_space<vmem>>, %arg5: memref<1x256xf32, #tpu.memory_space<vmem>>, %arg6: memref<2x256xbf16, #tpu.memory_space<vmem>>) attributes {dimension_semantics = [#tpu.dimension_semantics<arbitrary>], iteration_bounds = array<i64: 1>, scalar_prefetch = 0 : i64, scratch_operands = 0 : i64, tpu.core_type = #tpu.core_type<tc>, window_params = [{pipeline_mode = #tpu.pipeline_mode<synchronous>, transform_indices = @transform_0, window_bounds = array<i64: 2, 32>}, {pipeline_mode = #tpu.pipeline_mode<synchronous>, transform_indices = @transform_1, window_bounds = array<i64: 32, 256>}, {pipeline_mode = #tpu.pipeline_mode<synchronous>, transform_indices = @transform_2, window_bounds = array<i64: 1, 256>}, {pipeline_mode = #tpu.pipeline_mode<synchronous>, transform_indices = @transform_3, window_bounds = array<i64: 1, 256>}, {pipeline_mode = #tpu.pipeline_mode<synchronous>, transform_indices = @transform_4, window_bounds = array<i64: 1, 256>}, {pipeline_mode = #tpu.pipeline_mode<synchronous>, transform_indices = @transform_5, window_bounds = array<i64: 2, 256>}]} {
    %c0 = arith.constant 0 : index
    %c0_0 = arith.constant 0 : index
    %0 = vector.load %arg1[%c0, %c0_0] : memref<2x32xbf16, #tpu.memory_space<vmem>>, vector<2x32xbf16>
    %c0_1 = arith.constant 0 : index
    %c0_2 = arith.constant 0 : index
    %1 = vector.load %arg2[%c0_1, %c0_2] : memref<32x256xbf16, #tpu.memory_space<vmem>>, vector<32x256xbf16>
    %cst = arith.constant dense<0.000000e+00> : vector<2x256xf32>
    %2 = tpu.matmul %0, %1, %cst {dimension_numbers = #tpu.dot_dimension_numbers<[1], [0], [0], [1], [0, 0, 1, 1], [], []>} : vector<2x32xbf16>, vector<32x256xbf16>, vector<2x256xf32> -> vector<2x256xf32>
    %c0_3 = arith.constant 0 : index
    %c0_4 = arith.constant 0 : index
    %3 = vector.load %arg3[%c0_3, %c0_4] : memref<1x256xf32, #tpu.memory_space<vmem>>, vector<1x256xf32>
    %4 = vector.broadcast %3 : vector<1x256xf32> to vector<2x256xf32>
    %5 = arith.addf %2, %4 : vector<2x256xf32>
    %cst_5 = arith.constant dense<0.000000e+00> : vector<256xf32>
    %6 = vector.multi_reduction <add>, %5, %cst_5 [0] : vector<2x256xf32> to vector<256xf32>
    %7 = vector.shape_cast %6 : vector<256xf32> to vector<1x256xf32>
    %cst_6 = arith.constant 5.000000e-01 : f32
    %8 = vector.broadcast %cst_6 : f32 to vector<1x256xf32>
    %9 = arith.mulf %7, %8 : vector<1x256xf32>
    %10 = vector.broadcast %9 : vector<1x256xf32> to vector<2x256xf32>
    %11 = arith.subf %5, %10 : vector<2x256xf32>
    %12 = arith.mulf %11, %11 : vector<2x256xf32>
    %cst_7 = arith.constant dense<0.000000e+00> : vector<256xf32>
    %13 = vector.multi_reduction <add>, %12, %cst_7 [0] : vector<2x256xf32> to vector<256xf32>
    %14 = vector.shape_cast %13 : vector<256xf32> to vector<1x256xf32>
    %cst_8 = arith.constant 5.000000e-01 : f32
    %15 = vector.broadcast %cst_8 : f32 to vector<1x256xf32>
    %16 = arith.mulf %14, %15 : vector<1x256xf32>
    %cst_9 = arith.constant 9.99999974E-6 : f32
    %17 = vector.broadcast %cst_9 : f32 to vector<1x256xf32>
    %18 = arith.addf %16, %17 : vector<1x256xf32>
    %19 = math.rsqrt %18 : vector<1x256xf32>
    %20 = vector.broadcast %19 : vector<1x256xf32> to vector<2x256xf32>
    %21 = arith.mulf %11, %20 : vector<2x256xf32>
    %c0_10 = arith.constant 0 : index
    %c0_11 = arith.constant 0 : index
    %22 = vector.load %arg4[%c0_10, %c0_11] : memref<1x256xf32, #tpu.memory_space<vmem>>, vector<1x256xf32>
    %23 = vector.broadcast %22 : vector<1x256xf32> to vector<2x256xf32>
    %24 = arith.mulf %21, %23 : vector<2x256xf32>
    %c0_12 = arith.constant 0 : index
    %c0_13 = arith.constant 0 : index
    %25 = vector.load %arg5[%c0_12, %c0_13] : memref<1x256xf32, #tpu.memory_space<vmem>>, vector<1x256xf32>
    %26 = vector.broadcast %25 : vector<1x256xf32> to vector<2x256xf32>
    %27 = arith.addf %24, %26 : vector<2x256xf32>
    %cst_14 = arith.constant 0.000000e+00 : f32
    %28 = vector.broadcast %cst_14 : f32 to vector<2x256xf32>
    %29 = arith.cmpf ogt, %27, %28 : vector<2x256xf32>
    %cst_15 = arith.constant 2.000000e-01 : f32
    %30 = vector.broadcast %cst_15 : f32 to vector<2x256xf32>
    %31 = arith.mulf %30, %27 : vector<2x256xf32>
    %32 = arith.select %29, %27, %31 : vector<2x256xi1>, vector<2x256xf32>
    %33 = arith.truncf %32 : vector<2x256xf32> to vector<2x256xbf16>
    %c0_16 = arith.constant 0 : index
    %c0_17 = arith.constant 0 : index
    %34 = vector.load %arg6[%c0_16, %c0_17] : memref<2x256xbf16, #tpu.memory_space<vmem>>, vector<2x256xbf16>
    tpu.vector_store %arg6[%c0_16, %c0_17], %33 {strides = array<i32>} : memref<2x256xbf16, #tpu.memory_space<vmem>>, vector<2x256xbf16>,
    return
  }
  func.func @transform_0(%arg0: i32) -> (i32, i32) {
    %c0_i32 = arith.constant 0 : i32
    %c0_i32_0 = arith.constant 0 : i32
    %c0_i32_1 = arith.constant 0 : i32
    return %c0_i32, %c0_i32_0 : i32, i32
  }
  func.func @transform_1(%arg0: i32) -> (i32, i32) {
    %c0_i32 = arith.constant 0 : i32
    %c0_i32_0 = arith.constant 0 : i32
    %c0_i32_1 = arith.constant 0 : i32
    return %c0_i32, %c0_i32_0 : i32, i32
  }
  func.func @transform_2(%arg0: i32) -> (i32, i32) {
    %c0_i32 = arith.constant 0 : i32
    %c0_i32_0 = arith.constant 0 : i32
    %c0_i32_1 = arith.constant 0 : i32
    return %c0_i32, %c0_i32_0 : i32, i32
  }
  func.func @transform_3(%arg0: i32) -> (i32, i32) {
    %c0_i32 = arith.constant 0 : i32
    %c0_i32_0 = arith.constant 0 : i32
    %c0_i32_1 = arith.constant 0 : i32
    return %c0_i32, %c0_i32_0 : i32, i32
  }
  func.func @transform_4(%arg0: i32) -> (i32, i32) {
    %c0_i32 = arith.constant 0 : i32
    %c0_i32_0 = arith.constant 0 : i32
    %c0_i32_1 = arith.constant 0 : i32
    return %c0_i32, %c0_i32_0 : i32, i32
  }
  func.func @transform_5(%arg0: i32) -> (i32, i32) {
    %c0_i32 = arith.constant 0 : i32
    %c0_i32_0 = arith.constant 0 : i32
    %c0_i32_1 = arith.constant 0 : i32
    return %c0_i32, %c0_i32_0 : i32, i32
  }
}

module attributes {stable_mosaic.version = 11 : i64} {
  func.func @_convt_bn_lrelu_kernel(%arg0: i32, %arg1: i32, %arg2: memref<576x8xbf16, #tpu.memory_space<vmem>>, %arg3: memref<128x576xbf16, #tpu.memory_space<vmem>>, %arg4: memref<128x1xf32, #tpu.memory_space<vmem>>, %arg5: memref<32x1xf32, #tpu.memory_space<vmem>>, %arg6: memref<32x1xf32, #tpu.memory_space<vmem>>, %arg7: memref<128x8xbf16, #tpu.memory_space<vmem>>, %arg8: memref<32x1xf32, #tpu.memory_space<vmem>>, %arg9: memref<32x1xf32, #tpu.memory_space<vmem>>, %arg10: memref<128x1xf32, #tpu.memory_space<vmem>>, %arg11: memref<128x1xf32, #tpu.memory_space<vmem>>) attributes {dimension_semantics = [#tpu.dimension_semantics<arbitrary>, #tpu.dimension_semantics<arbitrary>], iteration_bounds = array<i64: 2, 1>, scalar_prefetch = 0 : i64, scratch_operands = 4 : i64, tpu.core_type = #tpu.core_type<tc>, window_params = [{transform_indices = @transform_0, window_bounds = array<i64: 576, 8>}, {pipeline_mode = #tpu.pipeline_mode<synchronous>, transform_indices = @transform_1, window_bounds = array<i64: 128, 576>}, {pipeline_mode = #tpu.pipeline_mode<synchronous>, transform_indices = @transform_2, window_bounds = array<i64: 128, 1>}, {pipeline_mode = #tpu.pipeline_mode<synchronous>, transform_indices = @transform_3, window_bounds = array<i64: 32, 1>}, {pipeline_mode = #tpu.pipeline_mode<synchronous>, transform_indices = @transform_4, window_bounds = array<i64: 32, 1>}, {transform_indices = @transform_5, window_bounds = array<i64: 128, 8>}]} {
    %c0 = arith.constant 0 : index
    %c0_0 = arith.constant 0 : index
    %0 = vector.load %arg3[%c0, %c0_0] : memref<128x576xbf16, #tpu.memory_space<vmem>>, vector<128x576xbf16>
    %c0_1 = arith.constant 0 : index
    %c0_2 = arith.constant 0 : index
    %1 = vector.load %arg2[%c0_1, %c0_2] : memref<576x8xbf16, #tpu.memory_space<vmem>>, vector<576x8xbf16>
    %cst = arith.constant dense<0.000000e+00> : vector<128x8xf32>
    %2 = tpu.matmul %0, %1, %cst {dimension_numbers = #tpu.dot_dimension_numbers<[1], [0], [0], [1], [0, 0, 1, 1], [], []>} : vector<128x576xbf16>, vector<576x8xbf16>, vector<128x8xf32> -> vector<128x8xf32>
    %c0_3 = arith.constant 0 : index
    %c0_4 = arith.constant 0 : index
    %3 = vector.load %arg4[%c0_3, %c0_4] : memref<128x1xf32, #tpu.memory_space<vmem>>, vector<128x1xf32>
    %4 = vector.broadcast %3 : vector<128x1xf32> to vector<128x8xf32>
    %5 = arith.addf %2, %4 : vector<128x8xf32>
    %c0_i32 = arith.constant 0 : i32
    %6 = arith.cmpi eq, %arg0, %c0_i32 : i32
    %7 = arith.extui %6 : i1 to i32
    %c0_i32_5 = arith.constant 0 : i32
    %8 = arith.cmpi ne, %7, %c0_i32_5 : i32
    scf.if %8 {
      %c0_i32_7 = arith.constant 0 : i32
      %12 = arith.cmpi eq, %arg1, %c0_i32_7 : i32
      %13 = arith.extui %12 : i1 to i32
      %c0_i32_8 = arith.constant 0 : i32
      %14 = arith.cmpi ne, %13, %c0_i32_8 : i32
      scf.if %14 {
        %cst_21 = arith.constant 0.000000e+00 : f32
        %43 = vector.broadcast %cst_21 : f32 to vector<32x1xf32>
        %c0_22 = arith.constant 0 : index
        %c0_23 = arith.constant 0 : index
        %44 = vector.load %arg8[%c0_22, %c0_23] : memref<32x1xf32, #tpu.memory_space<vmem>>, vector<32x1xf32>
        tpu.vector_store %arg8[%c0_22, %c0_23], %43 {strides = array<i32>} : memref<32x1xf32, #tpu.memory_space<vmem>>, vector<32x1xf32>,
        %cst_24 = arith.constant 0.000000e+00 : f32
        %45 = vector.broadcast %cst_24 : f32 to vector<32x1xf32>
        %c0_25 = arith.constant 0 : index
        %c0_26 = arith.constant 0 : index
        %46 = vector.load %arg9[%c0_25, %c0_26] : memref<32x1xf32, #tpu.memory_space<vmem>>, vector<32x1xf32>
        tpu.vector_store %arg9[%c0_25, %c0_26], %45 {strides = array<i32>} : memref<32x1xf32, #tpu.memory_space<vmem>>, vector<32x1xf32>,
      } else {
      }
      %cst_9 = arith.constant dense<0.000000e+00> : vector<128xf32>
      %15 = vector.multi_reduction <add>, %5, %cst_9 [1] : vector<128x8xf32> to vector<128xf32>
      %16 = vector.shape_cast %15 : vector<128xf32> to vector<128x1xf32>
      %17 = arith.mulf %5, %5 : vector<128x8xf32>
      %cst_10 = arith.constant dense<0.000000e+00> : vector<128xf32>
      %18 = vector.multi_reduction <add>, %17, %cst_10 [1] : vector<128x8xf32> to vector<128xf32>
      %19 = vector.shape_cast %18 : vector<128xf32> to vector<128x1xf32>
      %c0_11 = arith.constant 0 : index
      %c0_12 = arith.constant 0 : index
      %20 = vector.load %arg8[%c0_11, %c0_12] : memref<32x1xf32, #tpu.memory_space<vmem>>, vector<32x1xf32>
      %21 = vector.extract_strided_slice %16 {offsets = [0, 0], sizes = [32, 1], strides = [1, 1]} : vector<128x1xf32> to vector<32x1xf32>
      %22 = vector.extract_strided_slice %16 {offsets = [32, 0], sizes = [32, 1], strides = [1, 1]} : vector<128x1xf32> to vector<32x1xf32>
      %23 = arith.addf %21, %22 : vector<32x1xf32>
      %24 = vector.extract_strided_slice %16 {offsets = [64, 0], sizes = [32, 1], strides = [1, 1]} : vector<128x1xf32> to vector<32x1xf32>
      %25 = arith.addf %23, %24 : vector<32x1xf32>
      %26 = vector.extract_strided_slice %16 {offsets = [96, 0], sizes = [32, 1], strides = [1, 1]} : vector<128x1xf32> to vector<32x1xf32>
      %27 = arith.addf %25, %26 : vector<32x1xf32>
      %28 = arith.addf %20, %27 : vector<32x1xf32>
      %c0_13 = arith.constant 0 : index
      %c0_14 = arith.constant 0 : index
      %29 = vector.load %arg8[%c0_13, %c0_14] : memref<32x1xf32, #tpu.memory_space<vmem>>, vector<32x1xf32>
      tpu.vector_store %arg8[%c0_13, %c0_14], %28 {strides = array<i32>} : memref<32x1xf32, #tpu.memory_space<vmem>>, vector<32x1xf32>,
      %c0_15 = arith.constant 0 : index
      %c0_16 = arith.constant 0 : index
      %30 = vector.load %arg9[%c0_15, %c0_16] : memref<32x1xf32, #tpu.memory_space<vmem>>, vector<32x1xf32>
      %31 = vector.extract_strided_slice %19 {offsets = [0, 0], sizes = [32, 1], strides = [1, 1]} : vector<128x1xf32> to vector<32x1xf32>
      %32 = vector.extract_strided_slice %19 {offsets = [32, 0], sizes = [32, 1], strides = [1, 1]} : vector<128x1xf32> to vector<32x1xf32>
      %33 = arith.addf %31, %32 : vector<32x1xf32>
      %34 = vector.extract_strided_slice %19 {offsets = [64, 0], sizes = [32, 1], strides = [1, 1]} : vector<128x1xf32> to vector<32x1xf32>
      %35 = arith.addf %33, %34 : vector<32x1xf32>
      %36 = vector.extract_strided_slice %19 {offsets = [96, 0], sizes = [32, 1], strides = [1, 1]} : vector<128x1xf32> to vector<32x1xf32>
      %37 = arith.addf %35, %36 : vector<32x1xf32>
      %38 = arith.addf %30, %37 : vector<32x1xf32>
      %c0_17 = arith.constant 0 : index
      %c0_18 = arith.constant 0 : index
      %39 = vector.load %arg9[%c0_17, %c0_18] : memref<32x1xf32, #tpu.memory_space<vmem>>, vector<32x1xf32>
      tpu.vector_store %arg9[%c0_17, %c0_18], %38 {strides = array<i32>} : memref<32x1xf32, #tpu.memory_space<vmem>>, vector<32x1xf32>,
      %c0_i32_19 = arith.constant 0 : i32
      %40 = arith.cmpi eq, %arg1, %c0_i32_19 : i32
      %41 = arith.extui %40 : i1 to i32
      %c0_i32_20 = arith.constant 0 : i32
      %42 = arith.cmpi ne, %41, %c0_i32_20 : i32
      scf.if %42 {
        %c0_21 = arith.constant 0 : index
        %c0_22 = arith.constant 0 : index
        %43 = vector.load %arg8[%c0_21, %c0_22] : memref<32x1xf32, #tpu.memory_space<vmem>>, vector<32x1xf32>
        %cst_23 = arith.constant 3.125000e-02 : f32
        %44 = vector.broadcast %cst_23 : f32 to vector<32x1xf32>
        %45 = arith.mulf %43, %44 : vector<32x1xf32>
        %c0_24 = arith.constant 0 : index
        %c0_25 = arith.constant 0 : index
        %46 = vector.load %arg9[%c0_24, %c0_25] : memref<32x1xf32, #tpu.memory_space<vmem>>, vector<32x1xf32>
        %cst_26 = arith.constant 3.125000e-02 : f32
        %47 = vector.broadcast %cst_26 : f32 to vector<32x1xf32>
        %48 = arith.mulf %46, %47 : vector<32x1xf32>
        %49 = arith.mulf %45, %45 : vector<32x1xf32>
        %50 = arith.subf %48, %49 : vector<32x1xf32>
        %cst_27 = arith.constant 0.000000e+00 : f32
        %51 = vector.broadcast %cst_27 : f32 to vector<32x1xf32>
        %52 = arith.maximumf %50, %51 : vector<32x1xf32>
        %cst_28 = arith.constant 9.99999974E-6 : f32
        %53 = vector.broadcast %cst_28 : f32 to vector<32x1xf32>
        %54 = arith.addf %52, %53 : vector<32x1xf32>
        %55 = math.rsqrt %54 : vector<32x1xf32>
        %c0_29 = arith.constant 0 : index
        %c0_30 = arith.constant 0 : index
        %56 = vector.load %arg5[%c0_29, %c0_30] : memref<32x1xf32, #tpu.memory_space<vmem>>, vector<32x1xf32>
        %57 = arith.mulf %55, %56 : vector<32x1xf32>
        %c0_31 = arith.constant 0 : index
        %c0_32 = arith.constant 0 : index
        %58 = vector.load %arg6[%c0_31, %c0_32] : memref<32x1xf32, #tpu.memory_space<vmem>>, vector<32x1xf32>
        %59 = arith.mulf %45, %57 : vector<32x1xf32>
        %60 = arith.subf %58, %59 : vector<32x1xf32>
        %61 = tpu.concatenate %57, %57, %57, %57 in 0 : vector<32x1xf32>, vector<32x1xf32>, vector<32x1xf32>, vector<32x1xf32> -> vector<128x1xf32>
        %c0_33 = arith.constant 0 : index
        %c0_34 = arith.constant 0 : index
        %62 = vector.load %arg10[%c0_33, %c0_34] : memref<128x1xf32, #tpu.memory_space<vmem>>, vector<128x1xf32>
        tpu.vector_store %arg10[%c0_33, %c0_34], %61 {strides = array<i32>} : memref<128x1xf32, #tpu.memory_space<vmem>>, vector<128x1xf32>,
        %63 = tpu.concatenate %60, %60, %60, %60 in 0 : vector<32x1xf32>, vector<32x1xf32>, vector<32x1xf32>, vector<32x1xf32> -> vector<128x1xf32>
        %c0_35 = arith.constant 0 : index
        %c0_36 = arith.constant 0 : index
        %64 = vector.load %arg11[%c0_35, %c0_36] : memref<128x1xf32, #tpu.memory_space<vmem>>, vector<128x1xf32>
        tpu.vector_store %arg11[%c0_35, %c0_36], %63 {strides = array<i32>} : memref<128x1xf32, #tpu.memory_space<vmem>>, vector<128x1xf32>,
      } else {
      }
    } else {
    }
    %c1_i32 = arith.constant 1 : i32
    %9 = arith.cmpi eq, %arg0, %c1_i32 : i32
    %10 = arith.extui %9 : i1 to i32
    %c0_i32_6 = arith.constant 0 : i32
    %11 = arith.cmpi ne, %10, %c0_i32_6 : i32
    scf.if %11 {
      %c0_7 = arith.constant 0 : index
      %c0_8 = arith.constant 0 : index
      %12 = vector.load %arg10[%c0_7, %c0_8] : memref<128x1xf32, #tpu.memory_space<vmem>>, vector<128x1xf32>
      %13 = vector.broadcast %12 : vector<128x1xf32> to vector<128x8xf32>
      %14 = arith.mulf %5, %13 : vector<128x8xf32>
      %c0_9 = arith.constant 0 : index
      %c0_10 = arith.constant 0 : index
      %15 = vector.load %arg11[%c0_9, %c0_10] : memref<128x1xf32, #tpu.memory_space<vmem>>, vector<128x1xf32>
      %16 = vector.broadcast %15 : vector<128x1xf32> to vector<128x8xf32>
      %17 = arith.addf %14, %16 : vector<128x8xf32>
      %cst_11 = arith.constant 0.000000e+00 : f32
      %18 = vector.broadcast %cst_11 : f32 to vector<128x8xf32>
      %19 = arith.cmpf ogt, %17, %18 : vector<128x8xf32>
      %cst_12 = arith.constant 2.000000e-01 : f32
      %20 = vector.broadcast %cst_12 : f32 to vector<128x8xf32>
      %21 = arith.mulf %20, %17 : vector<128x8xf32>
      %22 = arith.select %19, %17, %21 : vector<128x8xi1>, vector<128x8xf32>
      %23 = arith.truncf %22 : vector<128x8xf32> to vector<128x8xbf16>
      %c0_13 = arith.constant 0 : index
      %c0_14 = arith.constant 0 : index
      %24 = vector.load %arg7[%c0_13, %c0_14] : memref<128x8xbf16, #tpu.memory_space<vmem>>, vector<128x8xbf16>
      tpu.vector_store %arg7[%c0_13, %c0_14], %23 {strides = array<i32>} : memref<128x8xbf16, #tpu.memory_space<vmem>>, vector<128x8xbf16>,
    } else {
    }
    return
  }
  func.func @transform_0(%arg0: i32, %arg1: i32) -> (i32, i32) {
    %c0_i32 = arith.constant 0 : i32
    %c0_i32_0 = arith.constant 0 : i32
    return %c0_i32, %arg1 : i32, i32
  }
  func.func @transform_1(%arg0: i32, %arg1: i32) -> (i32, i32) {
    %c0_i32 = arith.constant 0 : i32
    %c0_i32_0 = arith.constant 0 : i32
    %c0_i32_1 = arith.constant 0 : i32
    return %c0_i32, %c0_i32_0 : i32, i32
  }
  func.func @transform_2(%arg0: i32, %arg1: i32) -> (i32, i32) {
    %c0_i32 = arith.constant 0 : i32
    %c0_i32_0 = arith.constant 0 : i32
    %c0_i32_1 = arith.constant 0 : i32
    return %c0_i32, %c0_i32_0 : i32, i32
  }
  func.func @transform_3(%arg0: i32, %arg1: i32) -> (i32, i32) {
    %c0_i32 = arith.constant 0 : i32
    %c0_i32_0 = arith.constant 0 : i32
    %c0_i32_1 = arith.constant 0 : i32
    return %c0_i32, %c0_i32_0 : i32, i32
  }
  func.func @transform_4(%arg0: i32, %arg1: i32) -> (i32, i32) {
    %c0_i32 = arith.constant 0 : i32
    %c0_i32_0 = arith.constant 0 : i32
    %c0_i32_1 = arith.constant 0 : i32
    return %c0_i32, %c0_i32_0 : i32, i32
  }
  func.func @transform_5(%arg0: i32, %arg1: i32) -> (i32, i32) {
    %c0_i32 = arith.constant 0 : i32
    %c0_i32_0 = arith.constant 0 : i32
    return %c0_i32, %arg1 : i32, i32
  }
}

module attributes {stable_mosaic.version = 11 : i64} {
  func.func @_convt_bn_lrelu_kernel(%arg0: i32, %arg1: i32, %arg2: memref<288x32xbf16, #tpu.memory_space<vmem>>, %arg3: memref<64x288xbf16, #tpu.memory_space<vmem>>, %arg4: memref<64x1xf32, #tpu.memory_space<vmem>>, %arg5: memref<16x1xf32, #tpu.memory_space<vmem>>, %arg6: memref<16x1xf32, #tpu.memory_space<vmem>>, %arg7: memref<64x32xbf16, #tpu.memory_space<vmem>>, %arg8: memref<16x1xf32, #tpu.memory_space<vmem>>, %arg9: memref<16x1xf32, #tpu.memory_space<vmem>>, %arg10: memref<64x1xf32, #tpu.memory_space<vmem>>, %arg11: memref<64x1xf32, #tpu.memory_space<vmem>>) attributes {dimension_semantics = [#tpu.dimension_semantics<arbitrary>, #tpu.dimension_semantics<arbitrary>], iteration_bounds = array<i64: 2, 1>, scalar_prefetch = 0 : i64, scratch_operands = 4 : i64, tpu.core_type = #tpu.core_type<tc>, window_params = [{transform_indices = @transform_0, window_bounds = array<i64: 288, 32>}, {pipeline_mode = #tpu.pipeline_mode<synchronous>, transform_indices = @transform_1, window_bounds = array<i64: 64, 288>}, {pipeline_mode = #tpu.pipeline_mode<synchronous>, transform_indices = @transform_2, window_bounds = array<i64: 64, 1>}, {pipeline_mode = #tpu.pipeline_mode<synchronous>, transform_indices = @transform_3, window_bounds = array<i64: 16, 1>}, {pipeline_mode = #tpu.pipeline_mode<synchronous>, transform_indices = @transform_4, window_bounds = array<i64: 16, 1>}, {transform_indices = @transform_5, window_bounds = array<i64: 64, 32>}]} {
    %c0 = arith.constant 0 : index
    %c0_0 = arith.constant 0 : index
    %0 = vector.load %arg3[%c0, %c0_0] : memref<64x288xbf16, #tpu.memory_space<vmem>>, vector<64x288xbf16>
    %c0_1 = arith.constant 0 : index
    %c0_2 = arith.constant 0 : index
    %1 = vector.load %arg2[%c0_1, %c0_2] : memref<288x32xbf16, #tpu.memory_space<vmem>>, vector<288x32xbf16>
    %cst = arith.constant dense<0.000000e+00> : vector<64x32xf32>
    %2 = tpu.matmul %0, %1, %cst {dimension_numbers = #tpu.dot_dimension_numbers<[1], [0], [0], [1], [0, 0, 1, 1], [], []>} : vector<64x288xbf16>, vector<288x32xbf16>, vector<64x32xf32> -> vector<64x32xf32>
    %c0_3 = arith.constant 0 : index
    %c0_4 = arith.constant 0 : index
    %3 = vector.load %arg4[%c0_3, %c0_4] : memref<64x1xf32, #tpu.memory_space<vmem>>, vector<64x1xf32>
    %4 = vector.broadcast %3 : vector<64x1xf32> to vector<64x32xf32>
    %5 = arith.addf %2, %4 : vector<64x32xf32>
    %c0_i32 = arith.constant 0 : i32
    %6 = arith.cmpi eq, %arg0, %c0_i32 : i32
    %7 = arith.extui %6 : i1 to i32
    %c0_i32_5 = arith.constant 0 : i32
    %8 = arith.cmpi ne, %7, %c0_i32_5 : i32
    scf.if %8 {
      %c0_i32_7 = arith.constant 0 : i32
      %12 = arith.cmpi eq, %arg1, %c0_i32_7 : i32
      %13 = arith.extui %12 : i1 to i32
      %c0_i32_8 = arith.constant 0 : i32
      %14 = arith.cmpi ne, %13, %c0_i32_8 : i32
      scf.if %14 {
        %cst_21 = arith.constant 0.000000e+00 : f32
        %43 = vector.broadcast %cst_21 : f32 to vector<16x1xf32>
        %c0_22 = arith.constant 0 : index
        %c0_23 = arith.constant 0 : index
        %44 = vector.load %arg8[%c0_22, %c0_23] : memref<16x1xf32, #tpu.memory_space<vmem>>, vector<16x1xf32>
        tpu.vector_store %arg8[%c0_22, %c0_23], %43 {strides = array<i32>} : memref<16x1xf32, #tpu.memory_space<vmem>>, vector<16x1xf32>,
        %cst_24 = arith.constant 0.000000e+00 : f32
        %45 = vector.broadcast %cst_24 : f32 to vector<16x1xf32>
        %c0_25 = arith.constant 0 : index
        %c0_26 = arith.constant 0 : index
        %46 = vector.load %arg9[%c0_25, %c0_26] : memref<16x1xf32, #tpu.memory_space<vmem>>, vector<16x1xf32>
        tpu.vector_store %arg9[%c0_25, %c0_26], %45 {strides = array<i32>} : memref<16x1xf32, #tpu.memory_space<vmem>>, vector<16x1xf32>,
      } else {
      }
      %cst_9 = arith.constant dense<0.000000e+00> : vector<64xf32>
      %15 = vector.multi_reduction <add>, %5, %cst_9 [1] : vector<64x32xf32> to vector<64xf32>
      %16 = vector.shape_cast %15 : vector<64xf32> to vector<64x1xf32>
      %17 = arith.mulf %5, %5 : vector<64x32xf32>
      %cst_10 = arith.constant dense<0.000000e+00> : vector<64xf32>
      %18 = vector.multi_reduction <add>, %17, %cst_10 [1] : vector<64x32xf32> to vector<64xf32>
      %19 = vector.shape_cast %18 : vector<64xf32> to vector<64x1xf32>
      %c0_11 = arith.constant 0 : index
      %c0_12 = arith.constant 0 : index
      %20 = vector.load %arg8[%c0_11, %c0_12] : memref<16x1xf32, #tpu.memory_space<vmem>>, vector<16x1xf32>
      %21 = vector.extract_strided_slice %16 {offsets = [0, 0], sizes = [16, 1], strides = [1, 1]} : vector<64x1xf32> to vector<16x1xf32>
      %22 = vector.extract_strided_slice %16 {offsets = [16, 0], sizes = [16, 1], strides = [1, 1]} : vector<64x1xf32> to vector<16x1xf32>
      %23 = arith.addf %21, %22 : vector<16x1xf32>
      %24 = vector.extract_strided_slice %16 {offsets = [32, 0], sizes = [16, 1], strides = [1, 1]} : vector<64x1xf32> to vector<16x1xf32>
      %25 = arith.addf %23, %24 : vector<16x1xf32>
      %26 = vector.extract_strided_slice %16 {offsets = [48, 0], sizes = [16, 1], strides = [1, 1]} : vector<64x1xf32> to vector<16x1xf32>
      %27 = arith.addf %25, %26 : vector<16x1xf32>
      %28 = arith.addf %20, %27 : vector<16x1xf32>
      %c0_13 = arith.constant 0 : index
      %c0_14 = arith.constant 0 : index
      %29 = vector.load %arg8[%c0_13, %c0_14] : memref<16x1xf32, #tpu.memory_space<vmem>>, vector<16x1xf32>
      tpu.vector_store %arg8[%c0_13, %c0_14], %28 {strides = array<i32>} : memref<16x1xf32, #tpu.memory_space<vmem>>, vector<16x1xf32>,
      %c0_15 = arith.constant 0 : index
      %c0_16 = arith.constant 0 : index
      %30 = vector.load %arg9[%c0_15, %c0_16] : memref<16x1xf32, #tpu.memory_space<vmem>>, vector<16x1xf32>
      %31 = vector.extract_strided_slice %19 {offsets = [0, 0], sizes = [16, 1], strides = [1, 1]} : vector<64x1xf32> to vector<16x1xf32>
      %32 = vector.extract_strided_slice %19 {offsets = [16, 0], sizes = [16, 1], strides = [1, 1]} : vector<64x1xf32> to vector<16x1xf32>
      %33 = arith.addf %31, %32 : vector<16x1xf32>
      %34 = vector.extract_strided_slice %19 {offsets = [32, 0], sizes = [16, 1], strides = [1, 1]} : vector<64x1xf32> to vector<16x1xf32>
      %35 = arith.addf %33, %34 : vector<16x1xf32>
      %36 = vector.extract_strided_slice %19 {offsets = [48, 0], sizes = [16, 1], strides = [1, 1]} : vector<64x1xf32> to vector<16x1xf32>
      %37 = arith.addf %35, %36 : vector<16x1xf32>
      %38 = arith.addf %30, %37 : vector<16x1xf32>
      %c0_17 = arith.constant 0 : index
      %c0_18 = arith.constant 0 : index
      %39 = vector.load %arg9[%c0_17, %c0_18] : memref<16x1xf32, #tpu.memory_space<vmem>>, vector<16x1xf32>
      tpu.vector_store %arg9[%c0_17, %c0_18], %38 {strides = array<i32>} : memref<16x1xf32, #tpu.memory_space<vmem>>, vector<16x1xf32>,
      %c0_i32_19 = arith.constant 0 : i32
      %40 = arith.cmpi eq, %arg1, %c0_i32_19 : i32
      %41 = arith.extui %40 : i1 to i32
      %c0_i32_20 = arith.constant 0 : i32
      %42 = arith.cmpi ne, %41, %c0_i32_20 : i32
      scf.if %42 {
        %c0_21 = arith.constant 0 : index
        %c0_22 = arith.constant 0 : index
        %43 = vector.load %arg8[%c0_21, %c0_22] : memref<16x1xf32, #tpu.memory_space<vmem>>, vector<16x1xf32>
        %cst_23 = arith.constant 7.812500e-03 : f32
        %44 = vector.broadcast %cst_23 : f32 to vector<16x1xf32>
        %45 = arith.mulf %43, %44 : vector<16x1xf32>
        %c0_24 = arith.constant 0 : index
        %c0_25 = arith.constant 0 : index
        %46 = vector.load %arg9[%c0_24, %c0_25] : memref<16x1xf32, #tpu.memory_space<vmem>>, vector<16x1xf32>
        %cst_26 = arith.constant 7.812500e-03 : f32
        %47 = vector.broadcast %cst_26 : f32 to vector<16x1xf32>
        %48 = arith.mulf %46, %47 : vector<16x1xf32>
        %49 = arith.mulf %45, %45 : vector<16x1xf32>
        %50 = arith.subf %48, %49 : vector<16x1xf32>
        %cst_27 = arith.constant 0.000000e+00 : f32
        %51 = vector.broadcast %cst_27 : f32 to vector<16x1xf32>
        %52 = arith.maximumf %50, %51 : vector<16x1xf32>
        %cst_28 = arith.constant 9.99999974E-6 : f32
        %53 = vector.broadcast %cst_28 : f32 to vector<16x1xf32>
        %54 = arith.addf %52, %53 : vector<16x1xf32>
        %55 = math.rsqrt %54 : vector<16x1xf32>
        %c0_29 = arith.constant 0 : index
        %c0_30 = arith.constant 0 : index
        %56 = vector.load %arg5[%c0_29, %c0_30] : memref<16x1xf32, #tpu.memory_space<vmem>>, vector<16x1xf32>
        %57 = arith.mulf %55, %56 : vector<16x1xf32>
        %c0_31 = arith.constant 0 : index
        %c0_32 = arith.constant 0 : index
        %58 = vector.load %arg6[%c0_31, %c0_32] : memref<16x1xf32, #tpu.memory_space<vmem>>, vector<16x1xf32>
        %59 = arith.mulf %45, %57 : vector<16x1xf32>
        %60 = arith.subf %58, %59 : vector<16x1xf32>
        %61 = tpu.concatenate %57, %57, %57, %57 in 0 : vector<16x1xf32>, vector<16x1xf32>, vector<16x1xf32>, vector<16x1xf32> -> vector<64x1xf32>
        %c0_33 = arith.constant 0 : index
        %c0_34 = arith.constant 0 : index
        %62 = vector.load %arg10[%c0_33, %c0_34] : memref<64x1xf32, #tpu.memory_space<vmem>>, vector<64x1xf32>
        tpu.vector_store %arg10[%c0_33, %c0_34], %61 {strides = array<i32>} : memref<64x1xf32, #tpu.memory_space<vmem>>, vector<64x1xf32>,
        %63 = tpu.concatenate %60, %60, %60, %60 in 0 : vector<16x1xf32>, vector<16x1xf32>, vector<16x1xf32>, vector<16x1xf32> -> vector<64x1xf32>
        %c0_35 = arith.constant 0 : index
        %c0_36 = arith.constant 0 : index
        %64 = vector.load %arg11[%c0_35, %c0_36] : memref<64x1xf32, #tpu.memory_space<vmem>>, vector<64x1xf32>
        tpu.vector_store %arg11[%c0_35, %c0_36], %63 {strides = array<i32>} : memref<64x1xf32, #tpu.memory_space<vmem>>, vector<64x1xf32>,
      } else {
      }
    } else {
    }
    %c1_i32 = arith.constant 1 : i32
    %9 = arith.cmpi eq, %arg0, %c1_i32 : i32
    %10 = arith.extui %9 : i1 to i32
    %c0_i32_6 = arith.constant 0 : i32
    %11 = arith.cmpi ne, %10, %c0_i32_6 : i32
    scf.if %11 {
      %c0_7 = arith.constant 0 : index
      %c0_8 = arith.constant 0 : index
      %12 = vector.load %arg10[%c0_7, %c0_8] : memref<64x1xf32, #tpu.memory_space<vmem>>, vector<64x1xf32>
      %13 = vector.broadcast %12 : vector<64x1xf32> to vector<64x32xf32>
      %14 = arith.mulf %5, %13 : vector<64x32xf32>
      %c0_9 = arith.constant 0 : index
      %c0_10 = arith.constant 0 : index
      %15 = vector.load %arg11[%c0_9, %c0_10] : memref<64x1xf32, #tpu.memory_space<vmem>>, vector<64x1xf32>
      %16 = vector.broadcast %15 : vector<64x1xf32> to vector<64x32xf32>
      %17 = arith.addf %14, %16 : vector<64x32xf32>
      %cst_11 = arith.constant 0.000000e+00 : f32
      %18 = vector.broadcast %cst_11 : f32 to vector<64x32xf32>
      %19 = arith.cmpf ogt, %17, %18 : vector<64x32xf32>
      %cst_12 = arith.constant 2.000000e-01 : f32
      %20 = vector.broadcast %cst_12 : f32 to vector<64x32xf32>
      %21 = arith.mulf %20, %17 : vector<64x32xf32>
      %22 = arith.select %19, %17, %21 : vector<64x32xi1>, vector<64x32xf32>
      %23 = arith.truncf %22 : vector<64x32xf32> to vector<64x32xbf16>
      %c0_13 = arith.constant 0 : index
      %c0_14 = arith.constant 0 : index
      %24 = vector.load %arg7[%c0_13, %c0_14] : memref<64x32xbf16, #tpu.memory_space<vmem>>, vector<64x32xbf16>
      tpu.vector_store %arg7[%c0_13, %c0_14], %23 {strides = array<i32>} : memref<64x32xbf16, #tpu.memory_space<vmem>>, vector<64x32xbf16>,
    } else {
    }
    return
  }
  func.func @transform_0(%arg0: i32, %arg1: i32) -> (i32, i32) {
    %c0_i32 = arith.constant 0 : i32
    %c0_i32_0 = arith.constant 0 : i32
    return %c0_i32, %arg1 : i32, i32
  }
  func.func @transform_1(%arg0: i32, %arg1: i32) -> (i32, i32) {
    %c0_i32 = arith.constant 0 : i32
    %c0_i32_0 = arith.constant 0 : i32
    %c0_i32_1 = arith.constant 0 : i32
    return %c0_i32, %c0_i32_0 : i32, i32
  }
  func.func @transform_2(%arg0: i32, %arg1: i32) -> (i32, i32) {
    %c0_i32 = arith.constant 0 : i32
    %c0_i32_0 = arith.constant 0 : i32
    %c0_i32_1 = arith.constant 0 : i32
    return %c0_i32, %c0_i32_0 : i32, i32
  }
  func.func @transform_3(%arg0: i32, %arg1: i32) -> (i32, i32) {
    %c0_i32 = arith.constant 0 : i32
    %c0_i32_0 = arith.constant 0 : i32
    %c0_i32_1 = arith.constant 0 : i32
    return %c0_i32, %c0_i32_0 : i32, i32
  }
  func.func @transform_4(%arg0: i32, %arg1: i32) -> (i32, i32) {
    %c0_i32 = arith.constant 0 : i32
    %c0_i32_0 = arith.constant 0 : i32
    %c0_i32_1 = arith.constant 0 : i32
    return %c0_i32, %c0_i32_0 : i32, i32
  }
  func.func @transform_5(%arg0: i32, %arg1: i32) -> (i32, i32) {
    %c0_i32 = arith.constant 0 : i32
    %c0_i32_0 = arith.constant 0 : i32
    return %c0_i32, %arg1 : i32, i32
  }
}

module attributes {stable_mosaic.version = 11 : i64} {
  func.func @_convt_bn_lrelu_kernel(%arg0: i32, %arg1: i32, %arg2: memref<144x128xbf16, #tpu.memory_space<vmem>>, %arg3: memref<32x144xbf16, #tpu.memory_space<vmem>>, %arg4: memref<32x1xf32, #tpu.memory_space<vmem>>, %arg5: memref<8x1xf32, #tpu.memory_space<vmem>>, %arg6: memref<8x1xf32, #tpu.memory_space<vmem>>, %arg7: memref<32x128xbf16, #tpu.memory_space<vmem>>, %arg8: memref<8x1xf32, #tpu.memory_space<vmem>>, %arg9: memref<8x1xf32, #tpu.memory_space<vmem>>, %arg10: memref<32x1xf32, #tpu.memory_space<vmem>>, %arg11: memref<32x1xf32, #tpu.memory_space<vmem>>) attributes {dimension_semantics = [#tpu.dimension_semantics<arbitrary>, #tpu.dimension_semantics<arbitrary>], iteration_bounds = array<i64: 2, 1>, scalar_prefetch = 0 : i64, scratch_operands = 4 : i64, tpu.core_type = #tpu.core_type<tc>, window_params = [{transform_indices = @transform_0, window_bounds = array<i64: 144, 128>}, {pipeline_mode = #tpu.pipeline_mode<synchronous>, transform_indices = @transform_1, window_bounds = array<i64: 32, 144>}, {pipeline_mode = #tpu.pipeline_mode<synchronous>, transform_indices = @transform_2, window_bounds = array<i64: 32, 1>}, {pipeline_mode = #tpu.pipeline_mode<synchronous>, transform_indices = @transform_3, window_bounds = array<i64: 8, 1>}, {pipeline_mode = #tpu.pipeline_mode<synchronous>, transform_indices = @transform_4, window_bounds = array<i64: 8, 1>}, {transform_indices = @transform_5, window_bounds = array<i64: 32, 128>}]} {
    %c0 = arith.constant 0 : index
    %c0_0 = arith.constant 0 : index
    %0 = vector.load %arg3[%c0, %c0_0] : memref<32x144xbf16, #tpu.memory_space<vmem>>, vector<32x144xbf16>
    %c0_1 = arith.constant 0 : index
    %c0_2 = arith.constant 0 : index
    %1 = vector.load %arg2[%c0_1, %c0_2] : memref<144x128xbf16, #tpu.memory_space<vmem>>, vector<144x128xbf16>
    %cst = arith.constant dense<0.000000e+00> : vector<32x128xf32>
    %2 = tpu.matmul %0, %1, %cst {dimension_numbers = #tpu.dot_dimension_numbers<[1], [0], [0], [1], [0, 0, 1, 1], [], []>} : vector<32x144xbf16>, vector<144x128xbf16>, vector<32x128xf32> -> vector<32x128xf32>
    %c0_3 = arith.constant 0 : index
    %c0_4 = arith.constant 0 : index
    %3 = vector.load %arg4[%c0_3, %c0_4] : memref<32x1xf32, #tpu.memory_space<vmem>>, vector<32x1xf32>
    %4 = vector.broadcast %3 : vector<32x1xf32> to vector<32x128xf32>
    %5 = arith.addf %2, %4 : vector<32x128xf32>
    %c0_i32 = arith.constant 0 : i32
    %6 = arith.cmpi eq, %arg0, %c0_i32 : i32
    %7 = arith.extui %6 : i1 to i32
    %c0_i32_5 = arith.constant 0 : i32
    %8 = arith.cmpi ne, %7, %c0_i32_5 : i32
    scf.if %8 {
      %c0_i32_7 = arith.constant 0 : i32
      %12 = arith.cmpi eq, %arg1, %c0_i32_7 : i32
      %13 = arith.extui %12 : i1 to i32
      %c0_i32_8 = arith.constant 0 : i32
      %14 = arith.cmpi ne, %13, %c0_i32_8 : i32
      scf.if %14 {
        %cst_21 = arith.constant 0.000000e+00 : f32
        %43 = vector.broadcast %cst_21 : f32 to vector<8x1xf32>
        %c0_22 = arith.constant 0 : index
        %c0_23 = arith.constant 0 : index
        %44 = vector.load %arg8[%c0_22, %c0_23] : memref<8x1xf32, #tpu.memory_space<vmem>>, vector<8x1xf32>
        tpu.vector_store %arg8[%c0_22, %c0_23], %43 {strides = array<i32>} : memref<8x1xf32, #tpu.memory_space<vmem>>, vector<8x1xf32>,
        %cst_24 = arith.constant 0.000000e+00 : f32
        %45 = vector.broadcast %cst_24 : f32 to vector<8x1xf32>
        %c0_25 = arith.constant 0 : index
        %c0_26 = arith.constant 0 : index
        %46 = vector.load %arg9[%c0_25, %c0_26] : memref<8x1xf32, #tpu.memory_space<vmem>>, vector<8x1xf32>
        tpu.vector_store %arg9[%c0_25, %c0_26], %45 {strides = array<i32>} : memref<8x1xf32, #tpu.memory_space<vmem>>, vector<8x1xf32>,
      } else {
      }
      %cst_9 = arith.constant dense<0.000000e+00> : vector<32xf32>
      %15 = vector.multi_reduction <add>, %5, %cst_9 [1] : vector<32x128xf32> to vector<32xf32>
      %16 = vector.shape_cast %15 : vector<32xf32> to vector<32x1xf32>
      %17 = arith.mulf %5, %5 : vector<32x128xf32>
      %cst_10 = arith.constant dense<0.000000e+00> : vector<32xf32>
      %18 = vector.multi_reduction <add>, %17, %cst_10 [1] : vector<32x128xf32> to vector<32xf32>
      %19 = vector.shape_cast %18 : vector<32xf32> to vector<32x1xf32>
      %c0_11 = arith.constant 0 : index
      %c0_12 = arith.constant 0 : index
      %20 = vector.load %arg8[%c0_11, %c0_12] : memref<8x1xf32, #tpu.memory_space<vmem>>, vector<8x1xf32>
      %21 = vector.extract_strided_slice %16 {offsets = [0, 0], sizes = [8, 1], strides = [1, 1]} : vector<32x1xf32> to vector<8x1xf32>
      %22 = vector.extract_strided_slice %16 {offsets = [8, 0], sizes = [8, 1], strides = [1, 1]} : vector<32x1xf32> to vector<8x1xf32>
      %23 = arith.addf %21, %22 : vector<8x1xf32>
      %24 = vector.extract_strided_slice %16 {offsets = [16, 0], sizes = [8, 1], strides = [1, 1]} : vector<32x1xf32> to vector<8x1xf32>
      %25 = arith.addf %23, %24 : vector<8x1xf32>
      %26 = vector.extract_strided_slice %16 {offsets = [24, 0], sizes = [8, 1], strides = [1, 1]} : vector<32x1xf32> to vector<8x1xf32>
      %27 = arith.addf %25, %26 : vector<8x1xf32>
      %28 = arith.addf %20, %27 : vector<8x1xf32>
      %c0_13 = arith.constant 0 : index
      %c0_14 = arith.constant 0 : index
      %29 = vector.load %arg8[%c0_13, %c0_14] : memref<8x1xf32, #tpu.memory_space<vmem>>, vector<8x1xf32>
      tpu.vector_store %arg8[%c0_13, %c0_14], %28 {strides = array<i32>} : memref<8x1xf32, #tpu.memory_space<vmem>>, vector<8x1xf32>,
      %c0_15 = arith.constant 0 : index
      %c0_16 = arith.constant 0 : index
      %30 = vector.load %arg9[%c0_15, %c0_16] : memref<8x1xf32, #tpu.memory_space<vmem>>, vector<8x1xf32>
      %31 = vector.extract_strided_slice %19 {offsets = [0, 0], sizes = [8, 1], strides = [1, 1]} : vector<32x1xf32> to vector<8x1xf32>
      %32 = vector.extract_strided_slice %19 {offsets = [8, 0], sizes = [8, 1], strides = [1, 1]} : vector<32x1xf32> to vector<8x1xf32>
      %33 = arith.addf %31, %32 : vector<8x1xf32>
      %34 = vector.extract_strided_slice %19 {offsets = [16, 0], sizes = [8, 1], strides = [1, 1]} : vector<32x1xf32> to vector<8x1xf32>
      %35 = arith.addf %33, %34 : vector<8x1xf32>
      %36 = vector.extract_strided_slice %19 {offsets = [24, 0], sizes = [8, 1], strides = [1, 1]} : vector<32x1xf32> to vector<8x1xf32>
      %37 = arith.addf %35, %36 : vector<8x1xf32>
      %38 = arith.addf %30, %37 : vector<8x1xf32>
      %c0_17 = arith.constant 0 : index
      %c0_18 = arith.constant 0 : index
      %39 = vector.load %arg9[%c0_17, %c0_18] : memref<8x1xf32, #tpu.memory_space<vmem>>, vector<8x1xf32>
      tpu.vector_store %arg9[%c0_17, %c0_18], %38 {strides = array<i32>} : memref<8x1xf32, #tpu.memory_space<vmem>>, vector<8x1xf32>,
      %c0_i32_19 = arith.constant 0 : i32
      %40 = arith.cmpi eq, %arg1, %c0_i32_19 : i32
      %41 = arith.extui %40 : i1 to i32
      %c0_i32_20 = arith.constant 0 : i32
      %42 = arith.cmpi ne, %41, %c0_i32_20 : i32
      scf.if %42 {
        %c0_21 = arith.constant 0 : index
        %c0_22 = arith.constant 0 : index
        %43 = vector.load %arg8[%c0_21, %c0_22] : memref<8x1xf32, #tpu.memory_space<vmem>>, vector<8x1xf32>
        %cst_23 = arith.constant 0.001953125 : f32
        %44 = vector.broadcast %cst_23 : f32 to vector<8x1xf32>
        %45 = arith.mulf %43, %44 : vector<8x1xf32>
        %c0_24 = arith.constant 0 : index
        %c0_25 = arith.constant 0 : index
        %46 = vector.load %arg9[%c0_24, %c0_25] : memref<8x1xf32, #tpu.memory_space<vmem>>, vector<8x1xf32>
        %cst_26 = arith.constant 0.001953125 : f32
        %47 = vector.broadcast %cst_26 : f32 to vector<8x1xf32>
        %48 = arith.mulf %46, %47 : vector<8x1xf32>
        %49 = arith.mulf %45, %45 : vector<8x1xf32>
        %50 = arith.subf %48, %49 : vector<8x1xf32>
        %cst_27 = arith.constant 0.000000e+00 : f32
        %51 = vector.broadcast %cst_27 : f32 to vector<8x1xf32>
        %52 = arith.maximumf %50, %51 : vector<8x1xf32>
        %cst_28 = arith.constant 9.99999974E-6 : f32
        %53 = vector.broadcast %cst_28 : f32 to vector<8x1xf32>
        %54 = arith.addf %52, %53 : vector<8x1xf32>
        %55 = math.rsqrt %54 : vector<8x1xf32>
        %c0_29 = arith.constant 0 : index
        %c0_30 = arith.constant 0 : index
        %56 = vector.load %arg5[%c0_29, %c0_30] : memref<8x1xf32, #tpu.memory_space<vmem>>, vector<8x1xf32>
        %57 = arith.mulf %55, %56 : vector<8x1xf32>
        %c0_31 = arith.constant 0 : index
        %c0_32 = arith.constant 0 : index
        %58 = vector.load %arg6[%c0_31, %c0_32] : memref<8x1xf32, #tpu.memory_space<vmem>>, vector<8x1xf32>
        %59 = arith.mulf %45, %57 : vector<8x1xf32>
        %60 = arith.subf %58, %59 : vector<8x1xf32>
        %61 = tpu.concatenate %57, %57, %57, %57 in 0 : vector<8x1xf32>, vector<8x1xf32>, vector<8x1xf32>, vector<8x1xf32> -> vector<32x1xf32>
        %c0_33 = arith.constant 0 : index
        %c0_34 = arith.constant 0 : index
        %62 = vector.load %arg10[%c0_33, %c0_34] : memref<32x1xf32, #tpu.memory_space<vmem>>, vector<32x1xf32>
        tpu.vector_store %arg10[%c0_33, %c0_34], %61 {strides = array<i32>} : memref<32x1xf32, #tpu.memory_space<vmem>>, vector<32x1xf32>,
        %63 = tpu.concatenate %60, %60, %60, %60 in 0 : vector<8x1xf32>, vector<8x1xf32>, vector<8x1xf32>, vector<8x1xf32> -> vector<32x1xf32>
        %c0_35 = arith.constant 0 : index
        %c0_36 = arith.constant 0 : index
        %64 = vector.load %arg11[%c0_35, %c0_36] : memref<32x1xf32, #tpu.memory_space<vmem>>, vector<32x1xf32>
        tpu.vector_store %arg11[%c0_35, %c0_36], %63 {strides = array<i32>} : memref<32x1xf32, #tpu.memory_space<vmem>>, vector<32x1xf32>,
      } else {
      }
    } else {
    }
    %c1_i32 = arith.constant 1 : i32
    %9 = arith.cmpi eq, %arg0, %c1_i32 : i32
    %10 = arith.extui %9 : i1 to i32
    %c0_i32_6 = arith.constant 0 : i32
    %11 = arith.cmpi ne, %10, %c0_i32_6 : i32
    scf.if %11 {
      %c0_7 = arith.constant 0 : index
      %c0_8 = arith.constant 0 : index
      %12 = vector.load %arg10[%c0_7, %c0_8] : memref<32x1xf32, #tpu.memory_space<vmem>>, vector<32x1xf32>
      %13 = vector.broadcast %12 : vector<32x1xf32> to vector<32x128xf32>
      %14 = arith.mulf %5, %13 : vector<32x128xf32>
      %c0_9 = arith.constant 0 : index
      %c0_10 = arith.constant 0 : index
      %15 = vector.load %arg11[%c0_9, %c0_10] : memref<32x1xf32, #tpu.memory_space<vmem>>, vector<32x1xf32>
      %16 = vector.broadcast %15 : vector<32x1xf32> to vector<32x128xf32>
      %17 = arith.addf %14, %16 : vector<32x128xf32>
      %cst_11 = arith.constant 0.000000e+00 : f32
      %18 = vector.broadcast %cst_11 : f32 to vector<32x128xf32>
      %19 = arith.cmpf ogt, %17, %18 : vector<32x128xf32>
      %cst_12 = arith.constant 2.000000e-01 : f32
      %20 = vector.broadcast %cst_12 : f32 to vector<32x128xf32>
      %21 = arith.mulf %20, %17 : vector<32x128xf32>
      %22 = arith.select %19, %17, %21 : vector<32x128xi1>, vector<32x128xf32>
      %23 = arith.truncf %22 : vector<32x128xf32> to vector<32x128xbf16>
      %c0_13 = arith.constant 0 : index
      %c0_14 = arith.constant 0 : index
      %24 = vector.load %arg7[%c0_13, %c0_14] : memref<32x128xbf16, #tpu.memory_space<vmem>>, vector<32x128xbf16>
      tpu.vector_store %arg7[%c0_13, %c0_14], %23 {strides = array<i32>} : memref<32x128xbf16, #tpu.memory_space<vmem>>, vector<32x128xbf16>,
    } else {
    }
    return
  }
  func.func @transform_0(%arg0: i32, %arg1: i32) -> (i32, i32) {
    %c0_i32 = arith.constant 0 : i32
    %c0_i32_0 = arith.constant 0 : i32
    return %c0_i32, %arg1 : i32, i32
  }
  func.func @transform_1(%arg0: i32, %arg1: i32) -> (i32, i32) {
    %c0_i32 = arith.constant 0 : i32
    %c0_i32_0 = arith.constant 0 : i32
    %c0_i32_1 = arith.constant 0 : i32
    return %c0_i32, %c0_i32_0 : i32, i32
  }
  func.func @transform_2(%arg0: i32, %arg1: i32) -> (i32, i32) {
    %c0_i32 = arith.constant 0 : i32
    %c0_i32_0 = arith.constant 0 : i32
    %c0_i32_1 = arith.constant 0 : i32
    return %c0_i32, %c0_i32_0 : i32, i32
  }
  func.func @transform_3(%arg0: i32, %arg1: i32) -> (i32, i32) {
    %c0_i32 = arith.constant 0 : i32
    %c0_i32_0 = arith.constant 0 : i32
    %c0_i32_1 = arith.constant 0 : i32
    return %c0_i32, %c0_i32_0 : i32, i32
  }
  func.func @transform_4(%arg0: i32, %arg1: i32) -> (i32, i32) {
    %c0_i32 = arith.constant 0 : i32
    %c0_i32_0 = arith.constant 0 : i32
    %c0_i32_1 = arith.constant 0 : i32
    return %c0_i32, %c0_i32_0 : i32, i32
  }
  func.func @transform_5(%arg0: i32, %arg1: i32) -> (i32, i32) {
    %c0_i32 = arith.constant 0 : i32
    %c0_i32_0 = arith.constant 0 : i32
    return %c0_i32, %arg1 : i32, i32
  }
}

module attributes {stable_mosaic.version = 11 : i64} {
  func.func @_convt_tanh_kernel(%arg0: i32, %arg1: memref<72x512xbf16, #tpu.memory_space<vmem>>, %arg2: memref<12x72xbf16, #tpu.memory_space<vmem>>, %arg3: memref<12x1xf32, #tpu.memory_space<vmem>>, %arg4: memref<12x512xf32, #tpu.memory_space<vmem>>) attributes {dimension_semantics = [#tpu.dimension_semantics<parallel>], iteration_bounds = array<i64: 1>, scalar_prefetch = 0 : i64, scratch_operands = 0 : i64, tpu.core_type = #tpu.core_type<tc>, window_params = [{transform_indices = @transform_0, window_bounds = array<i64: 72, 512>}, {pipeline_mode = #tpu.pipeline_mode<synchronous>, transform_indices = @transform_1, window_bounds = array<i64: 12, 72>}, {pipeline_mode = #tpu.pipeline_mode<synchronous>, transform_indices = @transform_2, window_bounds = array<i64: 12, 1>}, {transform_indices = @transform_3, window_bounds = array<i64: 12, 512>}]} {
    %c0 = arith.constant 0 : index
    %c0_0 = arith.constant 0 : index
    %0 = vector.load %arg2[%c0, %c0_0] : memref<12x72xbf16, #tpu.memory_space<vmem>>, vector<12x72xbf16>
    %c0_1 = arith.constant 0 : index
    %c0_2 = arith.constant 0 : index
    %1 = vector.load %arg1[%c0_1, %c0_2] : memref<72x512xbf16, #tpu.memory_space<vmem>>, vector<72x512xbf16>
    %cst = arith.constant dense<0.000000e+00> : vector<12x512xf32>
    %2 = tpu.matmul %0, %1, %cst {dimension_numbers = #tpu.dot_dimension_numbers<[1], [0], [0], [1], [0, 0, 1, 1], [], []>} : vector<12x72xbf16>, vector<72x512xbf16>, vector<12x512xf32> -> vector<12x512xf32>
    %c0_3 = arith.constant 0 : index
    %c0_4 = arith.constant 0 : index
    %3 = vector.load %arg3[%c0_3, %c0_4] : memref<12x1xf32, #tpu.memory_space<vmem>>, vector<12x1xf32>
    %4 = vector.broadcast %3 : vector<12x1xf32> to vector<12x512xf32>
    %5 = arith.addf %2, %4 : vector<12x512xf32>
    %6 = math.tanh %5 : vector<12x512xf32>
    %c0_5 = arith.constant 0 : index
    %c0_6 = arith.constant 0 : index
    %7 = vector.load %arg4[%c0_5, %c0_6] : memref<12x512xf32, #tpu.memory_space<vmem>>, vector<12x512xf32>
    tpu.vector_store %arg4[%c0_5, %c0_6], %6 {strides = array<i32>} : memref<12x512xf32, #tpu.memory_space<vmem>>, vector<12x512xf32>,
    return
  }
  func.func @transform_0(%arg0: i32) -> (i32, i32) {
    %c0_i32 = arith.constant 0 : i32
    %c0_i32_0 = arith.constant 0 : i32
    return %c0_i32, %arg0 : i32, i32
  }
  func.func @transform_1(%arg0: i32) -> (i32, i32) {
    %c0_i32 = arith.constant 0 : i32
    %c0_i32_0 = arith.constant 0 : i32
    %c0_i32_1 = arith.constant 0 : i32
    return %c0_i32, %c0_i32_0 : i32, i32
  }
  func.func @transform_2(%arg0: i32) -> (i32, i32) {
    %c0_i32 = arith.constant 0 : i32
    %c0_i32_0 = arith.constant 0 : i32
    %c0_i32_1 = arith.constant 0 : i32
    return %c0_i32, %c0_i32_0 : i32, i32
  }
  func.func @transform_3(%arg0: i32) -> (i32, i32) {
    %c0_i32 = arith.constant 0 : i32
    %c0_i32_0 = arith.constant 0 : i32
    return %c0_i32, %arg0 : i32, i32
  }
}

</mosaic_0001>

<llo_original>
// kernel: generator_forward.5
$region0: #{generator_forward.5}
  #allocation0 [shape = 'u32[]', space=smem, size = 0x4, offset = 0x4, fixed_abs, tag = 'smem constant byte address 0x4 - core index']
  #allocation1 [shape = 'u32[144,128]{1,0:T(1,128)}', space=vmem, size = 0x12000, scoped, tag = 'internal scratch']
  %s0 = inlined_call_operand.vmem [shape: bf16[2,32], index: 0, kind: input, shape index: {}]
  %s1 = inlined_call_operand.hbm [shape: bf16[32,256], index: 1, kind: input, shape index: {}]
  %s2 = inlined_call_operand.hbm [shape: f32[1,256], index: 2, kind: input, shape index: {}]
  %s3 = inlined_call_operand.hbm [shape: f32[1,256], index: 3, kind: input, shape index: {}]
  %s4 = inlined_call_operand.hbm [shape: f32[1,256], index: 4, kind: input, shape index: {}]
  %s5 = inlined_call_operand.vmem [shape: bf16[2,256], index: 5, kind: output, shape index: {}]
  %s6 = sld [smem:[#allocation0]]
  $region46: #{generator_forward.5} parent=0
    _
  %s8 = ssub.s32 1, %s6
  %s9 = scalar_select 0, %s8, %s6
  $region1: #{generator_forward.5} parent=0
    #allocation2 [shape = 'u8[16384]{0}', space=vmem, size = 0x4000, scoped, tag = 'input window, operand 1, single buffered']
    #allocation3 [shape = 's32[1]{0}', space=sflag, size = 0x4, scoped, tag = 'scoped memory for generator_forward.5']
    #allocation4 [shape = 'u8[1024]{0}', space=vmem, size = 0x400, scoped, tag = 'input window, operand 2, single buffered']
    #allocation5 [shape = 's32[1]{0}', space=sflag, size = 0x4, scoped, tag = 'scoped memory for generator_forward.5']
    #allocation6 [shape = 'u8[1024]{0}', space=vmem, size = 0x400, scoped, tag = 'input window, operand 3, single buffered']
    #allocation7 [shape = 'u8[1024]{0}', space=vmem, size = 0x400, scoped, tag = 'input window, operand 4, single buffered']
    #allocation8 [shape = 's32[1]{0}', space=sflag, size = 0x4, scoped, tag = 'scoped memory for generator_forward.5']
    %10 = vsyncpa [#allocation3], 0
    %11 = vsyncpa [#allocation5], 0
    %12 = vsyncpa [#allocation8], 0
    // Predicated region
    $region2: #{generator_forward.5} parent=1 // pred_check
      _
    $region3: #{generator_forward.5} parent=1 // pred_check_branch
      %14 = sbr.rel (0) target = $region5
    $region4: #{generator_forward.5} parent=1 // pred_region
      _
    $region5: #{generator_forward.5} parent=1 // pred_fallthru
      _
    // Predicated region
    $region6: #{generator_forward.5} parent=1 // pred_check
      _
    $region7: #{generator_forward.5} parent=1 // pred_check_branch
      %16 = sbr.rel (0) target = $region9
    $region8: #{generator_forward.5} parent=1 // pred_region
      %s18 = ssub.s32 512, 512
      %19 = vsyncadd [#allocation3], %s18
      %s20 = sshll.u32 [#allocation2], 4
      %s21 = int_to_ptr.vmem [resolvable:$true] %s20
      %26 = dma.hbm_to_vmem [thread:$0]  %s1, 512, %s21, [#allocation3], 128, 128, 8
    $region9: #{generator_forward.5} parent=1 // pred_fallthru
      _
    // Predicated region
    $region10: #{generator_forward.5} parent=1 // pred_check
      _
    $region11: #{generator_forward.5} parent=1 // pred_check_branch
      %28 = sbr.rel (0) target = $region13
    $region12: #{generator_forward.5} parent=1 // pred_region
      %s30 = ssub.s32 32, 32
      %31 = vsyncadd [#allocation5], %s30
      %s33 = sshll.u32 [#allocation4], 4
      %s34 = int_to_ptr.vmem [resolvable:$true] %s33
      %36 = dma.hbm_to_vmem [thread:$0]  %s2, 32, %s34, [#allocation5]
    $region13: #{generator_forward.5} parent=1 // pred_fallthru
      _
    // Predicated region
    $region14: #{generator_forward.5} parent=1 // pred_check
      _
    $region15: #{generator_forward.5} parent=1 // pred_check_branch
      %38 = sbr.rel (0) target = $region17
    $region16: #{generator_forward.5} parent=1 // pred_region
      %s40 = ssub.s32 32, 32
      %41 = vsyncadd [#allocation5], %s40
      %s43 = sshll.u32 [#allocation6], 4
      %s44 = int_to_ptr.vmem [resolvable:$true] %s43
      %46 = dma.hbm_to_vmem [thread:$0]  %s3, 32, %s44, [#allocation5]
    $region17: #{generator_forward.5} parent=1 // pred_fallthru
      _
    // Predicated region
    $region18: #{generator_forward.5} parent=1 // pred_check
      _
    $region19: #{generator_forward.5} parent=1 // pred_check_branch
      %48 = sbr.rel (0) target = $region21
    $region20: #{generator_forward.5} parent=1 // pred_region
      %s50 = ssub.s32 32, 32
      %51 = vsyncadd [#allocation8], %s50
      %s53 = sshll.u32 [#allocation7], 4
      %s54 = int_to_ptr.vmem [resolvable:$true] %s53
      %56 = dma.hbm_to_vmem [thread:$0]  %s4, 32, %s54, [#allocation8]
    $region21: #{generator_forward.5} parent=1 // pred_fallthru
      _
    // Predicated region
    $region22: #{generator_forward.5} parent=1 // pred_check
      _
    $region23: #{generator_forward.5} parent=1 // pred_check_branch
      %58 = sbr.rel (0) target = $region25
    $region24: #{generator_forward.5} parent=1 // pred_region
      %59 = dma.done [#allocation3], 512
    $region25: #{generator_forward.5} parent=1 // pred_fallthru
      _
    // Predicated region
    $region26: #{generator_forward.5} parent=1 // pred_check
      _
    $region27: #{generator_forward.5} parent=1 // pred_check_branch
      %61 = sbr.rel (0) target = $region29
    $region28: #{generator_forward.5} parent=1 // pred_region
      %62 = dma.done [#allocation5], 32
    $region29: #{generator_forward.5} parent=1 // pred_fallthru
      _
    // Predicated region
    $region30: #{generator_forward.5} parent=1 // pred_check
      _
    $region31: #{generator_forward.5} parent=1 // pred_check_branch
      %64 = sbr.rel (0) target = $region33
    $region32: #{generator_forward.5} parent=1 // pred_region
      %65 = dma.done [#allocation5], 32
    $region33: #{generator_forward.5} parent=1 // pred_fallthru
      _
    // Predicated region
    $region34: #{generator_forward.5} parent=1 // pred_check
      _
    $region35: #{generator_forward.5} parent=1 // pred_check_branch
      %67 = sbr.rel (0) target = $region37
    $region36: #{generator_forward.5} parent=1 // pred_region
      %68 = dma.done [#allocation8], 32
    $region37: #{generator_forward.5} parent=1 // pred_fallthru
      _
    %v70 = vld [vmem:[%s0] sm:$0x1]
    %v71 = vld [vmem:[#allocation2] sm:$0xff]
    %v72 = vld [vmem:[#allocation2 + $0x8] sm:$0xff]
    %v73 = vld [vmem:[#allocation2 + $0x10] sm:$0xff]
    %v74 = vld [vmem:[#allocation2 + $0x18] sm:$0xff]
    %v75 = vld [vmem:[#allocation4] sm:$0x3]
    %v77 = vlaneseq
    %v78 = vshrl.u32 %v77, 7
    %v79 = vsub.s32 0, %v78
    %v80 = vrot.slane %v75, %v79
    %v81 = vlaneseq
    %v82 = vshrl.u32 %v81, 7
    %v83 = vsub.s32 1, %v82
    %v84 = vrot.slane %v75, %v83
    %v91 = vunpack.c.l.b16 %v71
    %v92 = vunpack.c.h.b16 %v71
    %v93 = vunpack.c.l.b16 %v72
    %v94 = vunpack.c.h.b16 %v72
    %v95 = vunpack.c.l.b16 %v73
    %v96 = vunpack.c.h.b16 %v73
    %v97 = vunpack.c.l.b16 %v74
    %v98 = vunpack.c.h.b16 %v74
    %v99 = vpack.c.b16 %v93, %v91
    %v100 = vpack.c.b16 %v94, %v92
    %v101 = vpack.c.b16 %v97, %v95
    %v102 = vpack.c.b16 %v98, %v96
    %vm107 = vcmask 261120
    %v109 = vsel %vm107, %v70, 0
    %111 = vmatprep.subr.bf16.mxu0 %v100
    %112 = vmatpush1.bf16.msra.mxu0 %v99
    %113 = vmatprep.subr.bf16.mxu0 %v102
    %114 = vmatpush1.bf16.msra.mxu0 %v101
    %115 = vmatprep.subr.bf16.mxu0 0
    %116 = vmatpush1.bf16.msra.mxu0 0
    %117 = vmatprep.subr.bf16.mxu0 0
    %118 = vmatpush1.bf16.msra.mxu0 0
    %119 = vmatprep.subr.bf16.mxu0 0
    %120 = vmatpush1.bf16.msra.mxu0 0
    %121 = vmatprep.subr.bf16.mxu0 0
    %122 = vmatpush1.bf16.msra.mxu0 0
    %123 = vmatprep.subr.bf16.mxu0 0
    %124 = vmatpush1.bf16.msra.mxu0 0
    %125 = vmatprep.subr.bf16.mxu0 0
    %126 = vmatpush1.bf16.msra.mxu0 0
    %127 = vmatprep.subr.bf16.mxu0 0
    %128 = vmatpush1.bf16.msra.mxu0 0
    %129 = vmatprep.subr.bf16.mxu0 0
    %130 = vmatpush1.bf16.msra.mxu0 0
    %131 = vmatprep.subr.bf16.mxu0 0
    %132 = vmatpush1.bf16.msra.mxu0 0
    %133 = vmatprep.subr.bf16.mxu0 0
    %134 = vmatpush1.bf16.msra.mxu0 0
    %135 = vmatprep.subr.bf16.mxu0 0
    %136 = vmatpush1.bf16.msra.mxu0 0
    %137 = vmatprep.subr.bf16.mxu0 0
    %138 = vmatpush1.bf16.msra.mxu0 0
    %139 = vmatprep.subr.bf16.mxu0 0
    %140 = vmatpush1.bf16.msra.mxu0 0
    %141 = vmatprep.subr.bf16.mxu0 0
    %142 = vmatpush1.bf16.msra.mxu0 0
    %143 = vmatprep.mubr.bf16.mxu0 0
    %144 = vmatmul.mubr.bf16.gmra.mrb[0].mxu0 %v109
    %v145 = vpop.f32.mrb[0].mxu0
    %v146 = vadd.f32 %v80, %v145
    %v147 = vpop.f32.mrb[0].mxu0
    %v148 = vadd.f32 %v84, %v147
    %v149 = vpop.f32.mrb[0].mxu0
    %v150 = vpop.f32.mrb[0].mxu0
    %151 = vdwg.mxu0
    %vm152 = vcmask 1041408
    %v153 = vsel %vm152, %v146, 0.0
    %v154 = vrot.slane %v153, 4
    %v155 = vadd.f32 %v153, %v154
    %v156 = vrot.slane %v155, 2
    %v157 = vadd.f32 %v155, %v156
    %v158 = vrot.slane %v157, 1
    %v159 = vadd.f32 %v157, %v158
    %v160 = vsel %vm152, %v148, 0.0
    %v161 = vrot.slane %v160, 4
    %v162 = vadd.f32 %v160, %v161
    %v163 = vrot.slane %v162, 2
    %v164 = vadd.f32 %v162, %v163
    %v165 = vrot.slane %v164, 1
    %v166 = vadd.f32 %v164, %v165
    %v167 = vmul.f32 %v159, 0.5
    %v168 = vmul.f32 %v166, 0.5
    %v169 = vsub.f32 %v146, %v167
    %v170 = vsub.f32 %v148, %v168
    %v171 = vmul.f32 %v169, %v169
    %v172 = vmul.f32 %v170, %v170
    %v173 = vsel %vm152, %v171, 0.0
    %v174 = vrot.slane %v173, 4
    %v175 = vadd.f32 %v173, %v174
    %v176 = vrot.slane %v175, 2
    %v177 = vadd.f32 %v175, %v176
    %v178 = vrot.slane %v177, 1
    %v179 = vadd.f32 %v177, %v178
    %v180 = vsel %vm152, %v172, 0.0
    %v181 = vrot.slane %v180, 4
    %v182 = vadd.f32 %v180, %v181
    %v183 = vrot.slane %v182, 2
    %v184 = vadd.f32 %v182, %v183
    %v185 = vrot.slane %v184, 1
    %v186 = vadd.f32 %v184, %v185
    %v187 = vmul.f32 %v179, 0.5
    %v188 = vmul.f32 %v186, 0.5
    %v189 = vadd.f32 %v187, 1e-05
    %v190 = vadd.f32 %v188, 1e-05
    %v191 = vrsqrt.pop %v189
    %v192 = vrsqrt.pop %v190
    %v193 = vmul.f32 %v169, %v191
    %v194 = vmul.f32 %v170, %v192
    %v195 = vld [vmem:[#allocation6] sm:$0x3]
    %v197 = vlaneseq
    %v198 = vshrl.u32 %v197, 7
    %v199 = vsub.s32 0, %v198
    %v200 = vrot.slane %v195, %v199
    %v201 = vlaneseq
    %v202 = vshrl.u32 %v201, 7
    %v203 = vsub.s32 1, %v202
    %v204 = vrot.slane %v195, %v203
    %v207 = vmul.f32 %v193, %v200
    %v208 = vmul.f32 %v194, %v204
    %v209 = vld [vmem:[#allocation7] sm:$0x3]
    %v211 = vlaneseq
    %v212 = vshrl.u32 %v211, 7
    %v213 = vsub.s32 0, %v212
    %v214 = vrot.slane %v209, %v213
    %v215 = vlaneseq
    %v216 = vshrl.u32 %v215, 7
    %v217 = vsub.s32 1, %v216
    %v218 = vrot.slane %v209, %v217
    %v221 = vadd.f32 %v207, %v214
    %v222 = vadd.f32 %v208, %v218
    %vm223 = vcmp.gt.f32.partialorder %v221, 0.0
    %vm224 = vcmp.gt.f32.partialorder %v222, 0.0
    %v225 = vmul.f32 %v221, 0.2
    %v226 = vmul.f32 %v222, 0.2
    %v227 = vsel %vm223, %v221, %v225
    %v228 = vsel %vm224, %v222, %v226
    %v229 = vpack.c.bf16 %v227, %v227
    %v230 = vpack.c.bf16 %v228, %v228
    %v233 = vcombine.low %v229, %v230
    %v235 = vunpack.c.l.s4 1966171168
    %v236 = vunpack.c.0.s8 %v235
    %v237 = vlaneseq
    %v238 = vshrl.u32 %v237, 7
    %v239 = vsub.s32 %v236, %v238
    %v240 = vrot.slane %v233, %v239
    %v242 = vunpack.c.l.s4 1966171168
    %v243 = vunpack.c.0.s8 %v242
    %v244 = vlaneseq
    %v245 = vshrl.u32 %v244, 7
    %v246 = vsub.s32 %v243, %v245
    %v247 = vrot.slane %v240, %v246
    %249 = vst [vmem:[%s5] sm:$0x3] %v247
    // Predicated region
    $region38: #{generator_forward.5} parent=1 // pred_check
      _
    $region39: #{generator_forward.5} parent=1 // pred_check_branch
      %251 = sbr.rel (0) target = $region41
    $region40: #{generator_forward.5} parent=1 // pred_region
      _
    $region41: #{generator_forward.5} parent=1 // pred_fallthru
      _
    // Predicated region
    $region42: #{generator_forward.5} parent=1 // pred_check
      _
    $region43: #{generator_forward.5} parent=1 // pred_check_branch
      %253 = sbr.rel (0) target = $region45
    $region44: #{generator_forward.5} parent=1 // pred_region
      _
    $region45: #{generator_forward.5} parent=1 // pred_fallthru
      _
    %254 = vsyncpa [#allocation3], 1
    %255 = vsyncpa [#allocation5], 1
    %256 = vsyncpa [#allocation8], 1

// kernel: generator_forward.7
$region0: #{generator_forward.7}
  #allocation0 [shape = 'u32[]', space=smem, size = 0x4, offset = 0x4, fixed_abs, tag = 'smem constant byte address 0x4 - core index']
  #allocation1 [shape = 'u32[144,128]{1,0:T(1,128)}', space=vmem, size = 0x12000, scoped, tag = 'internal scratch']
  #allocation2 [shape = 'f32[16,1]{1,0:T(8,128)}', space=vmem, size = 0x2000, scoped, tag = 'scratch operand']
  #allocation3 [shape = 'f32[16,1]{1,0:T(8,128)}', space=vmem, size = 0x2000, scoped, tag = 'scratch operand']
  #allocation4 [shape = 'f32[64,1]{1,0:T(8,128)}', space=vmem, size = 0x8000, scoped, tag = 'scratch operand']
  #allocation5 [shape = 'f32[64,1]{1,0:T(8,128)}', space=vmem, size = 0x8000, scoped, tag = 'scratch operand']
  %s0 = inlined_call_operand.vmem [shape: bf16[288,32], index: 0, kind: input, shape index: {}]
  %s1 = inlined_call_operand.vmem [shape: bf16[64,288], index: 1, kind: input, shape index: {}]
  %s2 = inlined_call_operand.vmem [shape: f32[64,1], index: 2, kind: input, shape index: {}]
  %s3 = inlined_call_operand.vmem [shape: f32[16,1], index: 3, kind: input, shape index: {}]
  %s4 = inlined_call_operand.vmem [shape: f32[16,1], index: 4, kind: input, shape index: {}]
  %s5 = inlined_call_operand.vmem [shape: bf16[64,32], index: 5, kind: output, shape index: {}]
  %s6 = sld [smem:[#allocation0]]
  $region69: #{generator_forward.7} parent=0
    _
  %s8 = ssub.s32 1, %s6
  %s9 = scalar_select 0, %s8, %s6
  loop: start=0, step=1, limit=4
  $region2: #{generator_forward.7} parent=0 // loop_pre_header
    _
  $region3: #{generator_forward.7} parent=0 // loop_header
    %s11 = sphi 0, %s15
    %p12 = scmp.ge.s32.totalorder %s11, 4
    %s18 = sphi 0, %s30
    %s19 = sphi 0, %s26
    %s20 = sphi 0, %s18
    %s21 = sphi 0, %s19
    %s22 = sphi 0, %s20
    %s23 = sphi 0, %s21
    %s33 = sphi 0, %s35
    %s36 = sphi 0, %s33
    %s37 = sphi 0, %s36
    %s53 = sphi 0, %s37
    %s57 = sphi 0, %s57
    %s59 = sphi 0, %s57
    %s60 = sphi 0, %s59
    %s74 = sphi 0, %s60
    %s78 = sphi 0, %s78
    %s80 = sphi 0, %s78
    %s81 = sphi 0, %s80
    %s95 = sphi 0, %s81
    %s99 = sphi 0, %s99
    %s101 = sphi 0, %s99
    %s102 = sphi 0, %s101
    %s116 = sphi 0, %s102
    %s120 = sphi 0, %s120
    %s122 = sphi 0, %s120
    %s123 = sphi 0, %s122
    %s137 = sphi 0, %s123
    %s143 = sphi 0, %s145
    %s146 = sphi 0, %s143
    %s147 = sphi 0, %s146
    %s163 = sphi 0, %s147
  $region4: #{generator_forward.7} parent=0 // loop_header_branch
    %14 = sbr.rel (%p12) target = $region8
  $region5: #{generator_forward.7} parent=0 // loop_body
    %s16 = ssub.s32 %s11, 1
    %s17 = ssub.s32 %s11, 2
    %s24 = sadd.s32 1, %s19
    %p25 = scmp.ge.s32.totalorder %s24, 1
    %s26 = scalar_select %p25, 0, %s24
    %s27 = sadd.s32 1, %s18
    %s28 = scalar_select %p25, %s27, %s18
    %p29 = scmp.ge.s32.totalorder %s28, 2
    %s30 = scalar_select %p29, 0, %s28
    %s31 = ssub.s32 %s19, %s26
    %p32 = scmp.eq.s32.totalorder %s31, 0
    %s34 = sadd.s32 %s33, 1
    %s35 = scalar_select %p32, %s33, %s34
    %p38 = pneg %p32
    %p39 = scmp.eq.s32.totalorder %s11, 1
    %p40 = por %p38, %p39
    %p41 = scmp.ne.s32.totalorder %s33, %s36
    %p42 = scmp.eq.s32.totalorder %s11, 0
    %p43 = por %p41, %p42
    %p44 = scmp.ne.s32.totalorder %s33, %s36
    %p45 = scmp.eq.s32.totalorder %s16, 1
    %p46 = por %p44, %p45
    %p47 = scmp.ne.s32.totalorder %s36, %s37
    %p48 = scmp.eq.s32.totalorder %s16, 0
    %p49 = por %p47, %p48
    %p50 = scmp.ne.s32.totalorder %s36, %s37
    %p51 = scmp.eq.s32.totalorder %s17, 1
    %p52 = por %p50, %p51
    %p54 = scmp.ne.s32.totalorder %s37, %s53
    %p55 = scmp.eq.s32.totalorder %s17, 0
    %p56 = por %p54, %p55
    %s58 = sadd.s32 %s57, 1
    %p61 = scmp.eq.s32.totalorder %s11, 1
    %p62 = scmp.ne.s32.totalorder %s57, %s59
    %p63 = scmp.eq.s32.totalorder %s11, 0
    %p64 = por %p62, %p63
    %p65 = scmp.ne.s32.totalorder %s57, %s59
    %p66 = scmp.eq.s32.totalorder %s16, 1
    %p67 = por %p65, %p66
    %p68 = scmp.ne.s32.totalorder %s59, %s60
    %p69 = scmp.eq.s32.totalorder %s16, 0
    %p70 = por %p68, %p69
    %p71 = scmp.ne.s32.totalorder %s59, %s60
    %p72 = scmp.eq.s32.totalorder %s17, 1
    %p73 = por %p71, %p72
    %p75 = scmp.ne.s32.totalorder %s60, %s74
    %p76 = scmp.eq.s32.totalorder %s17, 0
    %p77 = por %p75, %p76
    %s79 = sadd.s32 %s78, 1
    %p82 = scmp.eq.s32.totalorder %s11, 1
    %p83 = scmp.ne.s32.totalorder %s78, %s80
    %p84 = scmp.eq.s32.totalorder %s11, 0
    %p85 = por %p83, %p84
    %p86 = scmp.ne.s32.totalorder %s78, %s80
    %p87 = scmp.eq.s32.totalorder %s16, 1
    %p88 = por %p86, %p87
    %p89 = scmp.ne.s32.totalorder %s80, %s81
    %p90 = scmp.eq.s32.totalorder %s16, 0
    %p91 = por %p89, %p90
    %p92 = scmp.ne.s32.totalorder %s80, %s81
    %p93 = scmp.eq.s32.totalorder %s17, 1
    %p94 = por %p92, %p93
    %p96 = scmp.ne.s32.totalorder %s81, %s95
    %p97 = scmp.eq.s32.totalorder %s17, 0
    %p98 = por %p96, %p97
    %s100 = sadd.s32 %s99, 1
    %p103 = scmp.eq.s32.totalorder %s11, 1
    %p104 = scmp.ne.s32.totalorder %s99, %s101
    %p105 = scmp.eq.s32.totalorder %s11, 0
    %p106 = por %p104, %p105
    %p107 = scmp.ne.s32.totalorder %s99, %s101
    %p108 = scmp.eq.s32.totalorder %s16, 1
    %p109 = por %p107, %p108
    %p110 = scmp.ne.s32.totalorder %s101, %s102
    %p111 = scmp.eq.s32.totalorder %s16, 0
    %p112 = por %p110, %p111
    %p113 = scmp.ne.s32.totalorder %s101, %s102
    %p114 = scmp.eq.s32.totalorder %s17, 1
    %p115 = por %p113, %p114
    %p117 = scmp.ne.s32.totalorder %s102, %s116
    %p118 = scmp.eq.s32.totalorder %s17, 0
    %p119 = por %p117, %p118
    %s121 = sadd.s32 %s120, 1
    %p124 = scmp.eq.s32.totalorder %s11, 1
    %p125 = scmp.ne.s32.totalorder %s120, %s122
    %p126 = scmp.eq.s32.totalorder %s11, 0
    %p127 = por %p125, %p126
    %p128 = scmp.ne.s32.totalorder %s120, %s122
    %p129 = scmp.eq.s32.totalorder %s16, 1
    %p130 = por %p128, %p129
    %p131 = scmp.ne.s32.totalorder %s122, %s123
    %p132 = scmp.eq.s32.totalorder %s16, 0
    %p133 = por %p131, %p132
    %p134 = scmp.ne.s32.totalorder %s122, %s123
    %p135 = scmp.eq.s32.totalorder %s17, 1
    %p136 = por %p134, %p135
    %p138 = scmp.ne.s32.totalorder %s123, %s137
    %p139 = scmp.eq.s32.totalorder %s17, 0
    %p140 = por %p138, %p139
    %s141 = ssub.s32 %s19, %s26
    %p142 = scmp.eq.s32.totalorder %s141, 0
    %s144 = sadd.s32 %s143, 1
    %s145 = scalar_select %p142, %s143, %s144
    %p148 = pneg %p142
    %p149 = scmp.eq.s32.totalorder %s11, 1
    %p150 = por %p148, %p149
    %p151 = scmp.ne.s32.totalorder %s143, %s146
    %p152 = scmp.eq.s32.totalorder %s11, 0
    %p153 = por %p151, %p152
    %p154 = scmp.ne.s32.totalorder %s143, %s146
    %p155 = scmp.eq.s32.totalorder %s16, 1
    %p156 = por %p154, %p155
    %p157 = scmp.ne.s32.totalorder %s146, %s147
    %p158 = scmp.eq.s32.totalorder %s16, 0
    %p159 = por %p157, %p158
    %p160 = scmp.ne.s32.totalorder %s146, %s147
    %p161 = scmp.eq.s32.totalorder %s17, 1
    %p162 = por %p160, %p161
    %p164 = scmp.ne.s32.totalorder %s147, %s163
    %p165 = scmp.eq.s32.totalorder %s17, 0
    %p166 = por %p164, %p165
    %p167 = scmp.le.s32.totalorder 1, %s11
    %p168 = scmp.lt.s32.totalorder %s11, 3
    %p169 = pnand %p167, %p168
    %p170 = pneg %p169
    // Predicated region
    $region9: #{generator_forward.7} parent=5 // pred_check
      _
    $region10: #{generator_forward.7} parent=5 // pred_check_branch
      %172 = sbr.rel (%p169) target = $region12
    $region11: #{generator_forward.7} parent=5 // pred_region
      %s173 = ssub.s32 %s11, 1
      // Predicated region
      $region13: #{generator_forward.7} parent=11 // pred_check
        %p174 = pneg %p49
      $region14: #{generator_forward.7} parent=11 // pred_check_branch
        %176 = sbr.rel (%p174) target = $region16
      $region15: #{generator_forward.7} parent=11 // pred_region
        %p177 = scmp.lt.s32.totalorder %s21, 0
        %s178 = scalar_select %p177, %s21, 0
        %s179 = smul.addr %s178, 4
        %s180 = scalar_lea.vmem %s0, %s179
      $region16: #{generator_forward.7} parent=11 // pred_fallthru
        _
      // Predicated region
      $region17: #{generator_forward.7} parent=11 // pred_check
        %p181 = pneg %p70
      $region18: #{generator_forward.7} parent=11 // pred_check_branch
        %183 = sbr.rel (%p181) target = $region20
      $region19: #{generator_forward.7} parent=11 // pred_region
        _
      $region20: #{generator_forward.7} parent=11 // pred_fallthru
        _
      // Predicated region
      $region21: #{generator_forward.7} parent=11 // pred_check
        %p184 = pneg %p91
      $region22: #{generator_forward.7} parent=11 // pred_check_branch
        %186 = sbr.rel (%p184) target = $region24
      $region23: #{generator_forward.7} parent=11 // pred_region
        _
      $region24: #{generator_forward.7} parent=11 // pred_fallthru
        _
      // Predicated region
      $region25: #{generator_forward.7} parent=11 // pred_check
        %p187 = pneg %p112
      $region26: #{generator_forward.7} parent=11 // pred_check_branch
        %189 = sbr.rel (%p187) target = $region28
      $region27: #{generator_forward.7} parent=11 // pred_region
        _
      $region28: #{generator_forward.7} parent=11 // pred_fallthru
        _
      // Predicated region
      $region29: #{generator_forward.7} parent=11 // pred_check
        %p190 = pneg %p133
      $region30: #{generator_forward.7} parent=11 // pred_check_branch
        %192 = sbr.rel (%p190) target = $region32
      $region31: #{generator_forward.7} parent=11 // pred_region
        _
      $region32: #{generator_forward.7} parent=11 // pred_fallthru
        _
    $region12: #{generator_forward.7} parent=5 // pred_fallthru
      _
    %p193 = scmp.lt.s32.totalorder %s11, 2
    // Predicated region
    $region33: #{generator_forward.7} parent=5 // pred_check
      %p194 = pneg %p193
    $region34: #{generator_forward.7} parent=5 // pred_check_branch
      %196 = sbr.rel (%p194) target = $region36
    $region35: #{generator_forward.7} parent=5 // pred_region
      _
    $region36: #{generator_forward.7} parent=5 // pred_fallthru
      _
    %p197 = scmp.le.s32.totalorder 1, %s11
    %p198 = scmp.lt.s32.totalorder %s11, 3
    %p199 = pnand %p197, %p198
    %p200 = pneg %p199
    // Predicated region
    $region37: #{generator_forward.7} parent=5 // pred_check
      _
    $region38: #{generator_forward.7} parent=5 // pred_check_branch
      %202 = sbr.rel (%p199) target = $region40
    $region39: #{generator_forward.7} parent=5 // pred_region
      %s203 = ssub.s32 %s11, 1
      %p204 = scmp.lt.s32.totalorder %s21, 0
      %s205 = scalar_select %p204, %s21, 0
      %s206 = smul.addr %s205, 4
      %s207 = scalar_lea.vmem %s0, %s206
      %p208 = pneg %p49
      %p209 = pneg %p46
      %p210 = pneg %p70
      %p211 = pneg %p67
      %p212 = pneg %p91
      %p213 = pneg %p88
      %p214 = pneg %p112
      %p215 = pneg %p109
      %p216 = pneg %p133
      %p217 = pneg %p130
      %p218 = pneg %p159
      %p219 = pneg %p156
      %p220 = scmp.lt.s32.totalorder %s21, 0
      %s221 = scalar_select %p220, %s21, 0
      %s222 = smul.addr %s221, 4
      %s223 = scalar_lea.vmem %s5, %s222
      %p224 = scmp.lt.s32.totalorder %s21, 0
      %s225 = scalar_select %p224, %s21, 0
      %s226 = smul.addr %s225, 4
      %s227 = scalar_lea.vmem %s0, %s226
      %p228 = scmp.lt.s32.totalorder %s21, 0
      %s229 = scalar_select %p228, %s21, 0
      %s230 = smul.addr %s229, 4
      %s231 = scalar_lea.vmem %s5, %s230
      %v233 = vld [vmem:[%s1] sm:$0xff]
      %v234 = vld [vmem:[%s1 + $0x8] sm:$0xf]
      %v235 = vld [vmem:[%s1 + $0xc] sm:$0xff]
      %v236 = vld [vmem:[%s1 + $0x14] sm:$0xf]
      %v237 = vld [vmem:[%s1 + $0x18] sm:$0xff]
      %v238 = vld [vmem:[%s1 + $0x20] sm:$0xf]
      %v239 = vld [vmem:[%s1 + $0x24] sm:$0xff]
      %v240 = vld [vmem:[%s1 + $0x2c] sm:$0xf]
      %v241 = vld [vmem:[%s1 + $0x30] sm:$0xff]
      %v242 = vld [vmem:[%s1 + $0x38] sm:$0xf]
      %v243 = vld [vmem:[%s1 + $0x3c] sm:$0xff]
      %v244 = vld [vmem:[%s1 + $0x44] sm:$0xf]
      %v245 = vld [vmem:[%s1 + $0x48] sm:$0xff]
      %v246 = vld [vmem:[%s1 + $0x50] sm:$0xf]
      %v247 = vld [vmem:[%s1 + $0x54] sm:$0xff]
      %v248 = vld [vmem:[%s1 + $0x5c] sm:$0xf]
      %v249 = vld [vmem:[%s227] sm:$0xf]
      %v250 = vld [vmem:[%s227 + $0x4] sm:$0xf]
      %v251 = vld [vmem:[%s227 + $0x8] sm:$0xf]
      %v252 = vld [vmem:[%s227 + $0xc] sm:$0xf]
      %v253 = vld [vmem:[%s227 + $0x10] sm:$0xf]
      %v254 = vld [vmem:[%s227 + $0x14] sm:$0xf]
      %v255 = vld [vmem:[%s227 + $0x18] sm:$0xf]
      %v256 = vld [vmem:[%s227 + $0x1c] sm:$0xf]
      %v257 = vld [vmem:[%s227 + $0x20] sm:$0xf]
      %v258 = vld [vmem:[%s227 + $0x24] sm:$0xf]
      %v259 = vld [vmem:[%s227 + $0x28] sm:$0xf]
      %v260 = vld [vmem:[%s227 + $0x2c] sm:$0xf]
      %v261 = vld [vmem:[%s227 + $0x30] sm:$0xf]
      %v262 = vld [vmem:[%s227 + $0x34] sm:$0xf]
      %v263 = vld [vmem:[%s227 + $0x38] sm:$0xf]
      %v264 = vld [vmem:[%s227 + $0x3c] sm:$0xf]
      %v265 = vld [vmem:[%s227 + $0x40] sm:$0xf]
      %v266 = vld [vmem:[%s227 + $0x44] sm:$0xf]
      %v267 = vld [vmem:[%s227 + $0x48] sm:$0xf]
      %v268 = vld [vmem:[%s227 + $0x4c] sm:$0xf]
      %v269 = vld [vmem:[%s227 + $0x50] sm:$0xf]
      %v270 = vld [vmem:[%s227 + $0x54] sm:$0xf]
      %v271 = vld [vmem:[%s227 + $0x58] sm:$0xf]
      %v272 = vld [vmem:[%s227 + $0x5c] sm:$0xf]
      %v273 = vld [vmem:[%s227 + $0x60] sm:$0xf]
      %v274 = vld [vmem:[%s227 + $0x64] sm:$0xf]
      %v275 = vld [vmem:[%s227 + $0x68] sm:$0xf]
      %v276 = vld [vmem:[%s227 + $0x6c] sm:$0xf]
      %v277 = vld [vmem:[%s227 + $0x70] sm:$0xf]
      %v278 = vld [vmem:[%s227 + $0x74] sm:$0xf]
      %v279 = vld [vmem:[%s227 + $0x78] sm:$0xf]
      %v280 = vld [vmem:[%s227 + $0x7c] sm:$0xf]
      %v281 = vld [vmem:[%s227 + $0x80] sm:$0xf]
      %v282 = vld [vmem:[%s227 + $0x84] sm:$0xf]
      %v283 = vld [vmem:[%s227 + $0x88] sm:$0xf]
      %v284 = vld [vmem:[%s227 + $0x8c] sm:$0xf]
      %v285 = vld [vmem:[%s2] sm:$0xff]
      %v286 = vld [vmem:[%s2 + $0x8] sm:$0xff]
      %v287 = vld [vmem:[%s2 + $0x10] sm:$0xff]
      %v288 = vld [vmem:[%s2 + $0x18] sm:$0xff]
      %v289 = vld [vmem:[%s2 + $0x20] sm:$0xff]
      %v290 = vld [vmem:[%s2 + $0x28] sm:$0xff]
      %v291 = vld [vmem:[%s2 + $0x30] sm:$0xff]
      %v292 = vld [vmem:[%s2 + $0x38] sm:$0xff]
      %294 = vset.pattern.permute.xlu0 0
      %295 = vperm.xlu0 %294, %v285
      %v296 = vpop.permute.xlu0 %295
      %299 = vset.pattern.permute.xlu0 0
      %300 = vperm.xlu0 %299, %v286
      %v301 = vpop.permute.xlu0 %300
      %304 = vset.pattern.permute.xlu0 0
      %305 = vperm.xlu0 %304, %v287
      %v306 = vpop.permute.xlu0 %305
      %309 = vset.pattern.permute.xlu0 0
      %310 = vperm.xlu0 %309, %v288
      %v311 = vpop.permute.xlu0 %310
      %314 = vset.pattern.permute.xlu0 0
      %315 = vperm.xlu0 %314, %v289
      %v316 = vpop.permute.xlu0 %315
      %319 = vset.pattern.permute.xlu0 0
      %320 = vperm.xlu0 %319, %v290
      %v321 = vpop.permute.xlu0 %320
      %324 = vset.pattern.permute.xlu0 0
      %325 = vperm.xlu0 %324, %v291
      %v326 = vpop.permute.xlu0 %325
      %329 = vset.pattern.permute.xlu0 0
      %330 = vperm.xlu0 %329, %v292
      %v331 = vpop.permute.xlu0 %330
      %v349 = vunpack.c.l.b16 %v233
      %v350 = vunpack.c.h.b16 %v233
      %v351 = vunpack.c.l.b16 %v234
      %v352 = vunpack.c.l.b16 %v235
      %v353 = vunpack.c.h.b16 %v235
      %v354 = vunpack.c.l.b16 %v236
      %v355 = vunpack.c.l.b16 %v237
      %v356 = vunpack.c.h.b16 %v237
      %v357 = vunpack.c.l.b16 %v238
      %v358 = vunpack.c.l.b16 %v239
      %v359 = vunpack.c.h.b16 %v239
      %v360 = vunpack.c.l.b16 %v240
      %v361 = vunpack.c.l.b16 %v241
      %v362 = vunpack.c.h.b16 %v241
      %v363 = vunpack.c.l.b16 %v242
      %v364 = vunpack.c.l.b16 %v243
      %v365 = vunpack.c.h.b16 %v243
      %v366 = vunpack.c.l.b16 %v244
      %v367 = vunpack.c.l.b16 %v245
      %v368 = vunpack.c.h.b16 %v245
      %v369 = vunpack.c.l.b16 %v246
      %v370 = vunpack.c.l.b16 %v247
      %v371 = vunpack.c.h.b16 %v247
      %v372 = vunpack.c.l.b16 %v248
      %v373 = vpack.c.b16 %v352, %v349
      %v374 = vpack.c.b16 %v353, %v350
      %v375 = vpack.c.b16 %v354, %v351
      %v376 = vpack.c.b16 %v358, %v355
      %v377 = vpack.c.b16 %v359, %v356
      %v378 = vpack.c.b16 %v360, %v357
      %v379 = vpack.c.b16 %v364, %v361
      %v380 = vpack.c.b16 %v365, %v362
      %v381 = vpack.c.b16 %v366, %v363
      %v382 = vpack.c.b16 %v370, %v367
      %v383 = vpack.c.b16 %v371, %v368
      %v384 = vpack.c.b16 %v372, %v369
      %v429 = vunpack.c.l.b16 %v249
      %v430 = vunpack.c.l.b16 %v250
      %v431 = vunpack.c.l.b16 %v251
      %v432 = vunpack.c.l.b16 %v252
      %v433 = vunpack.c.l.b16 %v253
      %v434 = vunpack.c.l.b16 %v254
      %v435 = vunpack.c.l.b16 %v255
      %v436 = vunpack.c.l.b16 %v256
      %v437 = vunpack.c.l.b16 %v257
      %v438 = vunpack.c.l.b16 %v258
      %v439 = vunpack.c.l.b16 %v259
      %v440 = vunpack.c.l.b16 %v260
      %v441 = vunpack.c.l.b16 %v261
      %v442 = vunpack.c.l.b16 %v262
      %v443 = vunpack.c.l.b16 %v263
      %v444 = vunpack.c.l.b16 %v264
      %v445 = vunpack.c.l.b16 %v265
      %v446 = vunpack.c.l.b16 %v266
      %v447 = vunpack.c.l.b16 %v267
      %v448 = vunpack.c.l.b16 %v268
      %v449 = vunpack.c.l.b16 %v269
      %v450 = vunpack.c.l.b16 %v270
      %v451 = vunpack.c.l.b16 %v271
      %v452 = vunpack.c.l.b16 %v272
      %v453 = vunpack.c.l.b16 %v273
      %v454 = vunpack.c.l.b16 %v274
      %v455 = vunpack.c.l.b16 %v275
      %v456 = vunpack.c.l.b16 %v276
      %v457 = vunpack.c.l.b16 %v277
      %v458 = vunpack.c.l.b16 %v278
      %v459 = vunpack.c.l.b16 %v279
      %v460 = vunpack.c.l.b16 %v280
      %v461 = vunpack.c.l.b16 %v281
      %v462 = vunpack.c.l.b16 %v282
      %v463 = vunpack.c.l.b16 %v283
      %v464 = vunpack.c.l.b16 %v284
      %v465 = vpack.c.b16 %v430, %v429
      %v466 = vpack.c.b16 %v432, %v431
      %v467 = vpack.c.b16 %v434, %v433
      %v468 = vpack.c.b16 %v436, %v435
      %v469 = vpack.c.b16 %v438, %v437
      %v470 = vpack.c.b16 %v440, %v439
      %v471 = vpack.c.b16 %v442, %v441
      %v472 = vpack.c.b16 %v444, %v443
      %v473 = vpack.c.b16 %v446, %v445
      %v474 = vpack.c.b16 %v448, %v447
      %v475 = vpack.c.b16 %v450, %v449
      %v476 = vpack.c.b16 %v452, %v451
      %v477 = vpack.c.b16 %v454, %v453
      %v478 = vpack.c.b16 %v456, %v455
      %v479 = vpack.c.b16 %v458, %v457
      %v480 = vpack.c.b16 %v460, %v459
      %v481 = vpack.c.b16 %v462, %v461
      %v482 = vpack.c.b16 %v464, %v463
      %vm501 = vcmask 261120
      %v503 = vsel %vm501, %v375, 0
      %v506 = vsel %vm501, %v378, 0
      %v509 = vsel %vm501, %v381, 0
      %v512 = vsel %vm501, %v384, 0
      %514 = vmatprep.subr.bf16.mxu0 0
      %515 = vmatpush1.bf16.msra.mxu0 %v465
      %516 = vmatprep.subr.bf16.mxu0 0
      %517 = vmatpush1.bf16.msra.mxu0 %v466
      %518 = vmatprep.subr.bf16.mxu0 0
      %519 = vmatpush1.bf16.msra.mxu0 %v467
      %520 = vmatprep.subr.bf16.mxu0 0
      %521 = vmatpush1.bf16.msra.mxu0 %v468
      %522 = vmatprep.subr.bf16.mxu0 0
      %523 = vmatpush1.bf16.msra.mxu0 %v469
      %524 = vmatprep.subr.bf16.mxu0 0
      %525 = vmatpush1.bf16.msra.mxu0 %v470
      %526 = vmatprep.subr.bf16.mxu0 0
      %527 = vmatpush1.bf16.msra.mxu0 %v471
      %528 = vmatprep.subr.bf16.mxu0 0
      %529 = vmatpush1.bf16.msra.mxu0 %v472
      %530 = vmatprep.subr.bf16.mxu0 0
      %531 = vmatpush1.bf16.msra.mxu0 %v473
      %532 = vmatprep.subr.bf16.mxu0 0
      %533 = vmatpush1.bf16.msra.mxu0 %v474
      %534 = vmatprep.subr.bf16.mxu0 0
      %535 = vmatpush1.bf16.msra.mxu0 %v475
      %536 = vmatprep.subr.bf16.mxu0 0
      %537 = vmatpush1.bf16.msra.mxu0 %v476
      %538 = vmatprep.subr.bf16.mxu0 0
      %539 = vmatpush1.bf16.msra.mxu0 %v477
      %540 = vmatprep.subr.bf16.mxu0 0
      %541 = vmatpush1.bf16.msra.mxu0 %v478
      %542 = vmatprep.subr.bf16.mxu0 0
      %543 = vmatpush1.bf16.msra.mxu0 %v479
      %544 = vmatprep.subr.bf16.mxu0 0
      %545 = vmatpush1.bf16.msra.mxu0 %v480
      %546 = vmatprep.mubr.bf16.mxu0 %v374
      %547 = vmatmul.mubr.bf16.gmra.mrb[0].mxu0 %v373
      %v548 = vpop.f32.mrb[0].mxu0
      %v549 = vadd.f32 %v296, %v548
      %v550 = vpop.f32.mrb[0].mxu0
      %v551 = vpop.f32.mrb[0].mxu0
      %v552 = vadd.f32 %v301, %v551
      %v553 = vpop.f32.mrb[0].mxu0
      %554 = vmatprep.mubr.bf16.mxu0 %v377
      %555 = vmatmul.mubr.bf16.gmra.mrb[0].mxu0 %v376
      %v556 = vpop.f32.mrb[0].mxu0
      %v557 = vadd.f32 %v306, %v556
      %v558 = vpop.f32.mrb[0].mxu0
      %v559 = vpop.f32.mrb[0].mxu0
      %v560 = vadd.f32 %v311, %v559
      %v561 = vpop.f32.mrb[0].mxu0
      %562 = vmatprep.mubr.bf16.mxu0 %v380
      %563 = vmatmul.mubr.bf16.gmra.mrb[0].mxu0 %v379
      %v564 = vpop.f32.mrb[0].mxu0
      %v565 = vadd.f32 %v316, %v564
      %v566 = vpop.f32.mrb[0].mxu0
      %v567 = vpop.f32.mrb[0].mxu0
      %v568 = vadd.f32 %v321, %v567
      %v569 = vpop.f32.mrb[0].mxu0
      %570 = vmatprep.mubr.bf16.mxu0 %v383
      %571 = vmatmul.mubr.bf16.gmra.mrb[0].mxu0 %v382
      %v572 = vpop.f32.mrb[0].mxu0
      %v573 = vadd.f32 %v326, %v572
      %v574 = vpop.f32.mrb[0].mxu0
      %v575 = vpop.f32.mrb[0].mxu0
      %v576 = vadd.f32 %v331, %v575
      %v577 = vpop.f32.mrb[0].mxu0
      %578 = vdwg.mxu0
      %579 = vmatprep.subr.bf16.mxu0 0
      %580 = vmatpush1.bf16.msra.mxu0 %v481
      %581 = vmatprep.subr.bf16.mxu0 0
      %582 = vmatpush1.bf16.msra.mxu0 %v482
      %583 = vmatprep.subr.bf16.mxu0 0
      %584 = vmatpush1.bf16.msra.mxu0 0
      %585 = vmatprep.subr.bf16.mxu0 0
      %586 = vmatpush1.bf16.msra.mxu0 0
      %587 = vmatprep.subr.bf16.mxu0 0
      %588 = vmatpush1.bf16.msra.mxu0 0
      %589 = vmatprep.subr.bf16.mxu0 0
      %590 = vmatpush1.bf16.msra.mxu0 0
      %591 = vmatprep.subr.bf16.mxu0 0
      %592 = vmatpush1.bf16.msra.mxu0 0
      %593 = vmatprep.subr.bf16.mxu0 0
      %594 = vmatpush1.bf16.msra.mxu0 0
      %595 = vmatprep.subr.bf16.mxu0 0
      %596 = vmatpush1.bf16.msra.mxu0 0
      %597 = vmatprep.subr.bf16.mxu0 0
      %598 = vmatpush1.bf16.msra.mxu0 0
      %599 = vmatprep.subr.bf16.mxu0 0
      %600 = vmatpush1.bf16.msra.mxu0 0
      %601 = vmatprep.subr.bf16.mxu0 0
      %602 = vmatpush1.bf16.msra.mxu0 0
      %603 = vmatprep.subr.bf16.mxu0 0
      %604 = vmatpush1.bf16.msra.mxu0 0
      %605 = vmatprep.subr.bf16.mxu0 0
      %606 = vmatpush1.bf16.msra.mxu0 0
      %607 = vmatprep.subr.bf16.mxu0 0
      %608 = vmatpush1.bf16.msra.mxu0 0
      %609 = vmatprep.subr.bf16.mxu0 0
      %610 = vmatpush1.bf16.msra.mxu0 0
      %611 = vmatprep.mubr.bf16.mxu0 0
      %612 = vmatmul.mubr.bf16.gmra.mrb[0].mxu0 %v503
      %v613 = vpop.f32.mrb[0].mxu0
      %v614 = vadd.f32 %v549, %v613
      %v615 = vpop.f32.mrb[0].mxu0
      %v616 = vpop.f32.mrb[0].mxu0
      %v617 = vadd.f32 %v552, %v616
      %v618 = vpop.f32.mrb[0].mxu0
      %619 = vmatprep.mubr.bf16.mxu0 0
      %620 = vmatmul.mubr.bf16.gmra.mrb[0].mxu0 %v506
      %v621 = vpop.f32.mrb[0].mxu0
      %v622 = vadd.f32 %v557, %v621
      %v623 = vpop.f32.mrb[0].mxu0
      %v624 = vpop.f32.mrb[0].mxu0
      %v625 = vadd.f32 %v560, %v624
      %v626 = vpop.f32.mrb[0].mxu0
      %627 = vmatprep.mubr.bf16.mxu0 0
      %628 = vmatmul.mubr.bf16.gmra.mrb[0].mxu0 %v509
      %v629 = vpop.f32.mrb[0].mxu0
      %v630 = vadd.f32 %v565, %v629
      %v631 = vpop.f32.mrb[0].mxu0
      %v632 = vpop.f32.mrb[0].mxu0
      %v633 = vadd.f32 %v568, %v632
      %v634 = vpop.f32.mrb[0].mxu0
      %635 = vmatprep.mubr.bf16.mxu0 0
      %636 = vmatmul.mubr.bf16.gmra.mrb[0].mxu0 %v512
      %v637 = vpop.f32.mrb[0].mxu0
      %v638 = vadd.f32 %v573, %v637
      %v639 = vpop.f32.mrb[0].mxu0
      %v640 = vpop.f32.mrb[0].mxu0
      %v641 = vadd.f32 %v576, %v640
      %v642 = vpop.f32.mrb[0].mxu0
      %643 = vdwg.mxu0
      %p644 = scmp.eq.s32.totalorder %s20, 0
      // Predicated region
      $region41: #{generator_forward.7} parent=39 // pred_check
        %p645 = pneg %p644
      $region42: #{generator_forward.7} parent=39 // pred_check_branch
        %647 = sbr.rel (%p645) target = $region44
      $region43: #{generator_forward.7} parent=39 // pred_region
        %p648 = scmp.eq.s32.totalorder %s21, 0
        // Predicated region
        $region45: #{generator_forward.7} parent=43 // pred_check
          %p649 = pneg %p648
        $region46: #{generator_forward.7} parent=43 // pred_check_branch
          %651 = sbr.rel (%p649) target = $region48
        $region47: #{generator_forward.7} parent=43 // pred_region
          %vm652 = vcmask 7168
          %653 = vst.msk [vmem:[#allocation2] sm:$0xff] %vm652, 0.0
          %654 = vst.msk [vmem:[#allocation2 + $0x8] sm:$0xff] %vm652, 0.0
          %655 = vst.msk [vmem:[#allocation3] sm:$0xff] %vm652, 0.0
          %656 = vst.msk [vmem:[#allocation3 + $0x8] sm:$0xff] %vm652, 0.0
        $region48: #{generator_forward.7} parent=43 // pred_fallthru
          _
        %v657 = vsel %vm501, %v614, 0.0
        %658 = vadd.xlane.f32.xlu0 %v657
        %v659 = vpop.xlane.xlu0 %658
        %v660 = vsel %vm501, %v617, 0.0
        %661 = vadd.xlane.f32.xlu0 %v660
        %v662 = vpop.xlane.xlu0 %661
        %v663 = vsel %vm501, %v622, 0.0
        %664 = vadd.xlane.f32.xlu0 %v663
        %v665 = vpop.xlane.xlu0 %664
        %v666 = vsel %vm501, %v625, 0.0
        %667 = vadd.xlane.f32.xlu0 %v666
        %v668 = vpop.xlane.xlu0 %667
        %v669 = vsel %vm501, %v630, 0.0
        %670 = vadd.xlane.f32.xlu0 %v669
        %v671 = vpop.xlane.xlu0 %670
        %v672 = vsel %vm501, %v633, 0.0
        %673 = vadd.xlane.f32.xlu0 %v672
        %v674 = vpop.xlane.xlu0 %673
        %v675 = vsel %vm501, %v638, 0.0
        %676 = vadd.xlane.f32.xlu0 %v675
        %v677 = vpop.xlane.xlu0 %676
        %v678 = vsel %vm501, %v641, 0.0
        %679 = vadd.xlane.f32.xlu0 %v678
        %v680 = vpop.xlane.xlu0 %679
        %v681 = vmul.f32 %v614, %v614
        %v682 = vmul.f32 %v617, %v617
        %v683 = vmul.f32 %v622, %v622
        %v684 = vmul.f32 %v625, %v625
        %v685 = vmul.f32 %v630, %v630
        %v686 = vmul.f32 %v633, %v633
        %v687 = vmul.f32 %v638, %v638
        %v688 = vmul.f32 %v641, %v641
        %v689 = vsel %vm501, %v681, 0.0
        %690 = vadd.xlane.f32.xlu0 %v689
        %v691 = vpop.xlane.xlu0 %690
        %v692 = vsel %vm501, %v682, 0.0
        %693 = vadd.xlane.f32.xlu0 %v692
        %v694 = vpop.xlane.xlu0 %693
        %v695 = vsel %vm501, %v683, 0.0
        %696 = vadd.xlane.f32.xlu0 %v695
        %v697 = vpop.xlane.xlu0 %696
        %v698 = vsel %vm501, %v684, 0.0
        %699 = vadd.xlane.f32.xlu0 %v698
        %v700 = vpop.xlane.xlu0 %699
        %v701 = vsel %vm501, %v685, 0.0
        %702 = vadd.xlane.f32.xlu0 %v701
        %v703 = vpop.xlane.xlu0 %702
        %v704 = vsel %vm501, %v686, 0.0
        %705 = vadd.xlane.f32.xlu0 %v704
        %v706 = vpop.xlane.xlu0 %705
        %v707 = vsel %vm501, %v687, 0.0
        %708 = vadd.xlane.f32.xlu0 %v707
        %v709 = vpop.xlane.xlu0 %708
        %v710 = vsel %vm501, %v688, 0.0
        %711 = vadd.xlane.f32.xlu0 %v710
        %v712 = vpop.xlane.xlu0 %711
        %v713 = vld [vmem:[#allocation2] sm:$0xff]
        %v714 = vld [vmem:[#allocation2 + $0x8] sm:$0xff]
        %v715 = vadd.f32 %v659, %v665
        %v716 = vadd.f32 %v662, %v668
        %v717 = vadd.f32 %v715, %v671
        %v718 = vadd.f32 %v716, %v674
        %v719 = vadd.f32 %v717, %v677
        %v720 = vadd.f32 %v718, %v680
        %v721 = vadd.f32 %v713, %v719
        %v722 = vadd.f32 %v714, %v720
        %vm723 = vcmask 7168
        %724 = vst.msk [vmem:[#allocation2] sm:$0xff] %vm723, %v721
        %725 = vst.msk [vmem:[#allocation2 + $0x8] sm:$0xff] %vm723, %v722
        %v726 = vld [vmem:[#allocation3] sm:$0xff]
        %v727 = vld [vmem:[#allocation3 + $0x8] sm:$0xff]
        %v728 = vadd.f32 %v691, %v697
        %v729 = vadd.f32 %v694, %v700
        %v730 = vadd.f32 %v728, %v703
        %v731 = vadd.f32 %v729, %v706
        %v732 = vadd.f32 %v730, %v709
        %v733 = vadd.f32 %v731, %v712
        %v734 = vadd.f32 %v726, %v732
        %v735 = vadd.f32 %v727, %v733
        %736 = vst.msk [vmem:[#allocation3] sm:$0xff] %vm723, %v734
        %737 = vst.msk [vmem:[#allocation3 + $0x8] sm:$0xff] %vm723, %v735
        // Predicated region
        $region49: #{generator_forward.7} parent=43 // pred_check
          %p738 = pneg %p648
        $region50: #{generator_forward.7} parent=43 // pred_check_branch
          %740 = sbr.rel (%p738) target = $region52
        $region51: #{generator_forward.7} parent=43 // pred_region
          %v741 = vld [vmem:[#allocation2] sm:$0xff]
          %v742 = vld [vmem:[#allocation2 + $0x8] sm:$0xff]
          %v743 = vmul.f32 %v741, 0.0078125
          %v744 = vmul.f32 %v742, 0.0078125
          %v745 = vld [vmem:[#allocation3] sm:$0xff]
          %v746 = vld [vmem:[#allocation3 + $0x8] sm:$0xff]
          %v747 = vmul.f32 %v745, 0.0078125
          %v748 = vmul.f32 %v746, 0.0078125
          %v749 = vmul.f32 %v743, %v743
          %v750 = vmul.f32 %v744, %v744
          %v751 = vsub.f32 %v747, %v749
          %v752 = vsub.f32 %v748, %v750
          %v753 = vmax.f32 %v751, 0.0
          %v754 = vmax.f32 %v752, 0.0
          %v755 = vadd.f32 %v753, 1e-05
          %v756 = vadd.f32 %v754, 1e-05
          %v757 = vrsqrt.pop %v755
          %v758 = vrsqrt.pop %v756
          %v759 = vld [vmem:[%s3] sm:$0xff]
          %v760 = vld [vmem:[%s3 + $0x8] sm:$0xff]
          %v761 = vmul.f32 %v757, %v759
          %v762 = vmul.f32 %v758, %v760
          %v763 = vld [vmem:[%s4] sm:$0xff]
          %v764 = vld [vmem:[%s4 + $0x8] sm:$0xff]
          %v765 = vmul.f32 %v743, %v761
          %v766 = vmul.f32 %v744, %v762
          %v767 = vsub.f32 %v763, %v765
          %v768 = vsub.f32 %v764, %v766
          %769 = vst.msk [vmem:[#allocation4] sm:$0xff] %vm723, %v761
          %770 = vst.msk [vmem:[#allocation4 + $0x8] sm:$0xff] %vm723, %v762
          %771 = vst.msk [vmem:[#allocation4 + $0x10] sm:$0xff] %vm723, %v761
          %772 = vst.msk [vmem:[#allocation4 + $0x18] sm:$0xff] %vm723, %v762
          %773 = vst.msk [vmem:[#allocation4 + $0x20] sm:$0xff] %vm723, %v761
          %774 = vst.msk [vmem:[#allocation4 + $0x28] sm:$0xff] %vm723, %v762
          %775 = vst.msk [vmem:[#allocation4 + $0x30] sm:$0xff] %vm723, %v761
          %776 = vst.msk [vmem:[#allocation4 + $0x38] sm:$0xff] %vm723, %v762
          %777 = vst.msk [vmem:[#allocation5] sm:$0xff] %vm723, %v767
          %778 = vst.msk [vmem:[#allocation5 + $0x8] sm:$0xff] %vm723, %v768
          %779 = vst.msk [vmem:[#allocation5 + $0x10] sm:$0xff] %vm723, %v767
          %780 = vst.msk [vmem:[#allocation5 + $0x18] sm:$0xff] %vm723, %v768
          %781 = vst.msk [vmem:[#allocation5 + $0x20] sm:$0xff] %vm723, %v767
          %782 = vst.msk [vmem:[#allocation5 + $0x28] sm:$0xff] %vm723, %v768
          %783 = vst.msk [vmem:[#allocation5 + $0x30] sm:$0xff] %vm723, %v767
          %784 = vst.msk [vmem:[#allocation5 + $0x38] sm:$0xff] %vm723, %v768
        $region52: #{generator_forward.7} parent=43 // pred_fallthru
          _
      $region44: #{generator_forward.7} parent=39 // pred_fallthru
        _
      %p785 = scmp.eq.s32.totalorder %s20, 1
      // Predicated region
      $region53: #{generator_forward.7} parent=39 // pred_check
        %p786 = pneg %p785
      $region54: #{generator_forward.7} parent=39 // pred_check_branch
        %788 = sbr.rel (%p786) target = $region56
      $region55: #{generator_forward.7} parent=39 // pred_region
        %v789 = vld [vmem:[#allocation4] sm:$0xff]
        %v790 = vld [vmem:[#allocation4 + $0x8] sm:$0xff]
        %v791 = vld [vmem:[#allocation4 + $0x10] sm:$0xff]
        %v792 = vld [vmem:[#allocation4 + $0x18] sm:$0xff]
        %v793 = vld [vmem:[#allocation4 + $0x20] sm:$0xff]
        %v794 = vld [vmem:[#allocation4 + $0x28] sm:$0xff]
        %v795 = vld [vmem:[#allocation4 + $0x30] sm:$0xff]
        %v796 = vld [vmem:[#allocation4 + $0x38] sm:$0xff]
        %798 = vset.pattern.permute.xlu0 0
        %799 = vperm.xlu0 %798, %v789
        %v800 = vpop.permute.xlu0 %799
        %803 = vset.pattern.permute.xlu0 0
        %804 = vperm.xlu0 %803, %v790
        %v805 = vpop.permute.xlu0 %804
        %808 = vset.pattern.permute.xlu0 0
        %809 = vperm.xlu0 %808, %v791
        %v810 = vpop.permute.xlu0 %809
        %813 = vset.pattern.permute.xlu0 0
        %814 = vperm.xlu0 %813, %v792
        %v815 = vpop.permute.xlu0 %814
        %818 = vset.pattern.permute.xlu0 0
        %819 = vperm.xlu0 %818, %v793
        %v820 = vpop.permute.xlu0 %819
        %823 = vset.pattern.permute.xlu0 0
        %824 = vperm.xlu0 %823, %v794
        %v825 = vpop.permute.xlu0 %824
        %828 = vset.pattern.permute.xlu0 0
        %829 = vperm.xlu0 %828, %v795
        %v830 = vpop.permute.xlu0 %829
        %833 = vset.pattern.permute.xlu0 0
        %834 = vperm.xlu0 %833, %v796
        %v835 = vpop.permute.xlu0 %834
        %v837 = vmul.f32 %v614, %v800
        %v838 = vmul.f32 %v617, %v805
        %v839 = vmul.f32 %v622, %v810
        %v840 = vmul.f32 %v625, %v815
        %v841 = vmul.f32 %v630, %v820
        %v842 = vmul.f32 %v633, %v825
        %v843 = vmul.f32 %v638, %v830
        %v844 = vmul.f32 %v641, %v835
        %v845 = vld [vmem:[#allocation5] sm:$0xff]
        %v846 = vld [vmem:[#allocation5 + $0x8] sm:$0xff]
        %v847 = vld [vmem:[#allocation5 + $0x10] sm:$0xff]
        %v848 = vld [vmem:[#allocation5 + $0x18] sm:$0xff]
        %v849 = vld [vmem:[#allocation5 + $0x20] sm:$0xff]
        %v850 = vld [vmem:[#allocation5 + $0x28] sm:$0xff]
        %v851 = vld [vmem:[#allocation5 + $0x30] sm:$0xff]
        %v852 = vld [vmem:[#allocation5 + $0x38] sm:$0xff]
        %854 = vset.pattern.permute.xlu0 0
        %855 = vperm.xlu0 %854, %v845
        %v856 = vpop.permute.xlu0 %855
        %859 = vset.pattern.permute.xlu0 0
        %860 = vperm.xlu0 %859, %v846
        %v861 = vpop.permute.xlu0 %860
        %864 = vset.pattern.permute.xlu0 0
        %865 = vperm.xlu0 %864, %v847
        %v866 = vpop.permute.xlu0 %865
        %869 = vset.pattern.permute.xlu0 0
        %870 = vperm.xlu0 %869, %v848
        %v871 = vpop.permute.xlu0 %870
        %874 = vset.pattern.permute.xlu0 0
        %875 = vperm.xlu0 %874, %v849
        %v876 = vpop.permute.xlu0 %875
        %879 = vset.pattern.permute.xlu0 0
        %880 = vperm.xlu0 %879, %v850
        %v881 = vpop.permute.xlu0 %880
        %884 = vset.pattern.permute.xlu0 0
        %885 = vperm.xlu0 %884, %v851
        %v886 = vpop.permute.xlu0 %885
        %889 = vset.pattern.permute.xlu0 0
        %890 = vperm.xlu0 %889, %v852
        %v891 = vpop.permute.xlu0 %890
        %v893 = vadd.f32 %v837, %v856
        %v894 = vadd.f32 %v838, %v861
        %v895 = vadd.f32 %v839, %v866
        %v896 = vadd.f32 %v840, %v871
        %v897 = vadd.f32 %v841, %v876
        %v898 = vadd.f32 %v842, %v881
        %v899 = vadd.f32 %v843, %v886
        %v900 = vadd.f32 %v844, %v891
        %vm901 = vcmp.gt.f32.partialorder %v893, 0.0
        %vm902 = vcmp.gt.f32.partialorder %v894, 0.0
        %vm903 = vcmp.gt.f32.partialorder %v895, 0.0
        %vm904 = vcmp.gt.f32.partialorder %v896, 0.0
        %vm905 = vcmp.gt.f32.partialorder %v897, 0.0
        %vm906 = vcmp.gt.f32.partialorder %v898, 0.0
        %vm907 = vcmp.gt.f32.partialorder %v899, 0.0
        %vm908 = vcmp.gt.f32.partialorder %v900, 0.0
        %v909 = vmul.f32 %v893, 0.2
        %v910 = vmul.f32 %v894, 0.2
        %v911 = vmul.f32 %v895, 0.2
        %v912 = vmul.f32 %v896, 0.2
        %v913 = vmul.f32 %v897, 0.2
        %v914 = vmul.f32 %v898, 0.2
        %v915 = vmul.f32 %v899, 0.2
        %v916 = vmul.f32 %v900, 0.2
        %v917 = vsel %vm901, %v893, %v909
        %v918 = vsel %vm902, %v894, %v910
        %v919 = vsel %vm903, %v895, %v911
        %v920 = vsel %vm904, %v896, %v912
        %v921 = vsel %vm905, %v897, %v913
        %v922 = vsel %vm906, %v898, %v914
        %v923 = vsel %vm907, %v899, %v915
        %v924 = vsel %vm908, %v900, %v916
        %v925 = vpack.c.bf16 %v918, %v917
        %v926 = vpack.c.bf16 %v920, %v919
        %v927 = vpack.c.bf16 %v922, %v921
        %v928 = vpack.c.bf16 %v924, %v923
        %v933 = vunpack.c.l.b16 %v925
        %v934 = vunpack.c.h.b16 %v925
        %v935 = vunpack.c.l.b16 %v926
        %v936 = vunpack.c.h.b16 %v926
        %v937 = vunpack.c.l.b16 %v927
        %v938 = vunpack.c.h.b16 %v927
        %v939 = vunpack.c.l.b16 %v928
        %v940 = vunpack.c.h.b16 %v928
        %v941 = vpack.c.b16 %v933, %v933
        %v942 = vpack.c.b16 %v934, %v934
        %v943 = vpack.c.b16 %v935, %v935
        %v944 = vpack.c.b16 %v936, %v936
        %v945 = vpack.c.b16 %v937, %v937
        %v946 = vpack.c.b16 %v938, %v938
        %v947 = vpack.c.b16 %v939, %v939
        %v948 = vpack.c.b16 %v940, %v940
        %vm957 = vcmask 257024
        %958 = vst.msk [vmem:[%s231] sm:$0xf] %vm957, %v941
        %959 = vst.msk [vmem:[%s231 + $0x4] sm:$0xf] %vm957, %v942
        %960 = vst.msk [vmem:[%s231 + $0x8] sm:$0xf] %vm957, %v943
        %961 = vst.msk [vmem:[%s231 + $0xc] sm:$0xf] %vm957, %v944
        %962 = vst.msk [vmem:[%s231 + $0x10] sm:$0xf] %vm957, %v945
        %963 = vst.msk [vmem:[%s231 + $0x14] sm:$0xf] %vm957, %v946
        %964 = vst.msk [vmem:[%s231 + $0x18] sm:$0xf] %vm957, %v947
        %965 = vst.msk [vmem:[%s231 + $0x1c] sm:$0xf] %vm957, %v948
      $region56: #{generator_forward.7} parent=39 // pred_fallthru
        _
      %p966 = scmp.lt.s32.totalorder %s21, 0
      %s967 = scalar_select %p966, %s21, 0
      %s968 = smul.addr %s967, 4
      %s969 = scalar_lea.vmem %s5, %s968
      // Predicated region
      $region57: #{generator_forward.7} parent=39 // pred_check
        %p970 = pneg %p156
      $region58: #{generator_forward.7} parent=39 // pred_check_branch
        %972 = sbr.rel (%p970) target = $region60
      $region59: #{generator_forward.7} parent=39 // pred_region
        _
      $region60: #{generator_forward.7} parent=39 // pred_fallthru
        _
      // Predicated region
      $region61: #{generator_forward.7} parent=39 // pred_check
        %p973 = pneg %p156
      $region62: #{generator_forward.7} parent=39 // pred_check_branch
        %975 = sbr.rel (%p973) target = $region64
      $region63: #{generator_forward.7} parent=39 // pred_region
        %p976 = scmp.lt.s32.totalorder %s21, 0
        %s977 = scalar_select %p976, %s21, 0
        %s978 = smul.addr %s977, 4
        %s979 = scalar_lea.vmem %s5, %s978
      $region64: #{generator_forward.7} parent=39 // pred_fallthru
        _
    $region40: #{generator_forward.7} parent=5 // pred_fallthru
      _
    %p980 = scmp.le.s32.totalorder 2, %s11
    // Predicated region
    $region65: #{generator_forward.7} parent=5 // pred_check
      %p981 = pneg %p980
    $region66: #{generator_forward.7} parent=5 // pred_check_branch
      %983 = sbr.rel (%p981) target = $region68
    $region67: #{generator_forward.7} parent=5 // pred_region
      %s984 = ssub.s32 %s11, 2
    $region68: #{generator_forward.7} parent=5 // pred_fallthru
      _
  $region6: #{generator_forward.7} parent=0 // loop_footer
    %s15 = sadd.s32 1, %s11
  $region7: #{generator_forward.7} parent=0 // loop_footer_branch
    %10 = sbr.rel target = $region3
  $region8: #{generator_forward.7} parent=0 // loop_exit
    _

// kernel: generator_forward.6
$region0: #{generator_forward.6}
  #allocation0 [shape = 'u32[]', space=smem, size = 0x4, offset = 0x4, fixed_abs, tag = 'smem constant byte address 0x4 - core index']
  #allocation1 [shape = 'u32[144,128]{1,0:T(1,128)}', space=vmem, size = 0x12000, scoped, tag = 'internal scratch']
  #allocation2 [shape = 'f32[32,1]{1,0:T(8,128)}', space=vmem, size = 0x4000, scoped, tag = 'scratch operand']
  #allocation3 [shape = 'f32[32,1]{1,0:T(8,128)}', space=vmem, size = 0x4000, scoped, tag = 'scratch operand']
  #allocation4 [shape = 'f32[128,1]{1,0:T(8,128)}', space=vmem, size = 0x10000, scoped, tag = 'scratch operand']
  #allocation5 [shape = 'f32[128,1]{1,0:T(8,128)}', space=vmem, size = 0x10000, scoped, tag = 'scratch operand']
  %s0 = inlined_call_operand.vmem [shape: bf16[576,8], index: 0, kind: input, shape index: {}]
  %s1 = inlined_call_operand.vmem [shape: bf16[128,576], index: 1, kind: input, shape index: {}]
  %s2 = inlined_call_operand.vmem [shape: f32[128,1], index: 2, kind: input, shape index: {}]
  %s3 = inlined_call_operand.vmem [shape: f32[32,1], index: 3, kind: input, shape index: {}]
  %s4 = inlined_call_operand.vmem [shape: f32[32,1], index: 4, kind: input, shape index: {}]
  %s5 = inlined_call_operand.vmem [shape: bf16[128,8], index: 5, kind: output, shape index: {}]
  %s6 = sld [smem:[#allocation0]]
  $region69: #{generator_forward.6} parent=0
    _
  %s8 = ssub.s32 1, %s6
  %s9 = scalar_select 0, %s8, %s6
  loop: start=0, step=1, limit=4
  $region2: #{generator_forward.6} parent=0 // loop_pre_header
    _
  $region3: #{generator_forward.6} parent=0 // loop_header
    %s11 = sphi 0, %s15
    %p12 = scmp.ge.s32.totalorder %s11, 4
    %s18 = sphi 0, %s30
    %s19 = sphi 0, %s26
    %s20 = sphi 0, %s18
    %s21 = sphi 0, %s19
    %s22 = sphi 0, %s20
    %s23 = sphi 0, %s21
    %s33 = sphi 0, %s35
    %s36 = sphi 0, %s33
    %s37 = sphi 0, %s36
    %s53 = sphi 0, %s37
    %s57 = sphi 0, %s57
    %s59 = sphi 0, %s57
    %s60 = sphi 0, %s59
    %s74 = sphi 0, %s60
    %s78 = sphi 0, %s78
    %s80 = sphi 0, %s78
    %s81 = sphi 0, %s80
    %s95 = sphi 0, %s81
    %s99 = sphi 0, %s99
    %s101 = sphi 0, %s99
    %s102 = sphi 0, %s101
    %s116 = sphi 0, %s102
    %s120 = sphi 0, %s120
    %s122 = sphi 0, %s120
    %s123 = sphi 0, %s122
    %s137 = sphi 0, %s123
    %s143 = sphi 0, %s145
    %s146 = sphi 0, %s143
    %s147 = sphi 0, %s146
    %s163 = sphi 0, %s147
  $region4: #{generator_forward.6} parent=0 // loop_header_branch
    %14 = sbr.rel (%p12) target = $region8
  $region5: #{generator_forward.6} parent=0 // loop_body
    %s16 = ssub.s32 %s11, 1
    %s17 = ssub.s32 %s11, 2
    %s24 = sadd.s32 1, %s19
    %p25 = scmp.ge.s32.totalorder %s24, 1
    %s26 = scalar_select %p25, 0, %s24
    %s27 = sadd.s32 1, %s18
    %s28 = scalar_select %p25, %s27, %s18
    %p29 = scmp.ge.s32.totalorder %s28, 2
    %s30 = scalar_select %p29, 0, %s28
    %s31 = ssub.s32 %s19, %s26
    %p32 = scmp.eq.s32.totalorder %s31, 0
    %s34 = sadd.s32 %s33, 1
    %s35 = scalar_select %p32, %s33, %s34
    %p38 = pneg %p32
    %p39 = scmp.eq.s32.totalorder %s11, 1
    %p40 = por %p38, %p39
    %p41 = scmp.ne.s32.totalorder %s33, %s36
    %p42 = scmp.eq.s32.totalorder %s11, 0
    %p43 = por %p41, %p42
    %p44 = scmp.ne.s32.totalorder %s33, %s36
    %p45 = scmp.eq.s32.totalorder %s16, 1
    %p46 = por %p44, %p45
    %p47 = scmp.ne.s32.totalorder %s36, %s37
    %p48 = scmp.eq.s32.totalorder %s16, 0
    %p49 = por %p47, %p48
    %p50 = scmp.ne.s32.totalorder %s36, %s37
    %p51 = scmp.eq.s32.totalorder %s17, 1
    %p52 = por %p50, %p51
    %p54 = scmp.ne.s32.totalorder %s37, %s53
    %p55 = scmp.eq.s32.totalorder %s17, 0
    %p56 = por %p54, %p55
    %s58 = sadd.s32 %s57, 1
    %p61 = scmp.eq.s32.totalorder %s11, 1
    %p62 = scmp.ne.s32.totalorder %s57, %s59
    %p63 = scmp.eq.s32.totalorder %s11, 0
    %p64 = por %p62, %p63
    %p65 = scmp.ne.s32.totalorder %s57, %s59
    %p66 = scmp.eq.s32.totalorder %s16, 1
    %p67 = por %p65, %p66
    %p68 = scmp.ne.s32.totalorder %s59, %s60
    %p69 = scmp.eq.s32.totalorder %s16, 0
    %p70 = por %p68, %p69
    %p71 = scmp.ne.s32.totalorder %s59, %s60
    %p72 = scmp.eq.s32.totalorder %s17, 1
    %p73 = por %p71, %p72
    %p75 = scmp.ne.s32.totalorder %s60, %s74
    %p76 = scmp.eq.s32.totalorder %s17, 0
    %p77 = por %p75, %p76
    %s79 = sadd.s32 %s78, 1
    %p82 = scmp.eq.s32.totalorder %s11, 1
    %p83 = scmp.ne.s32.totalorder %s78, %s80
    %p84 = scmp.eq.s32.totalorder %s11, 0
    %p85 = por %p83, %p84
    %p86 = scmp.ne.s32.totalorder %s78, %s80
    %p87 = scmp.eq.s32.totalorder %s16, 1
    %p88 = por %p86, %p87
    %p89 = scmp.ne.s32.totalorder %s80, %s81
    %p90 = scmp.eq.s32.totalorder %s16, 0
    %p91 = por %p89, %p90
    %p92 = scmp.ne.s32.totalorder %s80, %s81
    %p93 = scmp.eq.s32.totalorder %s17, 1
    %p94 = por %p92, %p93
    %p96 = scmp.ne.s32.totalorder %s81, %s95
    %p97 = scmp.eq.s32.totalorder %s17, 0
    %p98 = por %p96, %p97
    %s100 = sadd.s32 %s99, 1
    %p103 = scmp.eq.s32.totalorder %s11, 1
    %p104 = scmp.ne.s32.totalorder %s99, %s101
    %p105 = scmp.eq.s32.totalorder %s11, 0
    %p106 = por %p104, %p105
    %p107 = scmp.ne.s32.totalorder %s99, %s101
    %p108 = scmp.eq.s32.totalorder %s16, 1
    %p109 = por %p107, %p108
    %p110 = scmp.ne.s32.totalorder %s101, %s102
    %p111 = scmp.eq.s32.totalorder %s16, 0
    %p112 = por %p110, %p111
    %p113 = scmp.ne.s32.totalorder %s101, %s102
    %p114 = scmp.eq.s32.totalorder %s17, 1
    %p115 = por %p113, %p114
    %p117 = scmp.ne.s32.totalorder %s102, %s116
    %p118 = scmp.eq.s32.totalorder %s17, 0
    %p119 = por %p117, %p118
    %s121 = sadd.s32 %s120, 1
    %p124 = scmp.eq.s32.totalorder %s11, 1
    %p125 = scmp.ne.s32.totalorder %s120, %s122
    %p126 = scmp.eq.s32.totalorder %s11, 0
    %p127 = por %p125, %p126
    %p128 = scmp.ne.s32.totalorder %s120, %s122
    %p129 = scmp.eq.s32.totalorder %s16, 1
    %p130 = por %p128, %p129
    %p131 = scmp.ne.s32.totalorder %s122, %s123
    %p132 = scmp.eq.s32.totalorder %s16, 0
    %p133 = por %p131, %p132
    %p134 = scmp.ne.s32.totalorder %s122, %s123
    %p135 = scmp.eq.s32.totalorder %s17, 1
    %p136 = por %p134, %p135
    %p138 = scmp.ne.s32.totalorder %s123, %s137
    %p139 = scmp.eq.s32.totalorder %s17, 0
    %p140 = por %p138, %p139
    %s141 = ssub.s32 %s19, %s26
    %p142 = scmp.eq.s32.totalorder %s141, 0
    %s144 = sadd.s32 %s143, 1
    %s145 = scalar_select %p142, %s143, %s144
    %p148 = pneg %p142
    %p149 = scmp.eq.s32.totalorder %s11, 1
    %p150 = por %p148, %p149
    %p151 = scmp.ne.s32.totalorder %s143, %s146
    %p152 = scmp.eq.s32.totalorder %s11, 0
    %p153 = por %p151, %p152
    %p154 = scmp.ne.s32.totalorder %s143, %s146
    %p155 = scmp.eq.s32.totalorder %s16, 1
    %p156 = por %p154, %p155
    %p157 = scmp.ne.s32.totalorder %s146, %s147
    %p158 = scmp.eq.s32.totalorder %s16, 0
    %p159 = por %p157, %p158
    %p160 = scmp.ne.s32.totalorder %s146, %s147
    %p161 = scmp.eq.s32.totalorder %s17, 1
    %p162 = por %p160, %p161
    %p164 = scmp.ne.s32.totalorder %s147, %s163
    %p165 = scmp.eq.s32.totalorder %s17, 0
    %p166 = por %p164, %p165
    %p167 = scmp.le.s32.totalorder 1, %s11
    %p168 = scmp.lt.s32.totalorder %s11, 3
    %p169 = pnand %p167, %p168
    %p170 = pneg %p169
    // Predicated region
    $region9: #{generator_forward.6} parent=5 // pred_check
      _
    $region10: #{generator_forward.6} parent=5 // pred_check_branch
      %172 = sbr.rel (%p169) target = $region12
    $region11: #{generator_forward.6} parent=5 // pred_region
      %s173 = ssub.s32 %s11, 1
      // Predicated region
      $region13: #{generator_forward.6} parent=11 // pred_check
        %p174 = pneg %p49
      $region14: #{generator_forward.6} parent=11 // pred_check_branch
        %176 = sbr.rel (%p174) target = $region16
      $region15: #{generator_forward.6} parent=11 // pred_region
        %p177 = scmp.lt.s32.totalorder %s21, 0
        %s178 = scalar_select %p177, %s21, 0
        %s179 = smul.addr %s178, 4
        %s180 = scalar_lea.vmem %s0, %s179
      $region16: #{generator_forward.6} parent=11 // pred_fallthru
        _
      // Predicated region
      $region17: #{generator_forward.6} parent=11 // pred_check
        %p181 = pneg %p70
      $region18: #{generator_forward.6} parent=11 // pred_check_branch
        %183 = sbr.rel (%p181) target = $region20
      $region19: #{generator_forward.6} parent=11 // pred_region
        _
      $region20: #{generator_forward.6} parent=11 // pred_fallthru
        _
      // Predicated region
      $region21: #{generator_forward.6} parent=11 // pred_check
        %p184 = pneg %p91
      $region22: #{generator_forward.6} parent=11 // pred_check_branch
        %186 = sbr.rel (%p184) target = $region24
      $region23: #{generator_forward.6} parent=11 // pred_region
        _
      $region24: #{generator_forward.6} parent=11 // pred_fallthru
        _
      // Predicated region
      $region25: #{generator_forward.6} parent=11 // pred_check
        %p187 = pneg %p112
      $region26: #{generator_forward.6} parent=11 // pred_check_branch
        %189 = sbr.rel (%p187) target = $region28
      $region27: #{generator_forward.6} parent=11 // pred_region
        _
      $region28: #{generator_forward.6} parent=11 // pred_fallthru
        _
      // Predicated region
      $region29: #{generator_forward.6} parent=11 // pred_check
        %p190 = pneg %p133
      $region30: #{generator_forward.6} parent=11 // pred_check_branch
        %192 = sbr.rel (%p190) target = $region32
      $region31: #{generator_forward.6} parent=11 // pred_region
        _
      $region32: #{generator_forward.6} parent=11 // pred_fallthru
        _
    $region12: #{generator_forward.6} parent=5 // pred_fallthru
      _
    %p193 = scmp.lt.s32.totalorder %s11, 2
    // Predicated region
    $region33: #{generator_forward.6} parent=5 // pred_check
      %p194 = pneg %p193
    $region34: #{generator_forward.6} parent=5 // pred_check_branch
      %196 = sbr.rel (%p194) target = $region36
    $region35: #{generator_forward.6} parent=5 // pred_region
      _
    $region36: #{generator_forward.6} parent=5 // pred_fallthru
      _
    %p197 = scmp.le.s32.totalorder 1, %s11
    %p198 = scmp.lt.s32.totalorder %s11, 3
    %p199 = pnand %p197, %p198
    %p200 = pneg %p199
    // Predicated region
    $region37: #{generator_forward.6} parent=5 // pred_check
      _
    $region38: #{generator_forward.6} parent=5 // pred_check_branch
      %202 = sbr.rel (%p199) target = $region40
    $region39: #{generator_forward.6} parent=5 // pred_region
      %s203 = ssub.s32 %s11, 1
      %p204 = scmp.lt.s32.totalorder %s21, 0
      %s205 = scalar_select %p204, %s21, 0
      %s206 = smul.addr %s205, 4
      %s207 = scalar_lea.vmem %s0, %s206
      %p208 = pneg %p49
      %p209 = pneg %p46
      %p210 = pneg %p70
      %p211 = pneg %p67
      %p212 = pneg %p91
      %p213 = pneg %p88
      %p214 = pneg %p112
      %p215 = pneg %p109
      %p216 = pneg %p133
      %p217 = pneg %p130
      %p218 = pneg %p159
      %p219 = pneg %p156
      %p220 = scmp.lt.s32.totalorder %s21, 0
      %s221 = scalar_select %p220, %s21, 0
      %s222 = smul.addr %s221, 4
      %s223 = scalar_lea.vmem %s5, %s222
      %p224 = scmp.lt.s32.totalorder %s21, 0
      %s225 = scalar_select %p224, %s21, 0
      %s226 = smul.addr %s225, 4
      %s227 = scalar_lea.vmem %s0, %s226
      %p228 = scmp.lt.s32.totalorder %s21, 0
      %s229 = scalar_select %p228, %s21, 0
      %s230 = smul.addr %s229, 4
      %s231 = scalar_lea.vmem %s5, %s230
      %v233 = vld [vmem:[%s1] sm:$0xff]
      %v234 = vld [vmem:[%s1 + $0x8] sm:$0xff]
      %v235 = vld [vmem:[%s1 + $0x10] sm:$0xf]
      %v236 = vld [vmem:[%s1 + $0x14] sm:$0xff]
      %v237 = vld [vmem:[%s1 + $0x1c] sm:$0xff]
      %v238 = vld [vmem:[%s1 + $0x24] sm:$0xf]
      %v239 = vld [vmem:[%s1 + $0x28] sm:$0xff]
      %v240 = vld [vmem:[%s1 + $0x30] sm:$0xff]
      %v241 = vld [vmem:[%s1 + $0x38] sm:$0xf]
      %v242 = vld [vmem:[%s1 + $0x3c] sm:$0xff]
      %v243 = vld [vmem:[%s1 + $0x44] sm:$0xff]
      %v244 = vld [vmem:[%s1 + $0x4c] sm:$0xf]
      %v245 = vld [vmem:[%s1 + $0x50] sm:$0xff]
      %v246 = vld [vmem:[%s1 + $0x58] sm:$0xff]
      %v247 = vld [vmem:[%s1 + $0x60] sm:$0xf]
      %v248 = vld [vmem:[%s1 + $0x64] sm:$0xff]
      %v249 = vld [vmem:[%s1 + $0x6c] sm:$0xff]
      %v250 = vld [vmem:[%s1 + $0x74] sm:$0xf]
      %v251 = vld [vmem:[%s1 + $0x78] sm:$0xff]
      %v252 = vld [vmem:[%s1 + $0x80] sm:$0xff]
      %v253 = vld [vmem:[%s1 + $0x88] sm:$0xf]
      %v254 = vld [vmem:[%s1 + $0x8c] sm:$0xff]
      %v255 = vld [vmem:[%s1 + $0x94] sm:$0xff]
      %v256 = vld [vmem:[%s1 + $0x9c] sm:$0xf]
      %v257 = vld [vmem:[%s1 + $0xa0] sm:$0xff]
      %v258 = vld [vmem:[%s1 + $0xa8] sm:$0xff]
      %v259 = vld [vmem:[%s1 + $0xb0] sm:$0xf]
      %v260 = vld [vmem:[%s1 + $0xb4] sm:$0xff]
      %v261 = vld [vmem:[%s1 + $0xbc] sm:$0xff]
      %v262 = vld [vmem:[%s1 + $0xc4] sm:$0xf]
      %v263 = vld [vmem:[%s1 + $0xc8] sm:$0xff]
      %v264 = vld [vmem:[%s1 + $0xd0] sm:$0xff]
      %v265 = vld [vmem:[%s1 + $0xd8] sm:$0xf]
      %v266 = vld [vmem:[%s1 + $0xdc] sm:$0xff]
      %v267 = vld [vmem:[%s1 + $0xe4] sm:$0xff]
      %v268 = vld [vmem:[%s1 + $0xec] sm:$0xf]
      %v269 = vld [vmem:[%s1 + $0xf0] sm:$0xff]
      %v270 = vld [vmem:[%s1 + $0xf8] sm:$0xff]
      %v271 = vld [vmem:[%s1 + $0x100] sm:$0xf]
      %v272 = vld [vmem:[%s1 + $0x104] sm:$0xff]
      %v273 = vld [vmem:[%s1 + $0x10c] sm:$0xff]
      %v274 = vld [vmem:[%s1 + $0x114] sm:$0xf]
      %v275 = vld [vmem:[%s1 + $0x118] sm:$0xff]
      %v276 = vld [vmem:[%s1 + $0x120] sm:$0xff]
      %v277 = vld [vmem:[%s1 + $0x128] sm:$0xf]
      %v278 = vld [vmem:[%s1 + $0x12c] sm:$0xff]
      %v279 = vld [vmem:[%s1 + $0x134] sm:$0xff]
      %v280 = vld [vmem:[%s1 + $0x13c] sm:$0xf]
      %v281 = vld [vmem:[%s227] sm:$0xf]
      %v282 = vld [vmem:[%s227 + $0x4] sm:$0xf]
      %v283 = vld [vmem:[%s227 + $0x8] sm:$0xf]
      %v284 = vld [vmem:[%s227 + $0xc] sm:$0xf]
      %v285 = vld [vmem:[%s227 + $0x10] sm:$0xf]
      %v286 = vld [vmem:[%s227 + $0x14] sm:$0xf]
      %v287 = vld [vmem:[%s227 + $0x18] sm:$0xf]
      %v288 = vld [vmem:[%s227 + $0x1c] sm:$0xf]
      %v289 = vld [vmem:[%s227 + $0x20] sm:$0xf]
      %v290 = vld [vmem:[%s227 + $0x24] sm:$0xf]
      %v291 = vld [vmem:[%s227 + $0x28] sm:$0xf]
      %v292 = vld [vmem:[%s227 + $0x2c] sm:$0xf]
      %v293 = vld [vmem:[%s227 + $0x30] sm:$0xf]
      %v294 = vld [vmem:[%s227 + $0x34] sm:$0xf]
      %v295 = vld [vmem:[%s227 + $0x38] sm:$0xf]
      %v296 = vld [vmem:[%s227 + $0x3c] sm:$0xf]
      %v297 = vld [vmem:[%s227 + $0x40] sm:$0xf]
      %v298 = vld [vmem:[%s227 + $0x44] sm:$0xf]
      %v299 = vld [vmem:[%s227 + $0x48] sm:$0xf]
      %v300 = vld [vmem:[%s227 + $0x4c] sm:$0xf]
      %v301 = vld [vmem:[%s227 + $0x50] sm:$0xf]
      %v302 = vld [vmem:[%s227 + $0x54] sm:$0xf]
      %v303 = vld [vmem:[%s227 + $0x58] sm:$0xf]
      %v304 = vld [vmem:[%s227 + $0x5c] sm:$0xf]
      %v305 = vld [vmem:[%s227 + $0x60] sm:$0xf]
      %v306 = vld [vmem:[%s227 + $0x64] sm:$0xf]
      %v307 = vld [vmem:[%s227 + $0x68] sm:$0xf]
      %v308 = vld [vmem:[%s227 + $0x6c] sm:$0xf]
      %v309 = vld [vmem:[%s227 + $0x70] sm:$0xf]
      %v310 = vld [vmem:[%s227 + $0x74] sm:$0xf]
      %v311 = vld [vmem:[%s227 + $0x78] sm:$0xf]
      %v312 = vld [vmem:[%s227 + $0x7c] sm:$0xf]
      %v313 = vld [vmem:[%s227 + $0x80] sm:$0xf]
      %v314 = vld [vmem:[%s227 + $0x84] sm:$0xf]
      %v315 = vld [vmem:[%s227 + $0x88] sm:$0xf]
      %v316 = vld [vmem:[%s227 + $0x8c] sm:$0xf]
      %v317 = vld [vmem:[%s227 + $0x90] sm:$0xf]
      %v318 = vld [vmem:[%s227 + $0x94] sm:$0xf]
      %v319 = vld [vmem:[%s227 + $0x98] sm:$0xf]
      %v320 = vld [vmem:[%s227 + $0x9c] sm:$0xf]
      %v321 = vld [vmem:[%s227 + $0xa0] sm:$0xf]
      %v322 = vld [vmem:[%s227 + $0xa4] sm:$0xf]
      %v323 = vld [vmem:[%s227 + $0xa8] sm:$0xf]
      %v324 = vld [vmem:[%s227 + $0xac] sm:$0xf]
      %v325 = vld [vmem:[%s227 + $0xb0] sm:$0xf]
      %v326 = vld [vmem:[%s227 + $0xb4] sm:$0xf]
      %v327 = vld [vmem:[%s227 + $0xb8] sm:$0xf]
      %v328 = vld [vmem:[%s227 + $0xbc] sm:$0xf]
      %v329 = vld [vmem:[%s227 + $0xc0] sm:$0xf]
      %v330 = vld [vmem:[%s227 + $0xc4] sm:$0xf]
      %v331 = vld [vmem:[%s227 + $0xc8] sm:$0xf]
      %v332 = vld [vmem:[%s227 + $0xcc] sm:$0xf]
      %v333 = vld [vmem:[%s227 + $0xd0] sm:$0xf]
      %v334 = vld [vmem:[%s227 + $0xd4] sm:$0xf]
      %v335 = vld [vmem:[%s227 + $0xd8] sm:$0xf]
      %v336 = vld [vmem:[%s227 + $0xdc] sm:$0xf]
      %v337 = vld [vmem:[%s227 + $0xe0] sm:$0xf]
      %v338 = vld [vmem:[%s227 + $0xe4] sm:$0xf]
      %v339 = vld [vmem:[%s227 + $0xe8] sm:$0xf]
      %v340 = vld [vmem:[%s227 + $0xec] sm:$0xf]
      %v341 = vld [vmem:[%s227 + $0xf0] sm:$0xf]
      %v342 = vld [vmem:[%s227 + $0xf4] sm:$0xf]
      %v343 = vld [vmem:[%s227 + $0xf8] sm:$0xf]
      %v344 = vld [vmem:[%s227 + $0xfc] sm:$0xf]
      %v345 = vld [vmem:[%s227 + $0x100] sm:$0xf]
      %v346 = vld [vmem:[%s227 + $0x104] sm:$0xf]
      %v347 = vld [vmem:[%s227 + $0x108] sm:$0xf]
      %v348 = vld [vmem:[%s227 + $0x10c] sm:$0xf]
      %v349 = vld [vmem:[%s227 + $0x110] sm:$0xf]
      %v350 = vld [vmem:[%s227 + $0x114] sm:$0xf]
      %v351 = vld [vmem:[%s227 + $0x118] sm:$0xf]
      %v352 = vld [vmem:[%s227 + $0x11c] sm:$0xf]
      %v353 = vld [vmem:[%s2] sm:$0xff]
      %v354 = vld [vmem:[%s2 + $0x8] sm:$0xff]
      %v355 = vld [vmem:[%s2 + $0x10] sm:$0xff]
      %v356 = vld [vmem:[%s2 + $0x18] sm:$0xff]
      %v357 = vld [vmem:[%s2 + $0x20] sm:$0xff]
      %v358 = vld [vmem:[%s2 + $0x28] sm:$0xff]
      %v359 = vld [vmem:[%s2 + $0x30] sm:$0xff]
      %v360 = vld [vmem:[%s2 + $0x38] sm:$0xff]
      %v361 = vld [vmem:[%s2 + $0x40] sm:$0xff]
      %v362 = vld [vmem:[%s2 + $0x48] sm:$0xff]
      %v363 = vld [vmem:[%s2 + $0x50] sm:$0xff]
      %v364 = vld [vmem:[%s2 + $0x58] sm:$0xff]
      %v365 = vld [vmem:[%s2 + $0x60] sm:$0xff]
      %v366 = vld [vmem:[%s2 + $0x68] sm:$0xff]
      %v367 = vld [vmem:[%s2 + $0x70] sm:$0xff]
      %v368 = vld [vmem:[%s2 + $0x78] sm:$0xff]
      %370 = vset.pattern.permute.xlu0 0
      %371 = vperm.xlu0 %370, %v353
      %v372 = vpop.permute.xlu0 %371
      %375 = vset.pattern.permute.xlu0 0
      %376 = vperm.xlu0 %375, %v354
      %v377 = vpop.permute.xlu0 %376
      %380 = vset.pattern.permute.xlu0 0
      %381 = vperm.xlu0 %380, %v355
      %v382 = vpop.permute.xlu0 %381
      %385 = vset.pattern.permute.xlu0 0
      %386 = vperm.xlu0 %385, %v356
      %v387 = vpop.permute.xlu0 %386
      %390 = vset.pattern.permute.xlu0 0
      %391 = vperm.xlu0 %390, %v357
      %v392 = vpop.permute.xlu0 %391
      %395 = vset.pattern.permute.xlu0 0
      %396 = vperm.xlu0 %395, %v358
      %v397 = vpop.permute.xlu0 %396
      %400 = vset.pattern.permute.xlu0 0
      %401 = vperm.xlu0 %400, %v359
      %v402 = vpop.permute.xlu0 %401
      %405 = vset.pattern.permute.xlu0 0
      %406 = vperm.xlu0 %405, %v360
      %v407 = vpop.permute.xlu0 %406
      %410 = vset.pattern.permute.xlu0 0
      %411 = vperm.xlu0 %410, %v361
      %v412 = vpop.permute.xlu0 %411
      %415 = vset.pattern.permute.xlu0 0
      %416 = vperm.xlu0 %415, %v362
      %v417 = vpop.permute.xlu0 %416
      %420 = vset.pattern.permute.xlu0 0
      %421 = vperm.xlu0 %420, %v363
      %v422 = vpop.permute.xlu0 %421
      %425 = vset.pattern.permute.xlu0 0
      %426 = vperm.xlu0 %425, %v364
      %v427 = vpop.permute.xlu0 %426
      %430 = vset.pattern.permute.xlu0 0
      %431 = vperm.xlu0 %430, %v365
      %v432 = vpop.permute.xlu0 %431
      %435 = vset.pattern.permute.xlu0 0
      %436 = vperm.xlu0 %435, %v366
      %v437 = vpop.permute.xlu0 %436
      %440 = vset.pattern.permute.xlu0 0
      %441 = vperm.xlu0 %440, %v367
      %v442 = vpop.permute.xlu0 %441
      %445 = vset.pattern.permute.xlu0 0
      %446 = vperm.xlu0 %445, %v368
      %v447 = vpop.permute.xlu0 %446
      %v497 = vunpack.c.l.b16 %v233
      %v498 = vunpack.c.h.b16 %v233
      %v499 = vunpack.c.l.b16 %v234
      %v500 = vunpack.c.h.b16 %v234
      %v501 = vunpack.c.l.b16 %v235
      %v502 = vunpack.c.l.b16 %v236
      %v503 = vunpack.c.h.b16 %v236
      %v504 = vunpack.c.l.b16 %v237
      %v505 = vunpack.c.h.b16 %v237
      %v506 = vunpack.c.l.b16 %v238
      %v507 = vunpack.c.l.b16 %v239
      %v508 = vunpack.c.h.b16 %v239
      %v509 = vunpack.c.l.b16 %v240
      %v510 = vunpack.c.h.b16 %v240
      %v511 = vunpack.c.l.b16 %v241
      %v512 = vunpack.c.l.b16 %v242
      %v513 = vunpack.c.h.b16 %v242
      %v514 = vunpack.c.l.b16 %v243
      %v515 = vunpack.c.h.b16 %v243
      %v516 = vunpack.c.l.b16 %v244
      %v517 = vunpack.c.l.b16 %v245
      %v518 = vunpack.c.h.b16 %v245
      %v519 = vunpack.c.l.b16 %v246
      %v520 = vunpack.c.h.b16 %v246
      %v521 = vunpack.c.l.b16 %v247
      %v522 = vunpack.c.l.b16 %v248
      %v523 = vunpack.c.h.b16 %v248
      %v524 = vunpack.c.l.b16 %v249
      %v525 = vunpack.c.h.b16 %v249
      %v526 = vunpack.c.l.b16 %v250
      %v527 = vunpack.c.l.b16 %v251
      %v528 = vunpack.c.h.b16 %v251
      %v529 = vunpack.c.l.b16 %v252
      %v530 = vunpack.c.h.b16 %v252
      %v531 = vunpack.c.l.b16 %v253
      %v532 = vunpack.c.l.b16 %v254
      %v533 = vunpack.c.h.b16 %v254
      %v534 = vunpack.c.l.b16 %v255
      %v535 = vunpack.c.h.b16 %v255
      %v536 = vunpack.c.l.b16 %v256
      %v537 = vunpack.c.l.b16 %v257
      %v538 = vunpack.c.h.b16 %v257
      %v539 = vunpack.c.l.b16 %v258
      %v540 = vunpack.c.h.b16 %v258
      %v541 = vunpack.c.l.b16 %v259
      %v542 = vunpack.c.l.b16 %v260
      %v543 = vunpack.c.h.b16 %v260
      %v544 = vunpack.c.l.b16 %v261
      %v545 = vunpack.c.h.b16 %v261
      %v546 = vunpack.c.l.b16 %v262
      %v547 = vunpack.c.l.b16 %v263
      %v548 = vunpack.c.h.b16 %v263
      %v549 = vunpack.c.l.b16 %v264
      %v550 = vunpack.c.h.b16 %v264
      %v551 = vunpack.c.l.b16 %v265
      %v552 = vunpack.c.l.b16 %v266
      %v553 = vunpack.c.h.b16 %v266
      %v554 = vunpack.c.l.b16 %v267
      %v555 = vunpack.c.h.b16 %v267
      %v556 = vunpack.c.l.b16 %v268
      %v557 = vunpack.c.l.b16 %v269
      %v558 = vunpack.c.h.b16 %v269
      %v559 = vunpack.c.l.b16 %v270
      %v560 = vunpack.c.h.b16 %v270
      %v561 = vunpack.c.l.b16 %v271
      %v562 = vunpack.c.l.b16 %v272
      %v563 = vunpack.c.h.b16 %v272
      %v564 = vunpack.c.l.b16 %v273
      %v565 = vunpack.c.h.b16 %v273
      %v566 = vunpack.c.l.b16 %v274
      %v567 = vunpack.c.l.b16 %v275
      %v568 = vunpack.c.h.b16 %v275
      %v569 = vunpack.c.l.b16 %v276
      %v570 = vunpack.c.h.b16 %v276
      %v571 = vunpack.c.l.b16 %v277
      %v572 = vunpack.c.l.b16 %v278
      %v573 = vunpack.c.h.b16 %v278
      %v574 = vunpack.c.l.b16 %v279
      %v575 = vunpack.c.h.b16 %v279
      %v576 = vunpack.c.l.b16 %v280
      %v577 = vpack.c.b16 %v502, %v497
      %v578 = vpack.c.b16 %v503, %v498
      %v579 = vpack.c.b16 %v504, %v499
      %v580 = vpack.c.b16 %v505, %v500
      %v581 = vpack.c.b16 %v506, %v501
      %v582 = vpack.c.b16 %v512, %v507
      %v583 = vpack.c.b16 %v513, %v508
      %v584 = vpack.c.b16 %v514, %v509
      %v585 = vpack.c.b16 %v515, %v510
      %v586 = vpack.c.b16 %v516, %v511
      %v587 = vpack.c.b16 %v522, %v517
      %v588 = vpack.c.b16 %v523, %v518
      %v589 = vpack.c.b16 %v524, %v519
      %v590 = vpack.c.b16 %v525, %v520
      %v591 = vpack.c.b16 %v526, %v521
      %v592 = vpack.c.b16 %v532, %v527
      %v593 = vpack.c.b16 %v533, %v528
      %v594 = vpack.c.b16 %v534, %v529
      %v595 = vpack.c.b16 %v535, %v530
      %v596 = vpack.c.b16 %v536, %v531
      %v597 = vpack.c.b16 %v542, %v537
      %v598 = vpack.c.b16 %v543, %v538
      %v599 = vpack.c.b16 %v544, %v539
      %v600 = vpack.c.b16 %v545, %v540
      %v601 = vpack.c.b16 %v546, %v541
      %v602 = vpack.c.b16 %v552, %v547
      %v603 = vpack.c.b16 %v553, %v548
      %v604 = vpack.c.b16 %v554, %v549
      %v605 = vpack.c.b16 %v555, %v550
      %v606 = vpack.c.b16 %v556, %v551
      %v607 = vpack.c.b16 %v562, %v557
      %v608 = vpack.c.b16 %v563, %v558
      %v609 = vpack.c.b16 %v564, %v559
      %v610 = vpack.c.b16 %v565, %v560
      %v611 = vpack.c.b16 %v566, %v561
      %v612 = vpack.c.b16 %v572, %v567
      %v613 = vpack.c.b16 %v573, %v568
      %v614 = vpack.c.b16 %v574, %v569
      %v615 = vpack.c.b16 %v575, %v570
      %v616 = vpack.c.b16 %v576, %v571
      %v721 = vunpack.c.l.b16 %v281
      %v722 = vunpack.c.l.b16 %v282
      %v723 = vunpack.c.l.b16 %v283
      %v724 = vunpack.c.l.b16 %v284
      %v725 = vunpack.c.l.b16 %v285
      %v726 = vunpack.c.l.b16 %v286
      %v727 = vunpack.c.l.b16 %v287
      %v728 = vunpack.c.l.b16 %v288
      %v729 = vunpack.c.l.b16 %v289
      %v730 = vunpack.c.l.b16 %v290
      %v731 = vunpack.c.l.b16 %v291
      %v732 = vunpack.c.l.b16 %v292
      %v733 = vunpack.c.l.b16 %v293
      %v734 = vunpack.c.l.b16 %v294
      %v735 = vunpack.c.l.b16 %v295
      %v736 = vunpack.c.l.b16 %v296
      %v737 = vunpack.c.l.b16 %v297
      %v738 = vunpack.c.l.b16 %v298
      %v739 = vunpack.c.l.b16 %v299
      %v740 = vunpack.c.l.b16 %v300
      %v741 = vunpack.c.l.b16 %v301
      %v742 = vunpack.c.l.b16 %v302
      %v743 = vunpack.c.l.b16 %v303
      %v744 = vunpack.c.l.b16 %v304
      %v745 = vunpack.c.l.b16 %v305
      %v746 = vunpack.c.l.b16 %v306
      %v747 = vunpack.c.l.b16 %v307
      %v748 = vunpack.c.l.b16 %v308
      %v749 = vunpack.c.l.b16 %v309
      %v750 = vunpack.c.l.b16 %v310
      %v751 = vunpack.c.l.b16 %v311
      %v752 = vunpack.c.l.b16 %v312
      %v753 = vunpack.c.l.b16 %v313
      %v754 = vunpack.c.l.b16 %v314
      %v755 = vunpack.c.l.b16 %v315
      %v756 = vunpack.c.l.b16 %v316
      %v757 = vunpack.c.l.b16 %v317
      %v758 = vunpack.c.l.b16 %v318
      %v759 = vunpack.c.l.b16 %v319
      %v760 = vunpack.c.l.b16 %v320
      %v761 = vunpack.c.l.b16 %v321
      %v762 = vunpack.c.l.b16 %v322
      %v763 = vunpack.c.l.b16 %v323
      %v764 = vunpack.c.l.b16 %v324
      %v765 = vunpack.c.l.b16 %v325
      %v766 = vunpack.c.l.b16 %v326
      %v767 = vunpack.c.l.b16 %v327
      %v768 = vunpack.c.l.b16 %v328
      %v769 = vunpack.c.l.b16 %v329
      %v770 = vunpack.c.l.b16 %v330
      %v771 = vunpack.c.l.b16 %v331
      %v772 = vunpack.c.l.b16 %v332
      %v773 = vunpack.c.l.b16 %v333
      %v774 = vunpack.c.l.b16 %v334
      %v775 = vunpack.c.l.b16 %v335
      %v776 = vunpack.c.l.b16 %v336
      %v777 = vunpack.c.l.b16 %v337
      %v778 = vunpack.c.l.b16 %v338
      %v779 = vunpack.c.l.b16 %v339
      %v780 = vunpack.c.l.b16 %v340
      %v781 = vunpack.c.l.b16 %v341
      %v782 = vunpack.c.l.b16 %v342
      %v783 = vunpack.c.l.b16 %v343
      %v784 = vunpack.c.l.b16 %v344
      %v785 = vunpack.c.l.b16 %v345
      %v786 = vunpack.c.l.b16 %v346
      %v787 = vunpack.c.l.b16 %v347
      %v788 = vunpack.c.l.b16 %v348
      %v789 = vunpack.c.l.b16 %v349
      %v790 = vunpack.c.l.b16 %v350
      %v791 = vunpack.c.l.b16 %v351
      %v792 = vunpack.c.l.b16 %v352
      %v793 = vpack.c.b16 %v722, %v721
      %v794 = vpack.c.b16 %v724, %v723
      %v795 = vpack.c.b16 %v726, %v725
      %v796 = vpack.c.b16 %v728, %v727
      %v797 = vpack.c.b16 %v730, %v729
      %v798 = vpack.c.b16 %v732, %v731
      %v799 = vpack.c.b16 %v734, %v733
      %v800 = vpack.c.b16 %v736, %v735
      %v801 = vpack.c.b16 %v738, %v737
      %v802 = vpack.c.b16 %v740, %v739
      %v803 = vpack.c.b16 %v742, %v741
      %v804 = vpack.c.b16 %v744, %v743
      %v805 = vpack.c.b16 %v746, %v745
      %v806 = vpack.c.b16 %v748, %v747
      %v807 = vpack.c.b16 %v750, %v749
      %v808 = vpack.c.b16 %v752, %v751
      %v809 = vpack.c.b16 %v754, %v753
      %v810 = vpack.c.b16 %v756, %v755
      %v811 = vpack.c.b16 %v758, %v757
      %v812 = vpack.c.b16 %v760, %v759
      %v813 = vpack.c.b16 %v762, %v761
      %v814 = vpack.c.b16 %v764, %v763
      %v815 = vpack.c.b16 %v766, %v765
      %v816 = vpack.c.b16 %v768, %v767
      %v817 = vpack.c.b16 %v770, %v769
      %v818 = vpack.c.b16 %v772, %v771
      %v819 = vpack.c.b16 %v774, %v773
      %v820 = vpack.c.b16 %v776, %v775
      %v821 = vpack.c.b16 %v778, %v777
      %v822 = vpack.c.b16 %v780, %v779
      %v823 = vpack.c.b16 %v782, %v781
      %v824 = vpack.c.b16 %v784, %v783
      %v825 = vpack.c.b16 %v786, %v785
      %v826 = vpack.c.b16 %v788, %v787
      %v827 = vpack.c.b16 %v790, %v789
      %v828 = vpack.c.b16 %v792, %v791
      %vm865 = vcmask 523264
      %v867 = vsel %vm865, %v581, 0
      %v870 = vsel %vm865, %v586, 0
      %v873 = vsel %vm865, %v591, 0
      %v876 = vsel %vm865, %v596, 0
      %v879 = vsel %vm865, %v601, 0
      %v882 = vsel %vm865, %v606, 0
      %v885 = vsel %vm865, %v611, 0
      %v888 = vsel %vm865, %v616, 0
      %890 = vmatprep.subr.bf16.mxu0 0
      %891 = vmatpush1.bf16.msra.mxu0 %v793
      %892 = vmatprep.subr.bf16.mxu0 0
      %893 = vmatpush1.bf16.msra.mxu0 %v794
      %894 = vmatprep.subr.bf16.mxu0 0
      %895 = vmatpush1.bf16.msra.mxu0 %v795
      %896 = vmatprep.subr.bf16.mxu0 0
      %897 = vmatpush1.bf16.msra.mxu0 %v796
      %898 = vmatprep.subr.bf16.mxu0 0
      %899 = vmatpush1.bf16.msra.mxu0 %v797
      %900 = vmatprep.subr.bf16.mxu0 0
      %901 = vmatpush1.bf16.msra.mxu0 %v798
      %902 = vmatprep.subr.bf16.mxu0 0
      %903 = vmatpush1.bf16.msra.mxu0 %v799
      %904 = vmatprep.subr.bf16.mxu0 0
      %905 = vmatpush1.bf16.msra.mxu0 %v800
      %906 = vmatprep.subr.bf16.mxu0 0
      %907 = vmatpush1.bf16.msra.mxu0 %v801
      %908 = vmatprep.subr.bf16.mxu0 0
      %909 = vmatpush1.bf16.msra.mxu0 %v802
      %910 = vmatprep.subr.bf16.mxu0 0
      %911 = vmatpush1.bf16.msra.mxu0 %v803
      %912 = vmatprep.subr.bf16.mxu0 0
      %913 = vmatpush1.bf16.msra.mxu0 %v804
      %914 = vmatprep.subr.bf16.mxu0 0
      %915 = vmatpush1.bf16.msra.mxu0 %v805
      %916 = vmatprep.subr.bf16.mxu0 0
      %917 = vmatpush1.bf16.msra.mxu0 %v806
      %918 = vmatprep.subr.bf16.mxu0 0
      %919 = vmatpush1.bf16.msra.mxu0 %v807
      %920 = vmatprep.subr.bf16.mxu0 0
      %921 = vmatpush1.bf16.msra.mxu0 %v808
      %922 = vmatprep.mubr.bf16.mxu0 %v578
      %923 = vmatmul.mubr.bf16.gmra.mrb[0].mxu0 %v577
      %v924 = vpop.f32.mrb[0].mxu0
      %v925 = vadd.f32 %v372, %v924
      %v926 = vpop.f32.mrb[0].mxu0
      %v927 = vpop.f32.mrb[0].mxu0
      %v928 = vadd.f32 %v377, %v927
      %v929 = vpop.f32.mrb[0].mxu0
      %930 = vmatprep.mubr.bf16.mxu0 %v583
      %931 = vmatmul.mubr.bf16.gmra.mrb[0].mxu0 %v582
      %v932 = vpop.f32.mrb[0].mxu0
      %v933 = vadd.f32 %v382, %v932
      %v934 = vpop.f32.mrb[0].mxu0
      %v935 = vpop.f32.mrb[0].mxu0
      %v936 = vadd.f32 %v387, %v935
      %v937 = vpop.f32.mrb[0].mxu0
      %938 = vmatprep.mubr.bf16.mxu0 %v588
      %939 = vmatmul.mubr.bf16.gmra.mrb[0].mxu0 %v587
      %v940 = vpop.f32.mrb[0].mxu0
      %v941 = vadd.f32 %v392, %v940
      %v942 = vpop.f32.mrb[0].mxu0
      %v943 = vpop.f32.mrb[0].mxu0
      %v944 = vadd.f32 %v397, %v943
      %v945 = vpop.f32.mrb[0].mxu0
      %946 = vmatprep.mubr.bf16.mxu0 %v593
      %947 = vmatmul.mubr.bf16.gmra.mrb[0].mxu0 %v592
      %v948 = vpop.f32.mrb[0].mxu0
      %v949 = vadd.f32 %v402, %v948
      %v950 = vpop.f32.mrb[0].mxu0
      %v951 = vpop.f32.mrb[0].mxu0
      %v952 = vadd.f32 %v407, %v951
      %v953 = vpop.f32.mrb[0].mxu0
      %954 = vmatprep.mubr.bf16.mxu0 %v598
      %955 = vmatmul.mubr.bf16.gmra.mrb[0].mxu0 %v597
      %v956 = vpop.f32.mrb[0].mxu0
      %v957 = vadd.f32 %v412, %v956
      %v958 = vpop.f32.mrb[0].mxu0
      %v959 = vpop.f32.mrb[0].mxu0
      %v960 = vadd.f32 %v417, %v959
      %v961 = vpop.f32.mrb[0].mxu0
      %962 = vmatprep.mubr.bf16.mxu0 %v603
      %963 = vmatmul.mubr.bf16.gmra.mrb[0].mxu0 %v602
      %v964 = vpop.f32.mrb[0].mxu0
      %v965 = vadd.f32 %v422, %v964
      %v966 = vpop.f32.mrb[0].mxu0
      %v967 = vpop.f32.mrb[0].mxu0
      %v968 = vadd.f32 %v427, %v967
      %v969 = vpop.f32.mrb[0].mxu0
      %970 = vmatprep.mubr.bf16.mxu0 %v608
      %971 = vmatmul.mubr.bf16.gmra.mrb[0].mxu0 %v607
      %v972 = vpop.f32.mrb[0].mxu0
      %v973 = vadd.f32 %v432, %v972
      %v974 = vpop.f32.mrb[0].mxu0
      %v975 = vpop.f32.mrb[0].mxu0
      %v976 = vadd.f32 %v437, %v975
      %v977 = vpop.f32.mrb[0].mxu0
      %978 = vmatprep.mubr.bf16.mxu0 %v613
      %979 = vmatmul.mubr.bf16.gmra.mrb[0].mxu0 %v612
      %v980 = vpop.f32.mrb[0].mxu0
      %v981 = vadd.f32 %v442, %v980
      %v982 = vpop.f32.mrb[0].mxu0
      %v983 = vpop.f32.mrb[0].mxu0
      %v984 = vadd.f32 %v447, %v983
      %v985 = vpop.f32.mrb[0].mxu0
      %986 = vdwg.mxu0
      %987 = vmatprep.subr.bf16.mxu0 0
      %988 = vmatpush1.bf16.msra.mxu0 %v809
      %989 = vmatprep.subr.bf16.mxu0 0
      %990 = vmatpush1.bf16.msra.mxu0 %v810
      %991 = vmatprep.subr.bf16.mxu0 0
      %992 = vmatpush1.bf16.msra.mxu0 %v811
      %993 = vmatprep.subr.bf16.mxu0 0
      %994 = vmatpush1.bf16.msra.mxu0 %v812
      %995 = vmatprep.subr.bf16.mxu0 0
      %996 = vmatpush1.bf16.msra.mxu0 %v813
      %997 = vmatprep.subr.bf16.mxu0 0
      %998 = vmatpush1.bf16.msra.mxu0 %v814
      %999 = vmatprep.subr.bf16.mxu0 0
      %1000 = vmatpush1.bf16.msra.mxu0 %v815
      %1001 = vmatprep.subr.bf16.mxu0 0
      %1002 = vmatpush1.bf16.msra.mxu0 %v816
      %1003 = vmatprep.subr.bf16.mxu0 0
      %1004 = vmatpush1.bf16.msra.mxu0 %v817
      %1005 = vmatprep.subr.bf16.mxu0 0
      %1006 = vmatpush1.bf16.msra.mxu0 %v818
      %1007 = vmatprep.subr.bf16.mxu0 0
      %1008 = vmatpush1.bf16.msra.mxu0 %v819
      %1009 = vmatprep.subr.bf16.mxu0 0
      %1010 = vmatpush1.bf16.msra.mxu0 %v820
      %1011 = vmatprep.subr.bf16.mxu0 0
      %1012 = vmatpush1.bf16.msra.mxu0 %v821
      %1013 = vmatprep.subr.bf16.mxu0 0
      %1014 = vmatpush1.bf16.msra.mxu0 %v822
      %1015 = vmatprep.subr.bf16.mxu0 0
      %1016 = vmatpush1.bf16.msra.mxu0 %v823
      %1017 = vmatprep.subr.bf16.mxu0 0
      %1018 = vmatpush1.bf16.msra.mxu0 %v824
      %1019 = vmatprep.mubr.bf16.mxu0 %v580
      %1020 = vmatmul.mubr.bf16.gmra.mrb[0].mxu0 %v579
      %v1021 = vpop.f32.mrb[0].mxu0
      %v1022 = vadd.f32 %v925, %v1021
      %v1023 = vpop.f32.mrb[0].mxu0
      %v1024 = vpop.f32.mrb[0].mxu0
      %v1025 = vadd.f32 %v928, %v1024
      %v1026 = vpop.f32.mrb[0].mxu0
      %1027 = vmatprep.mubr.bf16.mxu0 %v585
      %1028 = vmatmul.mubr.bf16.gmra.mrb[0].mxu0 %v584
      %v1029 = vpop.f32.mrb[0].mxu0
      %v1030 = vadd.f32 %v933, %v1029
      %v1031 = vpop.f32.mrb[0].mxu0
      %v1032 = vpop.f32.mrb[0].mxu0
      %v1033 = vadd.f32 %v936, %v1032
      %v1034 = vpop.f32.mrb[0].mxu0
      %1035 = vmatprep.mubr.bf16.mxu0 %v590
      %1036 = vmatmul.mubr.bf16.gmra.mrb[0].mxu0 %v589
      %v1037 = vpop.f32.mrb[0].mxu0
      %v1038 = vadd.f32 %v941, %v1037
      %v1039 = vpop.f32.mrb[0].mxu0
      %v1040 = vpop.f32.mrb[0].mxu0
      %v1041 = vadd.f32 %v944, %v1040
      %v1042 = vpop.f32.mrb[0].mxu0
      %1043 = vmatprep.mubr.bf16.mxu0 %v595
      %1044 = vmatmul.mubr.bf16.gmra.mrb[0].mxu0 %v594
      %v1045 = vpop.f32.mrb[0].mxu0
      %v1046 = vadd.f32 %v949, %v1045
      %v1047 = vpop.f32.mrb[0].mxu0
      %v1048 = vpop.f32.mrb[0].mxu0
      %v1049 = vadd.f32 %v952, %v1048
      %v1050 = vpop.f32.mrb[0].mxu0
      %1051 = vmatprep.mubr.bf16.mxu0 %v600
      %1052 = vmatmul.mubr.bf16.gmra.mrb[0].mxu0 %v599
      %v1053 = vpop.f32.mrb[0].mxu0
      %v1054 = vadd.f32 %v957, %v1053
      %v1055 = vpop.f32.mrb[0].mxu0
      %v1056 = vpop.f32.mrb[0].mxu0
      %v1057 = vadd.f32 %v960, %v1056
      %v1058 = vpop.f32.mrb[0].mxu0
      %1059 = vmatprep.mubr.bf16.mxu0 %v605
      %1060 = vmatmul.mubr.bf16.gmra.mrb[0].mxu0 %v604
      %v1061 = vpop.f32.mrb[0].mxu0
      %v1062 = vadd.f32 %v965, %v1061
      %v1063 = vpop.f32.mrb[0].mxu0
      %v1064 = vpop.f32.mrb[0].mxu0
      %v1065 = vadd.f32 %v968, %v1064
      %v1066 = vpop.f32.mrb[0].mxu0
      %1067 = vmatprep.mubr.bf16.mxu0 %v610
      %1068 = vmatmul.mubr.bf16.gmra.mrb[0].mxu0 %v609
      %v1069 = vpop.f32.mrb[0].mxu0
      %v1070 = vadd.f32 %v973, %v1069
      %v1071 = vpop.f32.mrb[0].mxu0
      %v1072 = vpop.f32.mrb[0].mxu0
      %v1073 = vadd.f32 %v976, %v1072
      %v1074 = vpop.f32.mrb[0].mxu0
      %1075 = vmatprep.mubr.bf16.mxu0 %v615
      %1076 = vmatmul.mubr.bf16.gmra.mrb[0].mxu0 %v614
      %v1077 = vpop.f32.mrb[0].mxu0
      %v1078 = vadd.f32 %v981, %v1077
      %v1079 = vpop.f32.mrb[0].mxu0
      %v1080 = vpop.f32.mrb[0].mxu0
      %v1081 = vadd.f32 %v984, %v1080
      %v1082 = vpop.f32.mrb[0].mxu0
      %1083 = vdwg.mxu0
      %1084 = vmatprep.subr.bf16.mxu0 0
      %1085 = vmatpush1.bf16.msra.mxu0 %v825
      %1086 = vmatprep.subr.bf16.mxu0 0
      %1087 = vmatpush1.bf16.msra.mxu0 %v826
      %1088 = vmatprep.subr.bf16.mxu0 0
      %1089 = vmatpush1.bf16.msra.mxu0 %v827
      %1090 = vmatprep.subr.bf16.mxu0 0
      %1091 = vmatpush1.bf16.msra.mxu0 %v828
      %1092 = vmatprep.subr.bf16.mxu0 0
      %1093 = vmatpush1.bf16.msra.mxu0 0
      %1094 = vmatprep.subr.bf16.mxu0 0
      %1095 = vmatpush1.bf16.msra.mxu0 0
      %1096 = vmatprep.subr.bf16.mxu0 0
      %1097 = vmatpush1.bf16.msra.mxu0 0
      %1098 = vmatprep.subr.bf16.mxu0 0
      %1099 = vmatpush1.bf16.msra.mxu0 0
      %1100 = vmatprep.subr.bf16.mxu0 0
      %1101 = vmatpush1.bf16.msra.mxu0 0
      %1102 = vmatprep.subr.bf16.mxu0 0
      %1103 = vmatpush1.bf16.msra.mxu0 0
      %1104 = vmatprep.subr.bf16.mxu0 0
      %1105 = vmatpush1.bf16.msra.mxu0 0
      %1106 = vmatprep.subr.bf16.mxu0 0
      %1107 = vmatpush1.bf16.msra.mxu0 0
      %1108 = vmatprep.subr.bf16.mxu0 0
      %1109 = vmatpush1.bf16.msra.mxu0 0
      %1110 = vmatprep.subr.bf16.mxu0 0
      %1111 = vmatpush1.bf16.msra.mxu0 0
      %1112 = vmatprep.subr.bf16.mxu0 0
      %1113 = vmatpush1.bf16.msra.mxu0 0
      %1114 = vmatprep.subr.bf16.mxu0 0
      %1115 = vmatpush1.bf16.msra.mxu0 0
      %1116 = vmatprep.mubr.bf16.mxu0 0
      %1117 = vmatmul.mubr.bf16.gmra.mrb[0].mxu0 %v867
      %v1118 = vpop.f32.mrb[0].mxu0
      %v1119 = vadd.f32 %v1022, %v1118
      %v1120 = vpop.f32.mrb[0].mxu0
      %v1121 = vpop.f32.mrb[0].mxu0
      %v1122 = vadd.f32 %v1025, %v1121
      %v1123 = vpop.f32.mrb[0].mxu0
      %1124 = vmatprep.mubr.bf16.mxu0 0
      %1125 = vmatmul.mubr.bf16.gmra.mrb[0].mxu0 %v870
      %v1126 = vpop.f32.mrb[0].mxu0
      %v1127 = vadd.f32 %v1030, %v1126
      %v1128 = vpop.f32.mrb[0].mxu0
      %v1129 = vpop.f32.mrb[0].mxu0
      %v1130 = vadd.f32 %v1033, %v1129
      %v1131 = vpop.f32.mrb[0].mxu0
      %1132 = vmatprep.mubr.bf16.mxu0 0
      %1133 = vmatmul.mubr.bf16.gmra.mrb[0].mxu0 %v873
      %v1134 = vpop.f32.mrb[0].mxu0
      %v1135 = vadd.f32 %v1038, %v1134
      %v1136 = vpop.f32.mrb[0].mxu0
      %v1137 = vpop.f32.mrb[0].mxu0
      %v1138 = vadd.f32 %v1041, %v1137
      %v1139 = vpop.f32.mrb[0].mxu0
      %1140 = vmatprep.mubr.bf16.mxu0 0
      %1141 = vmatmul.mubr.bf16.gmra.mrb[0].mxu0 %v876
      %v1142 = vpop.f32.mrb[0].mxu0
      %v1143 = vadd.f32 %v1046, %v1142
      %v1144 = vpop.f32.mrb[0].mxu0
      %v1145 = vpop.f32.mrb[0].mxu0
      %v1146 = vadd.f32 %v1049, %v1145
      %v1147 = vpop.f32.mrb[0].mxu0
      %1148 = vmatprep.mubr.bf16.mxu0 0
      %1149 = vmatmul.mubr.bf16.gmra.mrb[0].mxu0 %v879
      %v1150 = vpop.f32.mrb[0].mxu0
      %v1151 = vadd.f32 %v1054, %v1150
      %v1152 = vpop.f32.mrb[0].mxu0
      %v1153 = vpop.f32.mrb[0].mxu0
      %v1154 = vadd.f32 %v1057, %v1153
      %v1155 = vpop.f32.mrb[0].mxu0
      %1156 = vmatprep.mubr.bf16.mxu0 0
      %1157 = vmatmul.mubr.bf16.gmra.mrb[0].mxu0 %v882
      %v1158 = vpop.f32.mrb[0].mxu0
      %v1159 = vadd.f32 %v1062, %v1158
      %v1160 = vpop.f32.mrb[0].mxu0
      %v1161 = vpop.f32.mrb[0].mxu0
      %v1162 = vadd.f32 %v1065, %v1161
      %v1163 = vpop.f32.mrb[0].mxu0
      %1164 = vmatprep.mubr.bf16.mxu0 0
      %1165 = vmatmul.mubr.bf16.gmra.mrb[0].mxu0 %v885
      %v1166 = vpop.f32.mrb[0].mxu0
      %v1167 = vadd.f32 %v1070, %v1166
      %v1168 = vpop.f32.mrb[0].mxu0
      %v1169 = vpop.f32.mrb[0].mxu0
      %v1170 = vadd.f32 %v1073, %v1169
      %v1171 = vpop.f32.mrb[0].mxu0
      %1172 = vmatprep.mubr.bf16.mxu0 0
      %1173 = vmatmul.mubr.bf16.gmra.mrb[0].mxu0 %v888
      %v1174 = vpop.f32.mrb[0].mxu0
      %v1175 = vadd.f32 %v1078, %v1174
      %v1176 = vpop.f32.mrb[0].mxu0
      %v1177 = vpop.f32.mrb[0].mxu0
      %v1178 = vadd.f32 %v1081, %v1177
      %v1179 = vpop.f32.mrb[0].mxu0
      %1180 = vdwg.mxu0
      %p1181 = scmp.eq.s32.totalorder %s20, 0
      // Predicated region
      $region41: #{generator_forward.6} parent=39 // pred_check
        %p1182 = pneg %p1181
      $region42: #{generator_forward.6} parent=39 // pred_check_branch
        %1184 = sbr.rel (%p1182) target = $region44
      $region43: #{generator_forward.6} parent=39 // pred_region
        %p1185 = scmp.eq.s32.totalorder %s21, 0
        // Predicated region
        $region45: #{generator_forward.6} parent=43 // pred_check
          %p1186 = pneg %p1185
        $region46: #{generator_forward.6} parent=43 // pred_check_branch
          %1188 = sbr.rel (%p1186) target = $region48
        $region47: #{generator_forward.6} parent=43 // pred_region
          %vm1189 = vcmask 7168
          %1190 = vst.msk [vmem:[#allocation2] sm:$0xff] %vm1189, 0.0
          %1191 = vst.msk [vmem:[#allocation2 + $0x8] sm:$0xff] %vm1189, 0.0
          %1192 = vst.msk [vmem:[#allocation2 + $0x10] sm:$0xff] %vm1189, 0.0
          %1193 = vst.msk [vmem:[#allocation2 + $0x18] sm:$0xff] %vm1189, 0.0
          %1194 = vst.msk [vmem:[#allocation3] sm:$0xff] %vm1189, 0.0
          %1195 = vst.msk [vmem:[#allocation3 + $0x8] sm:$0xff] %vm1189, 0.0
          %1196 = vst.msk [vmem:[#allocation3 + $0x10] sm:$0xff] %vm1189, 0.0
          %1197 = vst.msk [vmem:[#allocation3 + $0x18] sm:$0xff] %vm1189, 0.0
        $region48: #{generator_forward.6} parent=43 // pred_fallthru
          _
        %vm1198 = vcmask 64512
        %v1199 = vsel %vm1198, %v1119, 0.0
        %1200 = vadd.xlane.f32.xlu0 %v1199
        %v1201 = vpop.xlane.xlu0 %1200
        %v1202 = vsel %vm1198, %v1122, 0.0
        %1203 = vadd.xlane.f32.xlu0 %v1202
        %v1204 = vpop.xlane.xlu0 %1203
        %v1205 = vsel %vm1198, %v1127, 0.0
        %1206 = vadd.xlane.f32.xlu0 %v1205
        %v1207 = vpop.xlane.xlu0 %1206
        %v1208 = vsel %vm1198, %v1130, 0.0
        %1209 = vadd.xlane.f32.xlu0 %v1208
        %v1210 = vpop.xlane.xlu0 %1209
        %v1211 = vsel %vm1198, %v1135, 0.0
        %1212 = vadd.xlane.f32.xlu0 %v1211
        %v1213 = vpop.xlane.xlu0 %1212
        %v1214 = vsel %vm1198, %v1138, 0.0
        %1215 = vadd.xlane.f32.xlu0 %v1214
        %v1216 = vpop.xlane.xlu0 %1215
        %v1217 = vsel %vm1198, %v1143, 0.0
        %1218 = vadd.xlane.f32.xlu0 %v1217
        %v1219 = vpop.xlane.xlu0 %1218
        %v1220 = vsel %vm1198, %v1146, 0.0
        %1221 = vadd.xlane.f32.xlu0 %v1220
        %v1222 = vpop.xlane.xlu0 %1221
        %v1223 = vsel %vm1198, %v1151, 0.0
        %1224 = vadd.xlane.f32.xlu0 %v1223
        %v1225 = vpop.xlane.xlu0 %1224
        %v1226 = vsel %vm1198, %v1154, 0.0
        %1227 = vadd.xlane.f32.xlu0 %v1226
        %v1228 = vpop.xlane.xlu0 %1227
        %v1229 = vsel %vm1198, %v1159, 0.0
        %1230 = vadd.xlane.f32.xlu0 %v1229
        %v1231 = vpop.xlane.xlu0 %1230
        %v1232 = vsel %vm1198, %v1162, 0.0
        %1233 = vadd.xlane.f32.xlu0 %v1232
        %v1234 = vpop.xlane.xlu0 %1233
        %v1235 = vsel %vm1198, %v1167, 0.0
        %1236 = vadd.xlane.f32.xlu0 %v1235
        %v1237 = vpop.xlane.xlu0 %1236
        %v1238 = vsel %vm1198, %v1170, 0.0
        %1239 = vadd.xlane.f32.xlu0 %v1238
        %v1240 = vpop.xlane.xlu0 %1239
        %v1241 = vsel %vm1198, %v1175, 0.0
        %1242 = vadd.xlane.f32.xlu0 %v1241
        %v1243 = vpop.xlane.xlu0 %1242
        %v1244 = vsel %vm1198, %v1178, 0.0
        %1245 = vadd.xlane.f32.xlu0 %v1244
        %v1246 = vpop.xlane.xlu0 %1245
        %v1247 = vmul.f32 %v1119, %v1119
        %v1248 = vmul.f32 %v1122, %v1122
        %v1249 = vmul.f32 %v1127, %v1127
        %v1250 = vmul.f32 %v1130, %v1130
        %v1251 = vmul.f32 %v1135, %v1135
        %v1252 = vmul.f32 %v1138, %v1138
        %v1253 = vmul.f32 %v1143, %v1143
        %v1254 = vmul.f32 %v1146, %v1146
        %v1255 = vmul.f32 %v1151, %v1151
        %v1256 = vmul.f32 %v1154, %v1154
        %v1257 = vmul.f32 %v1159, %v1159
        %v1258 = vmul.f32 %v1162, %v1162
        %v1259 = vmul.f32 %v1167, %v1167
        %v1260 = vmul.f32 %v1170, %v1170
        %v1261 = vmul.f32 %v1175, %v1175
        %v1262 = vmul.f32 %v1178, %v1178
        %v1263 = vsel %vm1198, %v1247, 0.0
        %1264 = vadd.xlane.f32.xlu0 %v1263
        %v1265 = vpop.xlane.xlu0 %1264
        %v1266 = vsel %vm1198, %v1248, 0.0
        %1267 = vadd.xlane.f32.xlu0 %v1266
        %v1268 = vpop.xlane.xlu0 %1267
        %v1269 = vsel %vm1198, %v1249, 0.0
        %1270 = vadd.xlane.f32.xlu0 %v1269
        %v1271 = vpop.xlane.xlu0 %1270
        %v1272 = vsel %vm1198, %v1250, 0.0
        %1273 = vadd.xlane.f32.xlu0 %v1272
        %v1274 = vpop.xlane.xlu0 %1273
        %v1275 = vsel %vm1198, %v1251, 0.0
        %1276 = vadd.xlane.f32.xlu0 %v1275
        %v1277 = vpop.xlane.xlu0 %1276
        %v1278 = vsel %vm1198, %v1252, 0.0
        %1279 = vadd.xlane.f32.xlu0 %v1278
        %v1280 = vpop.xlane.xlu0 %1279
        %v1281 = vsel %vm1198, %v1253, 0.0
        %1282 = vadd.xlane.f32.xlu0 %v1281
        %v1283 = vpop.xlane.xlu0 %1282
        %v1284 = vsel %vm1198, %v1254, 0.0
        %1285 = vadd.xlane.f32.xlu0 %v1284
        %v1286 = vpop.xlane.xlu0 %1285
        %v1287 = vsel %vm1198, %v1255, 0.0
        %1288 = vadd.xlane.f32.xlu0 %v1287
        %v1289 = vpop.xlane.xlu0 %1288
        %v1290 = vsel %vm1198, %v1256, 0.0
        %1291 = vadd.xlane.f32.xlu0 %v1290
        %v1292 = vpop.xlane.xlu0 %1291
        %v1293 = vsel %vm1198, %v1257, 0.0
        %1294 = vadd.xlane.f32.xlu0 %v1293
        %v1295 = vpop.xlane.xlu0 %1294
        %v1296 = vsel %vm1198, %v1258, 0.0
        %1297 = vadd.xlane.f32.xlu0 %v1296
        %v1298 = vpop.xlane.xlu0 %1297
        %v1299 = vsel %vm1198, %v1259, 0.0
        %1300 = vadd.xlane.f32.xlu0 %v1299
        %v1301 = vpop.xlane.xlu0 %1300
        %v1302 = vsel %vm1198, %v1260, 0.0
        %1303 = vadd.xlane.f32.xlu0 %v1302
        %v1304 = vpop.xlane.xlu0 %1303
        %v1305 = vsel %vm1198, %v1261, 0.0
        %1306 = vadd.xlane.f32.xlu0 %v1305
        %v1307 = vpop.xlane.xlu0 %1306
        %v1308 = vsel %vm1198, %v1262, 0.0
        %1309 = vadd.xlane.f32.xlu0 %v1308
        %v1310 = vpop.xlane.xlu0 %1309
        %v1311 = vld [vmem:[#allocation2] sm:$0xff]
        %v1312 = vld [vmem:[#allocation2 + $0x8] sm:$0xff]
        %v1313 = vld [vmem:[#allocation2 + $0x10] sm:$0xff]
        %v1314 = vld [vmem:[#allocation2 + $0x18] sm:$0xff]
        %v1315 = vadd.f32 %v1201, %v1213
        %v1316 = vadd.f32 %v1204, %v1216
        %v1317 = vadd.f32 %v1207, %v1219
        %v1318 = vadd.f32 %v1210, %v1222
        %v1319 = vadd.f32 %v1315, %v1225
        %v1320 = vadd.f32 %v1316, %v1228
        %v1321 = vadd.f32 %v1317, %v1231
        %v1322 = vadd.f32 %v1318, %v1234
        %v1323 = vadd.f32 %v1319, %v1237
        %v1324 = vadd.f32 %v1320, %v1240
        %v1325 = vadd.f32 %v1321, %v1243
        %v1326 = vadd.f32 %v1322, %v1246
        %v1327 = vadd.f32 %v1311, %v1323
        %v1328 = vadd.f32 %v1312, %v1324
        %v1329 = vadd.f32 %v1313, %v1325
        %v1330 = vadd.f32 %v1314, %v1326
        %vm1331 = vcmask 7168
        %1332 = vst.msk [vmem:[#allocation2] sm:$0xff] %vm1331, %v1327
        %1333 = vst.msk [vmem:[#allocation2 + $0x8] sm:$0xff] %vm1331, %v1328
        %1334 = vst.msk [vmem:[#allocation2 + $0x10] sm:$0xff] %vm1331, %v1329
        %1335 = vst.msk [vmem:[#allocation2 + $0x18] sm:$0xff] %vm1331, %v1330
        %v1336 = vld [vmem:[#allocation3] sm:$0xff]
        %v1337 = vld [vmem:[#allocation3 + $0x8] sm:$0xff]
        %v1338 = vld [vmem:[#allocation3 + $0x10] sm:$0xff]
        %v1339 = vld [vmem:[#allocation3 + $0x18] sm:$0xff]
        %v1340 = vadd.f32 %v1265, %v1277
        %v1341 = vadd.f32 %v1268, %v1280
        %v1342 = vadd.f32 %v1271, %v1283
        %v1343 = vadd.f32 %v1274, %v1286
        %v1344 = vadd.f32 %v1340, %v1289
        %v1345 = vadd.f32 %v1341, %v1292
        %v1346 = vadd.f32 %v1342, %v1295
        %v1347 = vadd.f32 %v1343, %v1298
        %v1348 = vadd.f32 %v1344, %v1301
        %v1349 = vadd.f32 %v1345, %v1304
        %v1350 = vadd.f32 %v1346, %v1307
        %v1351 = vadd.f32 %v1347, %v1310
        %v1352 = vadd.f32 %v1336, %v1348
        %v1353 = vadd.f32 %v1337, %v1349
        %v1354 = vadd.f32 %v1338, %v1350
        %v1355 = vadd.f32 %v1339, %v1351
        %1356 = vst.msk [vmem:[#allocation3] sm:$0xff] %vm1331, %v1352
        %1357 = vst.msk [vmem:[#allocation3 + $0x8] sm:$0xff] %vm1331, %v1353
        %1358 = vst.msk [vmem:[#allocation3 + $0x10] sm:$0xff] %vm1331, %v1354
        %1359 = vst.msk [vmem:[#allocation3 + $0x18] sm:$0xff] %vm1331, %v1355
        // Predicated region
        $region49: #{generator_forward.6} parent=43 // pred_check
          %p1360 = pneg %p1185
        $region50: #{generator_forward.6} parent=43 // pred_check_branch
          %1362 = sbr.rel (%p1360) target = $region52
        $region51: #{generator_forward.6} parent=43 // pred_region
          %v1363 = vld [vmem:[#allocation2] sm:$0xff]
          %v1364 = vld [vmem:[#allocation2 + $0x8] sm:$0xff]
          %v1365 = vld [vmem:[#allocation2 + $0x10] sm:$0xff]
          %v1366 = vld [vmem:[#allocation2 + $0x18] sm:$0xff]
          %v1367 = vmul.f32 %v1363, 0.03125
          %v1368 = vmul.f32 %v1364, 0.03125
          %v1369 = vmul.f32 %v1365, 0.03125
          %v1370 = vmul.f32 %v1366, 0.03125
          %v1371 = vld [vmem:[#allocation3] sm:$0xff]
          %v1372 = vld [vmem:[#allocation3 + $0x8] sm:$0xff]
          %v1373 = vld [vmem:[#allocation3 + $0x10] sm:$0xff]
          %v1374 = vld [vmem:[#allocation3 + $0x18] sm:$0xff]
          %v1375 = vmul.f32 %v1371, 0.03125
          %v1376 = vmul.f32 %v1372, 0.03125
          %v1377 = vmul.f32 %v1373, 0.03125
          %v1378 = vmul.f32 %v1374, 0.03125
          %v1379 = vmul.f32 %v1367, %v1367
          %v1380 = vmul.f32 %v1368, %v1368
          %v1381 = vmul.f32 %v1369, %v1369
          %v1382 = vmul.f32 %v1370, %v1370
          %v1383 = vsub.f32 %v1375, %v1379
          %v1384 = vsub.f32 %v1376, %v1380
          %v1385 = vsub.f32 %v1377, %v1381
          %v1386 = vsub.f32 %v1378, %v1382
          %v1387 = vmax.f32 %v1383, 0.0
          %v1388 = vmax.f32 %v1384, 0.0
          %v1389 = vmax.f32 %v1385, 0.0
          %v1390 = vmax.f32 %v1386, 0.0
          %v1391 = vadd.f32 %v1387, 1e-05
          %v1392 = vadd.f32 %v1388, 1e-05
          %v1393 = vadd.f32 %v1389, 1e-05
          %v1394 = vadd.f32 %v1390, 1e-05
          %v1395 = vrsqrt.pop %v1391
          %v1396 = vrsqrt.pop %v1392
          %v1397 = vrsqrt.pop %v1393
          %v1398 = vrsqrt.pop %v1394
          %v1399 = vld [vmem:[%s3] sm:$0xff]
          %v1400 = vld [vmem:[%s3 + $0x8] sm:$0xff]
          %v1401 = vld [vmem:[%s3 + $0x10] sm:$0xff]
          %v1402 = vld [vmem:[%s3 + $0x18] sm:$0xff]
          %v1403 = vmul.f32 %v1395, %v1399
          %v1404 = vmul.f32 %v1396, %v1400
          %v1405 = vmul.f32 %v1397, %v1401
          %v1406 = vmul.f32 %v1398, %v1402
          %v1407 = vld [vmem:[%s4] sm:$0xff]
          %v1408 = vld [vmem:[%s4 + $0x8] sm:$0xff]
          %v1409 = vld [vmem:[%s4 + $0x10] sm:$0xff]
          %v1410 = vld [vmem:[%s4 + $0x18] sm:$0xff]
          %v1411 = vmul.f32 %v1367, %v1403
          %v1412 = vmul.f32 %v1368, %v1404
          %v1413 = vmul.f32 %v1369, %v1405
          %v1414 = vmul.f32 %v1370, %v1406
          %v1415 = vsub.f32 %v1407, %v1411
          %v1416 = vsub.f32 %v1408, %v1412
          %v1417 = vsub.f32 %v1409, %v1413
          %v1418 = vsub.f32 %v1410, %v1414
          %1419 = vst.msk [vmem:[#allocation4] sm:$0xff] %vm1331, %v1403
          %1420 = vst.msk [vmem:[#allocation4 + $0x8] sm:$0xff] %vm1331, %v1404
          %1421 = vst.msk [vmem:[#allocation4 + $0x10] sm:$0xff] %vm1331, %v1405
          %1422 = vst.msk [vmem:[#allocation4 + $0x18] sm:$0xff] %vm1331, %v1406
          %1423 = vst.msk [vmem:[#allocation4 + $0x20] sm:$0xff] %vm1331, %v1403
          %1424 = vst.msk [vmem:[#allocation4 + $0x28] sm:$0xff] %vm1331, %v1404
          %1425 = vst.msk [vmem:[#allocation4 + $0x30] sm:$0xff] %vm1331, %v1405
          %1426 = vst.msk [vmem:[#allocation4 + $0x38] sm:$0xff] %vm1331, %v1406
          %1427 = vst.msk [vmem:[#allocation4 + $0x40] sm:$0xff] %vm1331, %v1403
          %1428 = vst.msk [vmem:[#allocation4 + $0x48] sm:$0xff] %vm1331, %v1404
          %1429 = vst.msk [vmem:[#allocation4 + $0x50] sm:$0xff] %vm1331, %v1405
          %1430 = vst.msk [vmem:[#allocation4 + $0x58] sm:$0xff] %vm1331, %v1406
          %1431 = vst.msk [vmem:[#allocation4 + $0x60] sm:$0xff] %vm1331, %v1403
          %1432 = vst.msk [vmem:[#allocation4 + $0x68] sm:$0xff] %vm1331, %v1404
          %1433 = vst.msk [vmem:[#allocation4 + $0x70] sm:$0xff] %vm1331, %v1405
          %1434 = vst.msk [vmem:[#allocation4 + $0x78] sm:$0xff] %vm1331, %v1406
          %1435 = vst.msk [vmem:[#allocation5] sm:$0xff] %vm1331, %v1415
          %1436 = vst.msk [vmem:[#allocation5 + $0x8] sm:$0xff] %vm1331, %v1416
          %1437 = vst.msk [vmem:[#allocation5 + $0x10] sm:$0xff] %vm1331, %v1417
          %1438 = vst.msk [vmem:[#allocation5 + $0x18] sm:$0xff] %vm1331, %v1418
          %1439 = vst.msk [vmem:[#allocation5 + $0x20] sm:$0xff] %vm1331, %v1415
          %1440 = vst.msk [vmem:[#allocation5 + $0x28] sm:$0xff] %vm1331, %v1416
          %1441 = vst.msk [vmem:[#allocation5 + $0x30] sm:$0xff] %vm1331, %v1417
          %1442 = vst.msk [vmem:[#allocation5 + $0x38] sm:$0xff] %vm1331, %v1418
          %1443 = vst.msk [vmem:[#allocation5 + $0x40] sm:$0xff] %vm1331, %v1415
          %1444 = vst.msk [vmem:[#allocation5 + $0x48] sm:$0xff] %vm1331, %v1416
          %1445 = vst.msk [vmem:[#allocation5 + $0x50] sm:$0xff] %vm1331, %v1417
          %1446 = vst.msk [vmem:[#allocation5 + $0x58] sm:$0xff] %vm1331, %v1418
          %1447 = vst.msk [vmem:[#allocation5 + $0x60] sm:$0xff] %vm1331, %v1415
          %1448 = vst.msk [vmem:[#allocation5 + $0x68] sm:$0xff] %vm1331, %v1416
          %1449 = vst.msk [vmem:[#allocation5 + $0x70] sm:$0xff] %vm1331, %v1417
          %1450 = vst.msk [vmem:[#allocation5 + $0x78] sm:$0xff] %vm1331, %v1418
        $region52: #{generator_forward.6} parent=43 // pred_fallthru
          _
      $region44: #{generator_forward.6} parent=39 // pred_fallthru
        _
      %p1451 = scmp.eq.s32.totalorder %s20, 1
      // Predicated region
      $region53: #{generator_forward.6} parent=39 // pred_check
        %p1452 = pneg %p1451
      $region54: #{generator_forward.6} parent=39 // pred_check_branch
        %1454 = sbr.rel (%p1452) target = $region56
      $region55: #{generator_forward.6} parent=39 // pred_region
        %v1455 = vld [vmem:[#allocation4] sm:$0xff]
        %v1456 = vld [vmem:[#allocation4 + $0x8] sm:$0xff]
        %v1457 = vld [vmem:[#allocation4 + $0x10] sm:$0xff]
        %v1458 = vld [vmem:[#allocation4 + $0x18] sm:$0xff]
        %v1459 = vld [vmem:[#allocation4 + $0x20] sm:$0xff]
        %v1460 = vld [vmem:[#allocation4 + $0x28] sm:$0xff]
        %v1461 = vld [vmem:[#allocation4 + $0x30] sm:$0xff]
        %v1462 = vld [vmem:[#allocation4 + $0x38] sm:$0xff]
        %v1463 = vld [vmem:[#allocation4 + $0x40] sm:$0xff]
        %v1464 = vld [vmem:[#allocation4 + $0x48] sm:$0xff]
        %v1465 = vld [vmem:[#allocation4 + $0x50] sm:$0xff]
        %v1466 = vld [vmem:[#allocation4 + $0x58] sm:$0xff]
        %v1467 = vld [vmem:[#allocation4 + $0x60] sm:$0xff]
        %v1468 = vld [vmem:[#allocation4 + $0x68] sm:$0xff]
        %v1469 = vld [vmem:[#allocation4 + $0x70] sm:$0xff]
        %v1470 = vld [vmem:[#allocation4 + $0x78] sm:$0xff]
        %1472 = vset.pattern.permute.xlu0 0
        %1473 = vperm.xlu0 %1472, %v1455
        %v1474 = vpop.permute.xlu0 %1473
        %1477 = vset.pattern.permute.xlu0 0
        %1478 = vperm.xlu0 %1477, %v1456
        %v1479 = vpop.permute.xlu0 %1478
        %1482 = vset.pattern.permute.xlu0 0
        %1483 = vperm.xlu0 %1482, %v1457
        %v1484 = vpop.permute.xlu0 %1483
        %1487 = vset.pattern.permute.xlu0 0
        %1488 = vperm.xlu0 %1487, %v1458
        %v1489 = vpop.permute.xlu0 %1488
        %1492 = vset.pattern.permute.xlu0 0
        %1493 = vperm.xlu0 %1492, %v1459
        %v1494 = vpop.permute.xlu0 %1493
        %1497 = vset.pattern.permute.xlu0 0
        %1498 = vperm.xlu0 %1497, %v1460
        %v1499 = vpop.permute.xlu0 %1498
        %1502 = vset.pattern.permute.xlu0 0
        %1503 = vperm.xlu0 %1502, %v1461
        %v1504 = vpop.permute.xlu0 %1503
        %1507 = vset.pattern.permute.xlu0 0
        %1508 = vperm.xlu0 %1507, %v1462
        %v1509 = vpop.permute.xlu0 %1508
        %1512 = vset.pattern.permute.xlu0 0
        %1513 = vperm.xlu0 %1512, %v1463
        %v1514 = vpop.permute.xlu0 %1513
        %1517 = vset.pattern.permute.xlu0 0
        %1518 = vperm.xlu0 %1517, %v1464
        %v1519 = vpop.permute.xlu0 %1518
        %1522 = vset.pattern.permute.xlu0 0
        %1523 = vperm.xlu0 %1522, %v1465
        %v1524 = vpop.permute.xlu0 %1523
        %1527 = vset.pattern.permute.xlu0 0
        %1528 = vperm.xlu0 %1527, %v1466
        %v1529 = vpop.permute.xlu0 %1528
        %1532 = vset.pattern.permute.xlu0 0
        %1533 = vperm.xlu0 %1532, %v1467
        %v1534 = vpop.permute.xlu0 %1533
        %1537 = vset.pattern.permute.xlu0 0
        %1538 = vperm.xlu0 %1537, %v1468
        %v1539 = vpop.permute.xlu0 %1538
        %1542 = vset.pattern.permute.xlu0 0
        %1543 = vperm.xlu0 %1542, %v1469
        %v1544 = vpop.permute.xlu0 %1543
        %1547 = vset.pattern.permute.xlu0 0
        %1548 = vperm.xlu0 %1547, %v1470
        %v1549 = vpop.permute.xlu0 %1548
        %v1551 = vmul.f32 %v1119, %v1474
        %v1552 = vmul.f32 %v1122, %v1479
        %v1553 = vmul.f32 %v1127, %v1484
        %v1554 = vmul.f32 %v1130, %v1489
        %v1555 = vmul.f32 %v1135, %v1494
        %v1556 = vmul.f32 %v1138, %v1499
        %v1557 = vmul.f32 %v1143, %v1504
        %v1558 = vmul.f32 %v1146, %v1509
        %v1559 = vmul.f32 %v1151, %v1514
        %v1560 = vmul.f32 %v1154, %v1519
        %v1561 = vmul.f32 %v1159, %v1524
        %v1562 = vmul.f32 %v1162, %v1529
        %v1563 = vmul.f32 %v1167, %v1534
        %v1564 = vmul.f32 %v1170, %v1539
        %v1565 = vmul.f32 %v1175, %v1544
        %v1566 = vmul.f32 %v1178, %v1549
        %v1567 = vld [vmem:[#allocation5] sm:$0xff]
        %v1568 = vld [vmem:[#allocation5 + $0x8] sm:$0xff]
        %v1569 = vld [vmem:[#allocation5 + $0x10] sm:$0xff]
        %v1570 = vld [vmem:[#allocation5 + $0x18] sm:$0xff]
        %v1571 = vld [vmem:[#allocation5 + $0x20] sm:$0xff]
        %v1572 = vld [vmem:[#allocation5 + $0x28] sm:$0xff]
        %v1573 = vld [vmem:[#allocation5 + $0x30] sm:$0xff]
        %v1574 = vld [vmem:[#allocation5 + $0x38] sm:$0xff]
        %v1575 = vld [vmem:[#allocation5 + $0x40] sm:$0xff]
        %v1576 = vld [vmem:[#allocation5 + $0x48] sm:$0xff]
        %v1577 = vld [vmem:[#allocation5 + $0x50] sm:$0xff]
        %v1578 = vld [vmem:[#allocation5 + $0x58] sm:$0xff]
        %v1579 = vld [vmem:[#allocation5 + $0x60] sm:$0xff]
        %v1580 = vld [vmem:[#allocation5 + $0x68] sm:$0xff]
        %v1581 = vld [vmem:[#allocation5 + $0x70] sm:$0xff]
        %v1582 = vld [vmem:[#allocation5 + $0x78] sm:$0xff]
        %1584 = vset.pattern.permute.xlu0 0
        %1585 = vperm.xlu0 %1584, %v1567
        %v1586 = vpop.permute.xlu0 %1585
        %1589 = vset.pattern.permute.xlu0 0
        %1590 = vperm.xlu0 %1589, %v1568
        %v1591 = vpop.permute.xlu0 %1590
        %1594 = vset.pattern.permute.xlu0 0
        %1595 = vperm.xlu0 %1594, %v1569
        %v1596 = vpop.permute.xlu0 %1595
        %1599 = vset.pattern.permute.xlu0 0
        %1600 = vperm.xlu0 %1599, %v1570
        %v1601 = vpop.permute.xlu0 %1600
        %1604 = vset.pattern.permute.xlu0 0
        %1605 = vperm.xlu0 %1604, %v1571
        %v1606 = vpop.permute.xlu0 %1605
        %1609 = vset.pattern.permute.xlu0 0
        %1610 = vperm.xlu0 %1609, %v1572
        %v1611 = vpop.permute.xlu0 %1610
        %1614 = vset.pattern.permute.xlu0 0
        %1615 = vperm.xlu0 %1614, %v1573
        %v1616 = vpop.permute.xlu0 %1615
        %1619 = vset.pattern.permute.xlu0 0
        %1620 = vperm.xlu0 %1619, %v1574
        %v1621 = vpop.permute.xlu0 %1620
        %1624 = vset.pattern.permute.xlu0 0
        %1625 = vperm.xlu0 %1624, %v1575
        %v1626 = vpop.permute.xlu0 %1625
        %1629 = vset.pattern.permute.xlu0 0
        %1630 = vperm.xlu0 %1629, %v1576
        %v1631 = vpop.permute.xlu0 %1630
        %1634 = vset.pattern.permute.xlu0 0
        %1635 = vperm.xlu0 %1634, %v1577
        %v1636 = vpop.permute.xlu0 %1635
        %1639 = vset.pattern.permute.xlu0 0
        %1640 = vperm.xlu0 %1639, %v1578
        %v1641 = vpop.permute.xlu0 %1640
        %1644 = vset.pattern.permute.xlu0 0
        %1645 = vperm.xlu0 %1644, %v1579
        %v1646 = vpop.permute.xlu0 %1645
        %1649 = vset.pattern.permute.xlu0 0
        %1650 = vperm.xlu0 %1649, %v1580
        %v1651 = vpop.permute.xlu0 %1650
        %1654 = vset.pattern.permute.xlu0 0
        %1655 = vperm.xlu0 %1654, %v1581
        %v1656 = vpop.permute.xlu0 %1655
        %1659 = vset.pattern.permute.xlu0 0
        %1660 = vperm.xlu0 %1659, %v1582
        %v1661 = vpop.permute.xlu0 %1660
        %v1663 = vadd.f32 %v1551, %v1586
        %v1664 = vadd.f32 %v1552, %v1591
        %v1665 = vadd.f32 %v1553, %v1596
        %v1666 = vadd.f32 %v1554, %v1601
        %v1667 = vadd.f32 %v1555, %v1606
        %v1668 = vadd.f32 %v1556, %v1611
        %v1669 = vadd.f32 %v1557, %v1616
        %v1670 = vadd.f32 %v1558, %v1621
        %v1671 = vadd.f32 %v1559, %v1626
        %v1672 = vadd.f32 %v1560, %v1631
        %v1673 = vadd.f32 %v1561, %v1636
        %v1674 = vadd.f32 %v1562, %v1641
        %v1675 = vadd.f32 %v1563, %v1646
        %v1676 = vadd.f32 %v1564, %v1651
        %v1677 = vadd.f32 %v1565, %v1656
        %v1678 = vadd.f32 %v1566, %v1661
        %vm1679 = vcmp.gt.f32.partialorder %v1663, 0.0
        %vm1680 = vcmp.gt.f32.partialorder %v1664, 0.0
        %vm1681 = vcmp.gt.f32.partialorder %v1665, 0.0
        %vm1682 = vcmp.gt.f32.partialorder %v1666, 0.0
        %vm1683 = vcmp.gt.f32.partialorder %v1667, 0.0
        %vm1684 = vcmp.gt.f32.partialorder %v1668, 0.0
        %vm1685 = vcmp.gt.f32.partialorder %v1669, 0.0
        %vm1686 = vcmp.gt.f32.partialorder %v1670, 0.0
        %vm1687 = vcmp.gt.f32.partialorder %v1671, 0.0
        %vm1688 = vcmp.gt.f32.partialorder %v1672, 0.0
        %vm1689 = vcmp.gt.f32.partialorder %v1673, 0.0
        %vm1690 = vcmp.gt.f32.partialorder %v1674, 0.0
        %vm1691 = vcmp.gt.f32.partialorder %v1675, 0.0
        %vm1692 = vcmp.gt.f32.partialorder %v1676, 0.0
        %vm1693 = vcmp.gt.f32.partialorder %v1677, 0.0
        %vm1694 = vcmp.gt.f32.partialorder %v1678, 0.0
        %v1695 = vmul.f32 %v1663, 0.2
        %v1696 = vmul.f32 %v1664, 0.2
        %v1697 = vmul.f32 %v1665, 0.2
        %v1698 = vmul.f32 %v1666, 0.2
        %v1699 = vmul.f32 %v1667, 0.2
        %v1700 = vmul.f32 %v1668, 0.2
        %v1701 = vmul.f32 %v1669, 0.2
        %v1702 = vmul.f32 %v1670, 0.2
        %v1703 = vmul.f32 %v1671, 0.2
        %v1704 = vmul.f32 %v1672, 0.2
        %v1705 = vmul.f32 %v1673, 0.2
        %v1706 = vmul.f32 %v1674, 0.2
        %v1707 = vmul.f32 %v1675, 0.2
        %v1708 = vmul.f32 %v1676, 0.2
        %v1709 = vmul.f32 %v1677, 0.2
        %v1710 = vmul.f32 %v1678, 0.2
        %v1711 = vsel %vm1679, %v1663, %v1695
        %v1712 = vsel %vm1680, %v1664, %v1696
        %v1713 = vsel %vm1681, %v1665, %v1697
        %v1714 = vsel %vm1682, %v1666, %v1698
        %v1715 = vsel %vm1683, %v1667, %v1699
        %v1716 = vsel %vm1684, %v1668, %v1700
        %v1717 = vsel %vm1685, %v1669, %v1701
        %v1718 = vsel %vm1686, %v1670, %v1702
        %v1719 = vsel %vm1687, %v1671, %v1703
        %v1720 = vsel %vm1688, %v1672, %v1704
        %v1721 = vsel %vm1689, %v1673, %v1705
        %v1722 = vsel %vm1690, %v1674, %v1706
        %v1723 = vsel %vm1691, %v1675, %v1707
        %v1724 = vsel %vm1692, %v1676, %v1708
        %v1725 = vsel %vm1693, %v1677, %v1709
        %v1726 = vsel %vm1694, %v1678, %v1710
        %v1727 = vpack.c.bf16 %v1712, %v1711
        %v1728 = vpack.c.bf16 %v1714, %v1713
        %v1729 = vpack.c.bf16 %v1716, %v1715
        %v1730 = vpack.c.bf16 %v1718, %v1717
        %v1731 = vpack.c.bf16 %v1720, %v1719
        %v1732 = vpack.c.bf16 %v1722, %v1721
        %v1733 = vpack.c.bf16 %v1724, %v1723
        %v1734 = vpack.c.bf16 %v1726, %v1725
        %v1743 = vunpack.c.l.b16 %v1727
        %v1744 = vunpack.c.h.b16 %v1727
        %v1745 = vunpack.c.l.b16 %v1728
        %v1746 = vunpack.c.h.b16 %v1728
        %v1747 = vunpack.c.l.b16 %v1729
        %v1748 = vunpack.c.h.b16 %v1729
        %v1749 = vunpack.c.l.b16 %v1730
        %v1750 = vunpack.c.h.b16 %v1730
        %v1751 = vunpack.c.l.b16 %v1731
        %v1752 = vunpack.c.h.b16 %v1731
        %v1753 = vunpack.c.l.b16 %v1732
        %v1754 = vunpack.c.h.b16 %v1732
        %v1755 = vunpack.c.l.b16 %v1733
        %v1756 = vunpack.c.h.b16 %v1733
        %v1757 = vunpack.c.l.b16 %v1734
        %v1758 = vunpack.c.h.b16 %v1734
        %v1759 = vpack.c.b16 %v1743, %v1743
        %v1760 = vpack.c.b16 %v1744, %v1744
        %v1761 = vpack.c.b16 %v1745, %v1745
        %v1762 = vpack.c.b16 %v1746, %v1746
        %v1763 = vpack.c.b16 %v1747, %v1747
        %v1764 = vpack.c.b16 %v1748, %v1748
        %v1765 = vpack.c.b16 %v1749, %v1749
        %v1766 = vpack.c.b16 %v1750, %v1750
        %v1767 = vpack.c.b16 %v1751, %v1751
        %v1768 = vpack.c.b16 %v1752, %v1752
        %v1769 = vpack.c.b16 %v1753, %v1753
        %v1770 = vpack.c.b16 %v1754, %v1754
        %v1771 = vpack.c.b16 %v1755, %v1755
        %v1772 = vpack.c.b16 %v1756, %v1756
        %v1773 = vpack.c.b16 %v1757, %v1757
        %v1774 = vpack.c.b16 %v1758, %v1758
        %vm1791 = vcmask 60416
        %1792 = vst.msk [vmem:[%s231] sm:$0xf] %vm1791, %v1759
        %1793 = vst.msk [vmem:[%s231 + $0x4] sm:$0xf] %vm1791, %v1760
        %1794 = vst.msk [vmem:[%s231 + $0x8] sm:$0xf] %vm1791, %v1761
        %1795 = vst.msk [vmem:[%s231 + $0xc] sm:$0xf] %vm1791, %v1762
        %1796 = vst.msk [vmem:[%s231 + $0x10] sm:$0xf] %vm1791, %v1763
        %1797 = vst.msk [vmem:[%s231 + $0x14] sm:$0xf] %vm1791, %v1764
        %1798 = vst.msk [vmem:[%s231 + $0x18] sm:$0xf] %vm1791, %v1765
        %1799 = vst.msk [vmem:[%s231 + $0x1c] sm:$0xf] %vm1791, %v1766
        %1800 = vst.msk [vmem:[%s231 + $0x20] sm:$0xf] %vm1791, %v1767
        %1801 = vst.msk [vmem:[%s231 + $0x24] sm:$0xf] %vm1791, %v1768
        %1802 = vst.msk [vmem:[%s231 + $0x28] sm:$0xf] %vm1791, %v1769
        %1803 = vst.msk [vmem:[%s231 + $0x2c] sm:$0xf] %vm1791, %v1770
        %1804 = vst.msk [vmem:[%s231 + $0x30] sm:$0xf] %vm1791, %v1771
        %1805 = vst.msk [vmem:[%s231 + $0x34] sm:$0xf] %vm1791, %v1772
        %1806 = vst.msk [vmem:[%s231 + $0x38] sm:$0xf] %vm1791, %v1773
        %1807 = vst.msk [vmem:[%s231 + $0x3c] sm:$0xf] %vm1791, %v1774
      $region56: #{generator_forward.6} parent=39 // pred_fallthru
        _
      %p1808 = scmp.lt.s32.totalorder %s21, 0
      %s1809 = scalar_select %p1808, %s21, 0
      %s1810 = smul.addr %s1809, 4
      %s1811 = scalar_lea.vmem %s5, %s1810
      // Predicated region
      $region57: #{generator_forward.6} parent=39 // pred_check
        %p1812 = pneg %p156
      $region58: #{generator_forward.6} parent=39 // pred_check_branch
        %1814 = sbr.rel (%p1812) target = $region60
      $region59: #{generator_forward.6} parent=39 // pred_region
        _
      $region60: #{generator_forward.6} parent=39 // pred_fallthru
        _
      // Predicated region
      $region61: #{generator_forward.6} parent=39 // pred_check
        %p1815 = pneg %p156
      $region62: #{generator_forward.6} parent=39 // pred_check_branch
        %1817 = sbr.rel (%p1815) target = $region64
      $region63: #{generator_forward.6} parent=39 // pred_region
        %p1818 = scmp.lt.s32.totalorder %s21, 0
        %s1819 = scalar_select %p1818, %s21, 0
        %s1820 = smul.addr %s1819, 4
        %s1821 = scalar_lea.vmem %s5, %s1820
      $region64: #{generator_forward.6} parent=39 // pred_fallthru
        _
    $region40: #{generator_forward.6} parent=5 // pred_fallthru
      _
    %p1822 = scmp.le.s32.totalorder 2, %s11
    // Predicated region
    $region65: #{generator_forward.6} parent=5 // pred_check
      %p1823 = pneg %p1822
    $region66: #{generator_forward.6} parent=5 // pred_check_branch
      %1825 = sbr.rel (%p1823) target = $region68
    $region67: #{generator_forward.6} parent=5 // pred_region
      %s1826 = ssub.s32 %s11, 2
    $region68: #{generator_forward.6} parent=5 // pred_fallthru
      _
  $region6: #{generator_forward.6} parent=0 // loop_footer
    %s15 = sadd.s32 1, %s11
  $region7: #{generator_forward.6} parent=0 // loop_footer_branch
    %10 = sbr.rel target = $region3
  $region8: #{generator_forward.6} parent=0 // loop_exit
    _

// kernel: generator_forward.8
$region0: #{generator_forward.8}
  #allocation0 [shape = 'u32[]', space=smem, size = 0x4, offset = 0x4, fixed_abs, tag = 'smem constant byte address 0x4 - core index']
  #allocation1 [shape = 'u32[144,128]{1,0:T(1,128)}', space=vmem, size = 0x12000, scoped, tag = 'internal scratch']
  #allocation2 [shape = 'f32[8,1]{1,0:T(8,128)}', space=vmem, size = 0x1000, scoped, tag = 'scratch operand']
  #allocation3 [shape = 'f32[8,1]{1,0:T(8,128)}', space=vmem, size = 0x1000, scoped, tag = 'scratch operand']
  #allocation4 [shape = 'f32[32,1]{1,0:T(8,128)}', space=vmem, size = 0x4000, scoped, tag = 'scratch operand']
  #allocation5 [shape = 'f32[32,1]{1,0:T(8,128)}', space=vmem, size = 0x4000, scoped, tag = 'scratch operand']
  %s0 = inlined_call_operand.vmem [shape: bf16[144,128], index: 0, kind: input, shape index: {}]
  %s1 = inlined_call_operand.vmem [shape: bf16[32,144], index: 1, kind: input, shape index: {}]
  %s2 = inlined_call_operand.vmem [shape: f32[32,1], index: 2, kind: input, shape index: {}]
  %s3 = inlined_call_operand.vmem [shape: f32[8,1], index: 3, kind: input, shape index: {}]
  %s4 = inlined_call_operand.vmem [shape: f32[8,1], index: 4, kind: input, shape index: {}]
  %s5 = inlined_call_operand.vmem [shape: bf16[32,128], index: 5, kind: output, shape index: {}]
  %s6 = sld [smem:[#allocation0]]
  $region69: #{generator_forward.8} parent=0
    _
  %s8 = ssub.s32 1, %s6
  %s9 = scalar_select 0, %s8, %s6
  loop: start=0, step=1, limit=4
  $region2: #{generator_forward.8} parent=0 // loop_pre_header
    _
  $region3: #{generator_forward.8} parent=0 // loop_header
    %s11 = sphi 0, %s15
    %p12 = scmp.ge.s32.totalorder %s11, 4
    %s18 = sphi 0, %s30
    %s19 = sphi 0, %s26
    %s20 = sphi 0, %s18
    %s21 = sphi 0, %s19
    %s22 = sphi 0, %s20
    %s23 = sphi 0, %s21
    %s33 = sphi 0, %s35
    %s36 = sphi 0, %s33
    %s37 = sphi 0, %s36
    %s53 = sphi 0, %s37
    %s57 = sphi 0, %s57
    %s59 = sphi 0, %s57
    %s60 = sphi 0, %s59
    %s74 = sphi 0, %s60
    %s78 = sphi 0, %s78
    %s80 = sphi 0, %s78
    %s81 = sphi 0, %s80
    %s95 = sphi 0, %s81
    %s99 = sphi 0, %s99
    %s101 = sphi 0, %s99
    %s102 = sphi 0, %s101
    %s116 = sphi 0, %s102
    %s120 = sphi 0, %s120
    %s122 = sphi 0, %s120
    %s123 = sphi 0, %s122
    %s137 = sphi 0, %s123
    %s143 = sphi 0, %s145
    %s146 = sphi 0, %s143
    %s147 = sphi 0, %s146
    %s163 = sphi 0, %s147
  $region4: #{generator_forward.8} parent=0 // loop_header_branch
    %14 = sbr.rel (%p12) target = $region8
  $region5: #{generator_forward.8} parent=0 // loop_body
    %s16 = ssub.s32 %s11, 1
    %s17 = ssub.s32 %s11, 2
    %s24 = sadd.s32 1, %s19
    %p25 = scmp.ge.s32.totalorder %s24, 1
    %s26 = scalar_select %p25, 0, %s24
    %s27 = sadd.s32 1, %s18
    %s28 = scalar_select %p25, %s27, %s18
    %p29 = scmp.ge.s32.totalorder %s28, 2
    %s30 = scalar_select %p29, 0, %s28
    %s31 = ssub.s32 %s19, %s26
    %p32 = scmp.eq.s32.totalorder %s31, 0
    %s34 = sadd.s32 %s33, 1
    %s35 = scalar_select %p32, %s33, %s34
    %p38 = pneg %p32
    %p39 = scmp.eq.s32.totalorder %s11, 1
    %p40 = por %p38, %p39
    %p41 = scmp.ne.s32.totalorder %s33, %s36
    %p42 = scmp.eq.s32.totalorder %s11, 0
    %p43 = por %p41, %p42
    %p44 = scmp.ne.s32.totalorder %s33, %s36
    %p45 = scmp.eq.s32.totalorder %s16, 1
    %p46 = por %p44, %p45
    %p47 = scmp.ne.s32.totalorder %s36, %s37
    %p48 = scmp.eq.s32.totalorder %s16, 0
    %p49 = por %p47, %p48
    %p50 = scmp.ne.s32.totalorder %s36, %s37
    %p51 = scmp.eq.s32.totalorder %s17, 1
    %p52 = por %p50, %p51
    %p54 = scmp.ne.s32.totalorder %s37, %s53
    %p55 = scmp.eq.s32.totalorder %s17, 0
    %p56 = por %p54, %p55
    %s58 = sadd.s32 %s57, 1
    %p61 = scmp.eq.s32.totalorder %s11, 1
    %p62 = scmp.ne.s32.totalorder %s57, %s59
    %p63 = scmp.eq.s32.totalorder %s11, 0
    %p64 = por %p62, %p63
    %p65 = scmp.ne.s32.totalorder %s57, %s59
    %p66 = scmp.eq.s32.totalorder %s16, 1
    %p67 = por %p65, %p66
    %p68 = scmp.ne.s32.totalorder %s59, %s60
    %p69 = scmp.eq.s32.totalorder %s16, 0
    %p70 = por %p68, %p69
    %p71 = scmp.ne.s32.totalorder %s59, %s60
    %p72 = scmp.eq.s32.totalorder %s17, 1
    %p73 = por %p71, %p72
    %p75 = scmp.ne.s32.totalorder %s60, %s74
    %p76 = scmp.eq.s32.totalorder %s17, 0
    %p77 = por %p75, %p76
    %s79 = sadd.s32 %s78, 1
    %p82 = scmp.eq.s32.totalorder %s11, 1
    %p83 = scmp.ne.s32.totalorder %s78, %s80
    %p84 = scmp.eq.s32.totalorder %s11, 0
    %p85 = por %p83, %p84
    %p86 = scmp.ne.s32.totalorder %s78, %s80
    %p87 = scmp.eq.s32.totalorder %s16, 1
    %p88 = por %p86, %p87
    %p89 = scmp.ne.s32.totalorder %s80, %s81
    %p90 = scmp.eq.s32.totalorder %s16, 0
    %p91 = por %p89, %p90
    %p92 = scmp.ne.s32.totalorder %s80, %s81
    %p93 = scmp.eq.s32.totalorder %s17, 1
    %p94 = por %p92, %p93
    %p96 = scmp.ne.s32.totalorder %s81, %s95
    %p97 = scmp.eq.s32.totalorder %s17, 0
    %p98 = por %p96, %p97
    %s100 = sadd.s32 %s99, 1
    %p103 = scmp.eq.s32.totalorder %s11, 1
    %p104 = scmp.ne.s32.totalorder %s99, %s101
    %p105 = scmp.eq.s32.totalorder %s11, 0
    %p106 = por %p104, %p105
    %p107 = scmp.ne.s32.totalorder %s99, %s101
    %p108 = scmp.eq.s32.totalorder %s16, 1
    %p109 = por %p107, %p108
    %p110 = scmp.ne.s32.totalorder %s101, %s102
    %p111 = scmp.eq.s32.totalorder %s16, 0
    %p112 = por %p110, %p111
    %p113 = scmp.ne.s32.totalorder %s101, %s102
    %p114 = scmp.eq.s32.totalorder %s17, 1
    %p115 = por %p113, %p114
    %p117 = scmp.ne.s32.totalorder %s102, %s116
    %p118 = scmp.eq.s32.totalorder %s17, 0
    %p119 = por %p117, %p118
    %s121 = sadd.s32 %s120, 1
    %p124 = scmp.eq.s32.totalorder %s11, 1
    %p125 = scmp.ne.s32.totalorder %s120, %s122
    %p126 = scmp.eq.s32.totalorder %s11, 0
    %p127 = por %p125, %p126
    %p128 = scmp.ne.s32.totalorder %s120, %s122
    %p129 = scmp.eq.s32.totalorder %s16, 1
    %p130 = por %p128, %p129
    %p131 = scmp.ne.s32.totalorder %s122, %s123
    %p132 = scmp.eq.s32.totalorder %s16, 0
    %p133 = por %p131, %p132
    %p134 = scmp.ne.s32.totalorder %s122, %s123
    %p135 = scmp.eq.s32.totalorder %s17, 1
    %p136 = por %p134, %p135
    %p138 = scmp.ne.s32.totalorder %s123, %s137
    %p139 = scmp.eq.s32.totalorder %s17, 0
    %p140 = por %p138, %p139
    %s141 = ssub.s32 %s19, %s26
    %p142 = scmp.eq.s32.totalorder %s141, 0
    %s144 = sadd.s32 %s143, 1
    %s145 = scalar_select %p142, %s143, %s144
    %p148 = pneg %p142
    %p149 = scmp.eq.s32.totalorder %s11, 1
    %p150 = por %p148, %p149
    %p151 = scmp.ne.s32.totalorder %s143, %s146
    %p152 = scmp.eq.s32.totalorder %s11, 0
    %p153 = por %p151, %p152
    %p154 = scmp.ne.s32.totalorder %s143, %s146
    %p155 = scmp.eq.s32.totalorder %s16, 1
    %p156 = por %p154, %p155
    %p157 = scmp.ne.s32.totalorder %s146, %s147
    %p158 = scmp.eq.s32.totalorder %s16, 0
    %p159 = por %p157, %p158
    %p160 = scmp.ne.s32.totalorder %s146, %s147
    %p161 = scmp.eq.s32.totalorder %s17, 1
    %p162 = por %p160, %p161
    %p164 = scmp.ne.s32.totalorder %s147, %s163
    %p165 = scmp.eq.s32.totalorder %s17, 0
    %p166 = por %p164, %p165
    %p167 = scmp.le.s32.totalorder 1, %s11
    %p168 = scmp.lt.s32.totalorder %s11, 3
    %p169 = pnand %p167, %p168
    %p170 = pneg %p169
    // Predicated region
    $region9: #{generator_forward.8} parent=5 // pred_check
      _
    $region10: #{generator_forward.8} parent=5 // pred_check_branch
      %172 = sbr.rel (%p169) target = $region12
    $region11: #{generator_forward.8} parent=5 // pred_region
      %s173 = ssub.s32 %s11, 1
      // Predicated region
      $region13: #{generator_forward.8} parent=11 // pred_check
        %p174 = pneg %p49
      $region14: #{generator_forward.8} parent=11 // pred_check_branch
        %176 = sbr.rel (%p174) target = $region16
      $region15: #{generator_forward.8} parent=11 // pred_region
        %p177 = scmp.lt.s32.totalorder %s21, 0
        %s178 = scalar_select %p177, %s21, 0
        %s179 = smul.addr %s178, 4
        %s180 = scalar_lea.vmem %s0, %s179
      $region16: #{generator_forward.8} parent=11 // pred_fallthru
        _
      // Predicated region
      $region17: #{generator_forward.8} parent=11 // pred_check
        %p181 = pneg %p70
      $region18: #{generator_forward.8} parent=11 // pred_check_branch
        %183 = sbr.rel (%p181) target = $region20
      $region19: #{generator_forward.8} parent=11 // pred_region
        _
      $region20: #{generator_forward.8} parent=11 // pred_fallthru
        _
      // Predicated region
      $region21: #{generator_forward.8} parent=11 // pred_check
        %p184 = pneg %p91
      $region22: #{generator_forward.8} parent=11 // pred_check_branch
        %186 = sbr.rel (%p184) target = $region24
      $region23: #{generator_forward.8} parent=11 // pred_region
        _
      $region24: #{generator_forward.8} parent=11 // pred_fallthru
        _
      // Predicated region
      $region25: #{generator_forward.8} parent=11 // pred_check
        %p187 = pneg %p112
      $region26: #{generator_forward.8} parent=11 // pred_check_branch
        %189 = sbr.rel (%p187) target = $region28
      $region27: #{generator_forward.8} parent=11 // pred_region
        _
      $region28: #{generator_forward.8} parent=11 // pred_fallthru
        _
      // Predicated region
      $region29: #{generator_forward.8} parent=11 // pred_check
        %p190 = pneg %p133
      $region30: #{generator_forward.8} parent=11 // pred_check_branch
        %192 = sbr.rel (%p190) target = $region32
      $region31: #{generator_forward.8} parent=11 // pred_region
        _
      $region32: #{generator_forward.8} parent=11 // pred_fallthru
        _
    $region12: #{generator_forward.8} parent=5 // pred_fallthru
      _
    %p193 = scmp.lt.s32.totalorder %s11, 2
    // Predicated region
    $region33: #{generator_forward.8} parent=5 // pred_check
      %p194 = pneg %p193
    $region34: #{generator_forward.8} parent=5 // pred_check_branch
      %196 = sbr.rel (%p194) target = $region36
    $region35: #{generator_forward.8} parent=5 // pred_region
      _
    $region36: #{generator_forward.8} parent=5 // pred_fallthru
      _
    %p197 = scmp.le.s32.totalorder 1, %s11
    %p198 = scmp.lt.s32.totalorder %s11, 3
    %p199 = pnand %p197, %p198
    %p200 = pneg %p199
    // Predicated region
    $region37: #{generator_forward.8} parent=5 // pred_check
      _
    $region38: #{generator_forward.8} parent=5 // pred_check_branch
      %202 = sbr.rel (%p199) target = $region40
    $region39: #{generator_forward.8} parent=5 // pred_region
      %s203 = ssub.s32 %s11, 1
      %p204 = scmp.lt.s32.totalorder %s21, 0
      %s205 = scalar_select %p204, %s21, 0
      %s206 = smul.addr %s205, 4
      %s207 = scalar_lea.vmem %s0, %s206
      %p208 = pneg %p49
      %p209 = pneg %p46
      %p210 = pneg %p70
      %p211 = pneg %p67
      %p212 = pneg %p91
      %p213 = pneg %p88
      %p214 = pneg %p112
      %p215 = pneg %p109
      %p216 = pneg %p133
      %p217 = pneg %p130
      %p218 = pneg %p159
      %p219 = pneg %p156
      %p220 = scmp.lt.s32.totalorder %s21, 0
      %s221 = scalar_select %p220, %s21, 0
      %s222 = smul.addr %s221, 4
      %s223 = scalar_lea.vmem %s5, %s222
      %p224 = scmp.lt.s32.totalorder %s21, 0
      %s225 = scalar_select %p224, %s21, 0
      %s226 = smul.addr %s225, 4
      %s227 = scalar_lea.vmem %s0, %s226
      %p228 = scmp.lt.s32.totalorder %s21, 0
      %s229 = scalar_select %p228, %s21, 0
      %s230 = smul.addr %s229, 4
      %s231 = scalar_lea.vmem %s5, %s230
      %v233 = vld [vmem:[%s1] sm:$0xff]
      %v234 = vld [vmem:[%s1 + $0x8] sm:$0xff]
      %v235 = vld [vmem:[%s1 + $0x10] sm:$0xff]
      %v236 = vld [vmem:[%s1 + $0x18] sm:$0xff]
      %v237 = vld [vmem:[%s227] sm:$0xf]
      %v238 = vld [vmem:[%s227 + $0x4] sm:$0xf]
      %v239 = vld [vmem:[%s227 + $0x8] sm:$0xf]
      %v240 = vld [vmem:[%s227 + $0xc] sm:$0xf]
      %v241 = vld [vmem:[%s227 + $0x10] sm:$0xf]
      %v242 = vld [vmem:[%s227 + $0x14] sm:$0xf]
      %v243 = vld [vmem:[%s227 + $0x18] sm:$0xf]
      %v244 = vld [vmem:[%s227 + $0x1c] sm:$0xf]
      %v245 = vld [vmem:[%s227 + $0x20] sm:$0xf]
      %v246 = vld [vmem:[%s227 + $0x24] sm:$0xf]
      %v247 = vld [vmem:[%s227 + $0x28] sm:$0xf]
      %v248 = vld [vmem:[%s227 + $0x2c] sm:$0xf]
      %v249 = vld [vmem:[%s227 + $0x30] sm:$0xf]
      %v250 = vld [vmem:[%s227 + $0x34] sm:$0xf]
      %v251 = vld [vmem:[%s227 + $0x38] sm:$0xf]
      %v252 = vld [vmem:[%s227 + $0x3c] sm:$0xf]
      %v253 = vld [vmem:[%s227 + $0x40] sm:$0xf]
      %v254 = vld [vmem:[%s227 + $0x44] sm:$0xf]
      %v255 = vld [vmem:[%s2] sm:$0xff]
      %v256 = vld [vmem:[%s2 + $0x8] sm:$0xff]
      %v257 = vld [vmem:[%s2 + $0x10] sm:$0xff]
      %v258 = vld [vmem:[%s2 + $0x18] sm:$0xff]
      %260 = vset.pattern.permute.xlu0 0
      %261 = vperm.xlu0 %260, %v255
      %v262 = vpop.permute.xlu0 %261
      %265 = vset.pattern.permute.xlu0 0
      %266 = vperm.xlu0 %265, %v256
      %v267 = vpop.permute.xlu0 %266
      %270 = vset.pattern.permute.xlu0 0
      %271 = vperm.xlu0 %270, %v257
      %v272 = vpop.permute.xlu0 %271
      %275 = vset.pattern.permute.xlu0 0
      %276 = vperm.xlu0 %275, %v258
      %v277 = vpop.permute.xlu0 %276
      %v283 = vunpack.c.l.b16 %v233
      %v284 = vunpack.c.h.b16 %v233
      %v285 = vunpack.c.l.b16 %v234
      %v286 = vunpack.c.h.b16 %v234
      %v287 = vunpack.c.l.b16 %v235
      %v288 = vunpack.c.h.b16 %v235
      %v289 = vunpack.c.l.b16 %v236
      %v290 = vunpack.c.h.b16 %v236
      %v291 = vpack.c.b16 %v285, %v283
      %v292 = vpack.c.b16 %v286, %v284
      %v293 = vpack.c.b16 %v289, %v287
      %v294 = vpack.c.b16 %v290, %v288
      %v315 = vunpack.c.l.b16 %v237
      %v316 = vunpack.c.l.b16 %v238
      %v317 = vunpack.c.l.b16 %v239
      %v318 = vunpack.c.l.b16 %v240
      %v319 = vunpack.c.l.b16 %v241
      %v320 = vunpack.c.l.b16 %v242
      %v321 = vunpack.c.l.b16 %v243
      %v322 = vunpack.c.l.b16 %v244
      %v323 = vunpack.c.l.b16 %v245
      %v324 = vunpack.c.l.b16 %v246
      %v325 = vunpack.c.l.b16 %v247
      %v326 = vunpack.c.l.b16 %v248
      %v327 = vunpack.c.l.b16 %v249
      %v328 = vunpack.c.l.b16 %v250
      %v329 = vunpack.c.l.b16 %v251
      %v330 = vunpack.c.l.b16 %v252
      %v331 = vunpack.c.l.b16 %v253
      %v332 = vunpack.c.l.b16 %v254
      %v333 = vpack.c.b16 %v316, %v315
      %v334 = vpack.c.b16 %v318, %v317
      %v335 = vpack.c.b16 %v320, %v319
      %v336 = vpack.c.b16 %v322, %v321
      %v337 = vpack.c.b16 %v324, %v323
      %v338 = vpack.c.b16 %v326, %v325
      %v339 = vpack.c.b16 %v328, %v327
      %v340 = vpack.c.b16 %v330, %v329
      %v341 = vpack.c.b16 %v332, %v331
      %vm351 = vcmask 130048
      %v353 = vsel %vm351, %v292, 0
      %v356 = vsel %vm351, %v294, 0
      %358 = vmatprep.subr.bf16.mxu0 0
      %359 = vmatpush1.bf16.msra.mxu0 %v333
      %360 = vmatprep.subr.bf16.mxu0 0
      %361 = vmatpush1.bf16.msra.mxu0 %v334
      %362 = vmatprep.subr.bf16.mxu0 0
      %363 = vmatpush1.bf16.msra.mxu0 %v335
      %364 = vmatprep.subr.bf16.mxu0 0
      %365 = vmatpush1.bf16.msra.mxu0 %v336
      %366 = vmatprep.subr.bf16.mxu0 0
      %367 = vmatpush1.bf16.msra.mxu0 %v337
      %368 = vmatprep.subr.bf16.mxu0 0
      %369 = vmatpush1.bf16.msra.mxu0 %v338
      %370 = vmatprep.subr.bf16.mxu0 0
      %371 = vmatpush1.bf16.msra.mxu0 %v339
      %372 = vmatprep.subr.bf16.mxu0 0
      %373 = vmatpush1.bf16.msra.mxu0 %v340
      %374 = vmatprep.subr.bf16.mxu0 0
      %375 = vmatpush1.bf16.msra.mxu0 %v341
      %376 = vmatprep.subr.bf16.mxu0 0
      %377 = vmatpush1.bf16.msra.mxu0 0
      %378 = vmatprep.subr.bf16.mxu0 0
      %379 = vmatpush1.bf16.msra.mxu0 0
      %380 = vmatprep.subr.bf16.mxu0 0
      %381 = vmatpush1.bf16.msra.mxu0 0
      %382 = vmatprep.subr.bf16.mxu0 0
      %383 = vmatpush1.bf16.msra.mxu0 0
      %384 = vmatprep.subr.bf16.mxu0 0
      %385 = vmatpush1.bf16.msra.mxu0 0
      %386 = vmatprep.subr.bf16.mxu0 0
      %387 = vmatpush1.bf16.msra.mxu0 0
      %388 = vmatprep.subr.bf16.mxu0 0
      %389 = vmatpush1.bf16.msra.mxu0 0
      %390 = vmatprep.mubr.bf16.mxu0 %v353
      %391 = vmatmul.mubr.bf16.gmra.mrb[0].mxu0 %v291
      %v392 = vpop.f32.mrb[0].mxu0
      %v393 = vadd.f32 %v262, %v392
      %v394 = vpop.f32.mrb[0].mxu0
      %v395 = vpop.f32.mrb[0].mxu0
      %v396 = vadd.f32 %v267, %v395
      %v397 = vpop.f32.mrb[0].mxu0
      %398 = vmatprep.mubr.bf16.mxu0 %v356
      %399 = vmatmul.mubr.bf16.gmra.mrb[0].mxu0 %v293
      %v400 = vpop.f32.mrb[0].mxu0
      %v401 = vadd.f32 %v272, %v400
      %v402 = vpop.f32.mrb[0].mxu0
      %v403 = vpop.f32.mrb[0].mxu0
      %v404 = vadd.f32 %v277, %v403
      %v405 = vpop.f32.mrb[0].mxu0
      %406 = vdwg.mxu0
      %p407 = scmp.eq.s32.totalorder %s20, 0
      // Predicated region
      $region41: #{generator_forward.8} parent=39 // pred_check
        %p408 = pneg %p407
      $region42: #{generator_forward.8} parent=39 // pred_check_branch
        %410 = sbr.rel (%p408) target = $region44
      $region43: #{generator_forward.8} parent=39 // pred_region
        %p411 = scmp.eq.s32.totalorder %s21, 0
        // Predicated region
        $region45: #{generator_forward.8} parent=43 // pred_check
          %p412 = pneg %p411
        $region46: #{generator_forward.8} parent=43 // pred_check_branch
          %414 = sbr.rel (%p412) target = $region48
        $region47: #{generator_forward.8} parent=43 // pred_region
          %vm415 = vcmask 7168
          %416 = vst.msk [vmem:[#allocation2] sm:$0xff] %vm415, 0.0
          %417 = vst.msk [vmem:[#allocation3] sm:$0xff] %vm415, 0.0
        $region48: #{generator_forward.8} parent=43 // pred_fallthru
          _
        %418 = vadd.xlane.f32.xlu0 %v393
        %v419 = vpop.xlane.xlu0 %418
        %420 = vadd.xlane.f32.xlu0 %v396
        %v421 = vpop.xlane.xlu0 %420
        %422 = vadd.xlane.f32.xlu0 %v401
        %v423 = vpop.xlane.xlu0 %422
        %424 = vadd.xlane.f32.xlu0 %v404
        %v425 = vpop.xlane.xlu0 %424
        %v426 = vmul.f32 %v393, %v393
        %v427 = vmul.f32 %v396, %v396
        %v428 = vmul.f32 %v401, %v401
        %v429 = vmul.f32 %v404, %v404
        %430 = vadd.xlane.f32.xlu0 %v426
        %v431 = vpop.xlane.xlu0 %430
        %432 = vadd.xlane.f32.xlu0 %v427
        %v433 = vpop.xlane.xlu0 %432
        %434 = vadd.xlane.f32.xlu0 %v428
        %v435 = vpop.xlane.xlu0 %434
        %436 = vadd.xlane.f32.xlu0 %v429
        %v437 = vpop.xlane.xlu0 %436
        %v438 = vld [vmem:[#allocation2] sm:$0xff]
        %v439 = vadd.f32 %v419, %v421
        %v440 = vadd.f32 %v439, %v423
        %v441 = vadd.f32 %v440, %v425
        %v442 = vadd.f32 %v438, %v441
        %vm443 = vcmask 7168
        %444 = vst.msk [vmem:[#allocation2] sm:$0xff] %vm443, %v442
        %v445 = vld [vmem:[#allocation3] sm:$0xff]
        %v446 = vadd.f32 %v431, %v433
        %v447 = vadd.f32 %v446, %v435
        %v448 = vadd.f32 %v447, %v437
        %v449 = vadd.f32 %v445, %v448
        %450 = vst.msk [vmem:[#allocation3] sm:$0xff] %vm443, %v449
        // Predicated region
        $region49: #{generator_forward.8} parent=43 // pred_check
          %p451 = pneg %p411
        $region50: #{generator_forward.8} parent=43 // pred_check_branch
          %453 = sbr.rel (%p451) target = $region52
        $region51: #{generator_forward.8} parent=43 // pred_region
          %v454 = vld [vmem:[#allocation2] sm:$0xff]
          %v455 = vmul.f32 %v454, 0.001953125
          %v456 = vld [vmem:[#allocation3] sm:$0xff]
          %v457 = vmul.f32 %v456, 0.001953125
          %v458 = vmul.f32 %v455, %v455
          %v459 = vsub.f32 %v457, %v458
          %v460 = vmax.f32 %v459, 0.0
          %v461 = vadd.f32 %v460, 1e-05
          %v462 = vrsqrt.pop %v461
          %v463 = vld [vmem:[%s3] sm:$0xff]
          %v464 = vmul.f32 %v462, %v463
          %v465 = vld [vmem:[%s4] sm:$0xff]
          %v466 = vmul.f32 %v455, %v464
          %v467 = vsub.f32 %v465, %v466
          %468 = vst.msk [vmem:[#allocation4] sm:$0xff] %vm443, %v464
          %469 = vst.msk [vmem:[#allocation4 + $0x8] sm:$0xff] %vm443, %v464
          %470 = vst.msk [vmem:[#allocation4 + $0x10] sm:$0xff] %vm443, %v464
          %471 = vst.msk [vmem:[#allocation4 + $0x18] sm:$0xff] %vm443, %v464
          %472 = vst.msk [vmem:[#allocation5] sm:$0xff] %vm443, %v467
          %473 = vst.msk [vmem:[#allocation5 + $0x8] sm:$0xff] %vm443, %v467
          %474 = vst.msk [vmem:[#allocation5 + $0x10] sm:$0xff] %vm443, %v467
          %475 = vst.msk [vmem:[#allocation5 + $0x18] sm:$0xff] %vm443, %v467
        $region52: #{generator_forward.8} parent=43 // pred_fallthru
          _
      $region44: #{generator_forward.8} parent=39 // pred_fallthru
        _
      %p476 = scmp.eq.s32.totalorder %s20, 1
      // Predicated region
      $region53: #{generator_forward.8} parent=39 // pred_check
        %p477 = pneg %p476
      $region54: #{generator_forward.8} parent=39 // pred_check_branch
        %479 = sbr.rel (%p477) target = $region56
      $region55: #{generator_forward.8} parent=39 // pred_region
        %v480 = vld [vmem:[#allocation4] sm:$0xff]
        %v481 = vld [vmem:[#allocation4 + $0x8] sm:$0xff]
        %v482 = vld [vmem:[#allocation4 + $0x10] sm:$0xff]
        %v483 = vld [vmem:[#allocation4 + $0x18] sm:$0xff]
        %485 = vset.pattern.permute.xlu0 0
        %486 = vperm.xlu0 %485, %v480
        %v487 = vpop.permute.xlu0 %486
        %490 = vset.pattern.permute.xlu0 0
        %491 = vperm.xlu0 %490, %v481
        %v492 = vpop.permute.xlu0 %491
        %495 = vset.pattern.permute.xlu0 0
        %496 = vperm.xlu0 %495, %v482
        %v497 = vpop.permute.xlu0 %496
        %500 = vset.pattern.permute.xlu0 0
        %501 = vperm.xlu0 %500, %v483
        %v502 = vpop.permute.xlu0 %501
        %v504 = vmul.f32 %v393, %v487
        %v505 = vmul.f32 %v396, %v492
        %v506 = vmul.f32 %v401, %v497
        %v507 = vmul.f32 %v404, %v502
        %v508 = vld [vmem:[#allocation5] sm:$0xff]
        %v509 = vld [vmem:[#allocation5 + $0x8] sm:$0xff]
        %v510 = vld [vmem:[#allocation5 + $0x10] sm:$0xff]
        %v511 = vld [vmem:[#allocation5 + $0x18] sm:$0xff]
        %513 = vset.pattern.permute.xlu0 0
        %514 = vperm.xlu0 %513, %v508
        %v515 = vpop.permute.xlu0 %514
        %518 = vset.pattern.permute.xlu0 0
        %519 = vperm.xlu0 %518, %v509
        %v520 = vpop.permute.xlu0 %519
        %523 = vset.pattern.permute.xlu0 0
        %524 = vperm.xlu0 %523, %v510
        %v525 = vpop.permute.xlu0 %524
        %528 = vset.pattern.permute.xlu0 0
        %529 = vperm.xlu0 %528, %v511
        %v530 = vpop.permute.xlu0 %529
        %v532 = vadd.f32 %v504, %v515
        %v533 = vadd.f32 %v505, %v520
        %v534 = vadd.f32 %v506, %v525
        %v535 = vadd.f32 %v507, %v530
        %vm536 = vcmp.gt.f32.partialorder %v532, 0.0
        %vm537 = vcmp.gt.f32.partialorder %v533, 0.0
        %vm538 = vcmp.gt.f32.partialorder %v534, 0.0
        %vm539 = vcmp.gt.f32.partialorder %v535, 0.0
        %v540 = vmul.f32 %v532, 0.2
        %v541 = vmul.f32 %v533, 0.2
        %v542 = vmul.f32 %v534, 0.2
        %v543 = vmul.f32 %v535, 0.2
        %v544 = vsel %vm536, %v532, %v540
        %v545 = vsel %vm537, %v533, %v541
        %v546 = vsel %vm538, %v534, %v542
        %v547 = vsel %vm539, %v535, %v543
        %v548 = vpack.c.bf16 %v545, %v544
        %v549 = vpack.c.bf16 %v547, %v546
        %v552 = vunpack.c.l.b16 %v548
        %v553 = vunpack.c.h.b16 %v548
        %v554 = vunpack.c.l.b16 %v549
        %v555 = vunpack.c.h.b16 %v549
        %v556 = vpack.c.b16 %v552, %v552
        %v557 = vpack.c.b16 %v553, %v553
        %v558 = vpack.c.b16 %v554, %v554
        %v559 = vpack.c.b16 %v555, %v555
        %564 = vst [vmem:[%s231] sm:$0xf] %v556
        %565 = vst [vmem:[%s231 + $0x4] sm:$0xf] %v557
        %566 = vst [vmem:[%s231 + $0x8] sm:$0xf] %v558
        %567 = vst [vmem:[%s231 + $0xc] sm:$0xf] %v559
      $region56: #{generator_forward.8} parent=39 // pred_fallthru
        _
      %p568 = scmp.lt.s32.totalorder %s21, 0
      %s569 = scalar_select %p568, %s21, 0
      %s570 = smul.addr %s569, 4
      %s571 = scalar_lea.vmem %s5, %s570
      // Predicated region
      $region57: #{generator_forward.8} parent=39 // pred_check
        %p572 = pneg %p156
      $region58: #{generator_forward.8} parent=39 // pred_check_branch
        %574 = sbr.rel (%p572) target = $region60
      $region59: #{generator_forward.8} parent=39 // pred_region
        _
      $region60: #{generator_forward.8} parent=39 // pred_fallthru
        _
      // Predicated region
      $region61: #{generator_forward.8} parent=39 // pred_check
        %p575 = pneg %p156
      $region62: #{generator_forward.8} parent=39 // pred_check_branch
        %577 = sbr.rel (%p575) target = $region64
      $region63: #{generator_forward.8} parent=39 // pred_region
        %p578 = scmp.lt.s32.totalorder %s21, 0
        %s579 = scalar_select %p578, %s21, 0
        %s580 = smul.addr %s579, 4
        %s581 = scalar_lea.vmem %s5, %s580
      $region64: #{generator_forward.8} parent=39 // pred_fallthru
        _
    $region40: #{generator_forward.8} parent=5 // pred_fallthru
      _
    %p582 = scmp.le.s32.totalorder 2, %s11
    // Predicated region
    $region65: #{generator_forward.8} parent=5 // pred_check
      %p583 = pneg %p582
    $region66: #{generator_forward.8} parent=5 // pred_check_branch
      %585 = sbr.rel (%p583) target = $region68
    $region67: #{generator_forward.8} parent=5 // pred_region
      %s586 = ssub.s32 %s11, 2
    $region68: #{generator_forward.8} parent=5 // pred_fallthru
      _
  $region6: #{generator_forward.8} parent=0 // loop_footer
    %s15 = sadd.s32 1, %s11
  $region7: #{generator_forward.8} parent=0 // loop_footer_branch
    %10 = sbr.rel target = $region3
  $region8: #{generator_forward.8} parent=0 // loop_exit
    _

// kernel: generator_forward.9
$region0: #{generator_forward.9}
  #allocation0 [shape = 'u32[]', space=smem, size = 0x4, offset = 0x4, fixed_abs, tag = 'smem constant byte address 0x4 - core index']
  #allocation1 [shape = 'u32[144,128]{1,0:T(1,128)}', space=vmem, size = 0x12000, scoped, tag = 'internal scratch']
  %s0 = inlined_call_operand.vmem [shape: bf16[72,512], index: 0, kind: input, shape index: {}]
  %s1 = inlined_call_operand.vmem [shape: bf16[12,72], index: 1, kind: input, shape index: {}]
  %s2 = inlined_call_operand.vmem [shape: f32[12,1], index: 2, kind: input, shape index: {}]
  %s3 = inlined_call_operand.vmem [shape: f32[12,512], index: 3, kind: output, shape index: {}]
  %s4 = sld [smem:[#allocation0]]
  $region22: #{generator_forward.9} parent=0
    _
  %s6 = ssub.s32 1, %s4
  %s7 = scalar_select 0, %s6, %s4
  // Predicated region
  $region2: #{generator_forward.9} parent=0 // pred_check
    _
  $region3: #{generator_forward.9} parent=0 // pred_check_branch
    %9 = sbr.rel (0) target = $region5
  $region4: #{generator_forward.9} parent=0 // pred_region
    _
  $region5: #{generator_forward.9} parent=0 // pred_fallthru
    _
  // Predicated region
  $region6: #{generator_forward.9} parent=0 // pred_check
    _
  $region7: #{generator_forward.9} parent=0 // pred_check_branch
    %11 = sbr.rel (0) target = $region9
  $region8: #{generator_forward.9} parent=0 // pred_region
    _
  $region9: #{generator_forward.9} parent=0 // pred_fallthru
    _
  // Predicated region
  $region10: #{generator_forward.9} parent=0 // pred_check
    _
  $region11: #{generator_forward.9} parent=0 // pred_check_branch
    %13 = sbr.rel (0) target = $region13
  $region12: #{generator_forward.9} parent=0 // pred_region
    _
  $region13: #{generator_forward.9} parent=0 // pred_fallthru
    _
  %v15 = vld [vmem:[%s1] sm:$0xf]
  %v16 = vld [vmem:[%s1 + $0x4] sm:$0x3]
  %v17 = vld [vmem:[%s0] sm:$0xff]
  %v18 = vld [vmem:[%s0 + $0x8] sm:$0xff]
  %v19 = vld [vmem:[%s0 + $0x10] sm:$0xff]
  %v20 = vld [vmem:[%s0 + $0x18] sm:$0xff]
  %v21 = vld [vmem:[%s0 + $0x20] sm:$0xff]
  %v22 = vld [vmem:[%s0 + $0x28] sm:$0xff]
  %v23 = vld [vmem:[%s0 + $0x30] sm:$0xff]
  %v24 = vld [vmem:[%s0 + $0x38] sm:$0xff]
  %v25 = vld [vmem:[%s0 + $0x40] sm:$0xff]
  %v26 = vld [vmem:[%s0 + $0x48] sm:$0xff]
  %v27 = vld [vmem:[%s0 + $0x50] sm:$0xff]
  %v28 = vld [vmem:[%s0 + $0x58] sm:$0xff]
  %v29 = vld [vmem:[%s0 + $0x60] sm:$0xff]
  %v30 = vld [vmem:[%s0 + $0x68] sm:$0xff]
  %v31 = vld [vmem:[%s0 + $0x70] sm:$0xff]
  %v32 = vld [vmem:[%s0 + $0x78] sm:$0xff]
  %v33 = vld [vmem:[%s0 + $0x80] sm:$0xff]
  %v34 = vld [vmem:[%s0 + $0x88] sm:$0xff]
  %v35 = vld [vmem:[%s2] sm:$0xff]
  %v36 = vld [vmem:[%s2 + $0x8] sm:$0xf]
  %38 = vset.pattern.permute.xlu0 0
  %39 = vperm.xlu0 %38, %v35
  %v40 = vpop.permute.xlu0 %39
  %43 = vset.pattern.permute.xlu0 0
  %44 = vperm.xlu0 %43, %v36
  %v45 = vpop.permute.xlu0 %44
  %v49 = vunpack.c.l.b16 %v15
  %v50 = vunpack.c.l.b16 %v16
  %v51 = vpack.c.b16 %v50, %v49
  %v70 = vunpack.c.l.b16 %v17
  %v71 = vunpack.c.h.b16 %v17
  %v72 = vunpack.c.l.b16 %v18
  %v73 = vunpack.c.h.b16 %v18
  %v74 = vunpack.c.l.b16 %v19
  %v75 = vunpack.c.h.b16 %v19
  %v76 = vunpack.c.l.b16 %v20
  %v77 = vunpack.c.h.b16 %v20
  %v78 = vunpack.c.l.b16 %v21
  %v79 = vunpack.c.h.b16 %v21
  %v80 = vunpack.c.l.b16 %v22
  %v81 = vunpack.c.h.b16 %v22
  %v82 = vunpack.c.l.b16 %v23
  %v83 = vunpack.c.h.b16 %v23
  %v84 = vunpack.c.l.b16 %v24
  %v85 = vunpack.c.h.b16 %v24
  %v86 = vunpack.c.l.b16 %v25
  %v87 = vunpack.c.h.b16 %v25
  %v88 = vunpack.c.l.b16 %v26
  %v89 = vunpack.c.h.b16 %v26
  %v90 = vunpack.c.l.b16 %v27
  %v91 = vunpack.c.h.b16 %v27
  %v92 = vunpack.c.l.b16 %v28
  %v93 = vunpack.c.h.b16 %v28
  %v94 = vunpack.c.l.b16 %v29
  %v95 = vunpack.c.h.b16 %v29
  %v96 = vunpack.c.l.b16 %v30
  %v97 = vunpack.c.h.b16 %v30
  %v98 = vunpack.c.l.b16 %v31
  %v99 = vunpack.c.h.b16 %v31
  %v100 = vunpack.c.l.b16 %v32
  %v101 = vunpack.c.h.b16 %v32
  %v102 = vunpack.c.l.b16 %v33
  %v103 = vunpack.c.h.b16 %v33
  %v104 = vunpack.c.l.b16 %v34
  %v105 = vunpack.c.h.b16 %v34
  %v106 = vpack.c.b16 %v74, %v70
  %v107 = vpack.c.b16 %v75, %v71
  %v108 = vpack.c.b16 %v76, %v72
  %v109 = vpack.c.b16 %v77, %v73
  %v110 = vpack.c.b16 %v82, %v78
  %v111 = vpack.c.b16 %v83, %v79
  %v112 = vpack.c.b16 %v84, %v80
  %v113 = vpack.c.b16 %v85, %v81
  %v114 = vpack.c.b16 %v90, %v86
  %v115 = vpack.c.b16 %v91, %v87
  %v116 = vpack.c.b16 %v92, %v88
  %v117 = vpack.c.b16 %v93, %v89
  %v118 = vpack.c.b16 %v98, %v94
  %v119 = vpack.c.b16 %v99, %v95
  %v120 = vpack.c.b16 %v100, %v96
  %v121 = vpack.c.b16 %v101, %v97
  %v122 = vpack.c.b16 %v102, %v102
  %v123 = vpack.c.b16 %v103, %v103
  %v124 = vpack.c.b16 %v104, %v104
  %v125 = vpack.c.b16 %v105, %v105
  %vm142 = vcmask 588800
  %v144 = vsel %vm142, %v51, 0
  %vm146 = vcmask 1043456
  %v148 = vsel %vm146, %v122, 0
  %v151 = vsel %vm146, %v123, 0
  %v154 = vsel %vm146, %v124, 0
  %v157 = vsel %vm146, %v125, 0
  %159 = vmatprep.subr.bf16.mxu0 %v107
  %160 = vmatpush1.bf16.msra.mxu0 %v106
  %161 = vmatprep.subr.bf16.mxu0 %v111
  %162 = vmatpush1.bf16.msra.mxu0 %v110
  %163 = vmatprep.subr.bf16.mxu0 %v115
  %164 = vmatpush1.bf16.msra.mxu0 %v114
  %165 = vmatprep.subr.bf16.mxu0 %v119
  %166 = vmatpush1.bf16.msra.mxu0 %v118
  %167 = vmatprep.subr.bf16.mxu0 %v151
  %168 = vmatpush1.bf16.msra.mxu0 %v148
  %169 = vmatprep.subr.bf16.mxu0 0
  %170 = vmatpush1.bf16.msra.mxu0 0
  %171 = vmatprep.subr.bf16.mxu0 0
  %172 = vmatpush1.bf16.msra.mxu0 0
  %173 = vmatprep.subr.bf16.mxu0 0
  %174 = vmatpush1.bf16.msra.mxu0 0
  %175 = vmatprep.subr.bf16.mxu0 0
  %176 = vmatpush1.bf16.msra.mxu0 0
  %177 = vmatprep.subr.bf16.mxu0 0
  %178 = vmatpush1.bf16.msra.mxu0 0
  %179 = vmatprep.subr.bf16.mxu0 0
  %180 = vmatpush1.bf16.msra.mxu0 0
  %181 = vmatprep.subr.bf16.mxu0 0
  %182 = vmatpush1.bf16.msra.mxu0 0
  %183 = vmatprep.subr.bf16.mxu0 0
  %184 = vmatpush1.bf16.msra.mxu0 0
  %185 = vmatprep.subr.bf16.mxu0 0
  %186 = vmatpush1.bf16.msra.mxu0 0
  %187 = vmatprep.subr.bf16.mxu0 0
  %188 = vmatpush1.bf16.msra.mxu0 0
  %189 = vmatprep.subr.bf16.mxu0 0
  %190 = vmatpush1.bf16.msra.mxu0 0
  %191 = vmatprep.mubr.bf16.mxu0 0
  %192 = vmatmul.mubr.bf16.gmra.mrb[0].mxu0 %v144
  %v193 = vpop.f32.mrb[0].mxu0
  %v194 = vadd.f32 %v40, %v193
  %v195 = vpop.f32.mrb[0].mxu0
  %v196 = vadd.f32 %v40, %v195
  %v197 = vpop.f32.mrb[0].mxu0
  %v198 = vadd.f32 %v45, %v197
  %v199 = vpop.f32.mrb[0].mxu0
  %v200 = vadd.f32 %v45, %v199
  %201 = vdwg.mxu0
  %202 = vmatprep.subr.bf16.mxu0 %v109
  %203 = vmatpush1.bf16.msra.mxu0 %v108
  %204 = vmatprep.subr.bf16.mxu0 %v113
  %205 = vmatpush1.bf16.msra.mxu0 %v112
  %206 = vmatprep.subr.bf16.mxu0 %v117
  %207 = vmatpush1.bf16.msra.mxu0 %v116
  %208 = vmatprep.subr.bf16.mxu0 %v121
  %209 = vmatpush1.bf16.msra.mxu0 %v120
  %210 = vmatprep.subr.bf16.mxu0 %v157
  %211 = vmatpush1.bf16.msra.mxu0 %v154
  %212 = vmatprep.subr.bf16.mxu0 0
  %213 = vmatpush1.bf16.msra.mxu0 0
  %214 = vmatprep.subr.bf16.mxu0 0
  %215 = vmatpush1.bf16.msra.mxu0 0
  %216 = vmatprep.subr.bf16.mxu0 0
  %217 = vmatpush1.bf16.msra.mxu0 0
  %218 = vmatprep.subr.bf16.mxu0 0
  %219 = vmatpush1.bf16.msra.mxu0 0
  %220 = vmatprep.subr.bf16.mxu0 0
  %221 = vmatpush1.bf16.msra.mxu0 0
  %222 = vmatprep.subr.bf16.mxu0 0
  %223 = vmatpush1.bf16.msra.mxu0 0
  %224 = vmatprep.subr.bf16.mxu0 0
  %225 = vmatpush1.bf16.msra.mxu0 0
  %226 = vmatprep.subr.bf16.mxu0 0
  %227 = vmatpush1.bf16.msra.mxu0 0
  %228 = vmatprep.subr.bf16.mxu0 0
  %229 = vmatpush1.bf16.msra.mxu0 0
  %230 = vmatprep.subr.bf16.mxu0 0
  %231 = vmatpush1.bf16.msra.mxu0 0
  %232 = vmatprep.subr.bf16.mxu0 0
  %233 = vmatpush1.bf16.msra.mxu0 0
  %234 = vmatprep.mubr.bf16.mxu0 0
  %235 = vmatmul.mubr.bf16.gmra.mrb[0].mxu0 %v144
  %v236 = vpop.f32.mrb[0].mxu0
  %v237 = vadd.f32 %v40, %v236
  %v238 = vpop.f32.mrb[0].mxu0
  %v239 = vadd.f32 %v40, %v238
  %v240 = vpop.f32.mrb[0].mxu0
  %v241 = vadd.f32 %v45, %v240
  %v242 = vpop.f32.mrb[0].mxu0
  %v243 = vadd.f32 %v45, %v242
  %244 = vdwg.mxu0
  %v245 = vtanh.pop %v194
  %v246 = vtanh.pop %v196
  %v247 = vtanh.pop %v237
  %v248 = vtanh.pop %v239
  %v249 = vtanh.pop %v198
  %v250 = vtanh.pop %v200
  %v251 = vtanh.pop %v241
  %v252 = vtanh.pop %v243
  %253 = vst [vmem:[%s3] sm:$0xff] %v245
  %254 = vst [vmem:[%s3 + $0x8] sm:$0xff] %v246
  %255 = vst [vmem:[%s3 + $0x10] sm:$0xff] %v247
  %256 = vst [vmem:[%s3 + $0x18] sm:$0xff] %v248
  %257 = vst [vmem:[%s3 + $0x20] sm:$0xf] %v249
  %258 = vst [vmem:[%s3 + $0x28] sm:$0xf] %v250
  %259 = vst [vmem:[%s3 + $0x30] sm:$0xf] %v251
  %260 = vst [vmem:[%s3 + $0x38] sm:$0xf] %v252
  // Predicated region
  $region14: #{generator_forward.9} parent=0 // pred_check
    _
  $region15: #{generator_forward.9} parent=0 // pred_check_branch
    %262 = sbr.rel (0) target = $region17
  $region16: #{generator_forward.9} parent=0 // pred_region
    _
  $region17: #{generator_forward.9} parent=0 // pred_fallthru
    _
  // Predicated region
  $region18: #{generator_forward.9} parent=0 // pred_check
    _
  $region19: #{generator_forward.9} parent=0 // pred_check_branch
    %264 = sbr.rel (0) target = $region21
  $region20: #{generator_forward.9} parent=0 // pred_region
    _
  $region21: #{generator_forward.9} parent=0 // pred_fallthru
    _

</llo_original>
